<compile_context>
chip_gen: v7x
topology: tpu7x:2x2x1
jax: 0.10.0
libtpu: 0.0.40
codegen_flags: <defaults>
</compile_context>

<pallas_src>
import functools

import jax
import jax.numpy as jnp
from jax.experimental import pallas as pl
from jax.experimental.pallas import tpu as pltpu

HIDDEN = 768  # fixed by the `seq_length * 768` reshape in the PyTorch module


def _round_up(x, m):
    return ((x + m - 1) // m) * m


def _base_model_kernel(x_ref, w3_ref, b3_ref, convw_ref, convb_ref,
                       w6_ref, b6_ref, out_ref, acc_ref, *, b_actual):
    k = pl.program_id(0)

    # l2: Dropout(0.3) -> identity (eval mode).
    @pl.when(k == 0)
    def _():
        acc_ref[...] = jnp.zeros_like(acc_ref)

    # l3 partial product for this K tile: bf16 operands, f32 accumulation.
    acc_ref[...] += jnp.dot(x_ref[...], w3_ref[...],
                            preferred_element_type=jnp.float32)

    @pl.when(k == pl.num_programs(0) - 1)
    def _():
        h = acc_ref[...] + b3_ref[...]                       # (Bp, Sp) f32
        bp, sp = h.shape
        row = jax.lax.broadcasted_iota(jnp.int32, (bp, sp), 0)
        # Zero the padded batch rows so the conv sees true zero padding
        # (padded x rows would otherwise contribute the l3 bias).
        h = jnp.where(row < b_actual, h, 0.0)

        # conv: Conv1d(seq, seq, k=3, padding='same') applied to h^T, i.e. the
        # kernel slides over the batch axis.  prev[t]=h[t-1], nxt[t]=h[t+1]
        # with explicit zero boundary rows.
        hb = h.astype(jnp.bfloat16)
        zero_row = jnp.zeros((1, sp), jnp.bfloat16)
        prev = jnp.concatenate([zero_row, hb[:-1, :]], axis=0)
        nxt = jnp.concatenate([hb[1:, :], zero_row], axis=0)

        conv = (jnp.dot(prev, convw_ref[0, :, :], preferred_element_type=jnp.float32)
                + jnp.dot(hb, convw_ref[1, :, :], preferred_element_type=jnp.float32)
                + jnp.dot(nxt, convw_ref[2, :, :], preferred_element_type=jnp.float32)
                + convb_ref[...])

        # l4: ReLU ; l5: Dropout(0.3) -> identity (eval mode).
        act = jnp.maximum(conv, 0.0).astype(jnp.bfloat16)

        # l6: Linear(seq -> num_outputs), lane-dense padded output.
        out_ref[...] = (jnp.dot(act, w6_ref[...],
                                preferred_element_type=jnp.float32)
                        + b6_ref[...])


def prepare_params(params, batch_size, seq, num_outputs,
                   *, target_w3_tile_bytes=6 * 1024 * 1024):
    """One-time weight preparation: pad to tile-aligned shapes and cast the
    MXU weights to bf16.  Call once; do NOT redo per forward pass."""
    w3, b3, convw, convb, w6, b6 = params
    K = seq * HIDDEN
    B_pad = _round_up(batch_size, 16)          # bf16 packs 2 rows per sublane
    S_pad = _round_up(seq, 128)                # lane-dense hidden/seq dim
    O_pad = _round_up(num_outputs, 128)        # lane-dense output dim

    # K tile sized so each streamed bf16 w3 block is ~target_w3_tile_bytes:
    # big enough to amortize per-step overhead, small enough that the
    # double-buffered stream stays well inside every generation's VMEM.
    tk = max(128, (target_w3_tile_bytes // (S_pad * 2)) // 128 * 128)
    TK = min(tk, _round_up(K, 128))
    K_pad = _round_up(K, TK)
    nk = K_pad // TK

    w3_p = jnp.pad(w3, ((0, K_pad - K), (0, S_pad - seq))).astype(jnp.bfloat16)
    b3_p = jnp.pad(b3, ((0, 0), (0, S_pad - seq)))
    convw_p = jnp.pad(convw, ((0, 0), (0, S_pad - seq),
                              (0, S_pad - seq))).astype(jnp.bfloat16)
    convb_p = jnp.pad(convb, ((0, 0), (0, S_pad - seq)))
    w6_p = jnp.pad(w6, ((0, S_pad - seq),
                        (0, O_pad - num_outputs))).astype(jnp.bfloat16)
    b6_p = jnp.pad(b6, ((0, 0), (0, O_pad - num_outputs)))

    weights = (w3_p, b3_p, convw_p, convb_p, w6_p, b6_p)
    meta = dict(B=batch_size, B_pad=B_pad, seq=seq, num_outputs=num_outputs,
                K=K, K_pad=K_pad, TK=TK, nk=nk, S_pad=S_pad, O_pad=O_pad)
    return weights, meta


def base_model_forward(last_hidden_state, prepared):
    """last_hidden_state: (B, seq, 768) f32 -> (B, num_outputs) f32."""
    (w3_p, b3_p, convw_p, convb_p, w6_p, b6_p), m = prepared
    B, seq, hid = last_hidden_state.shape
    assert hid == HIDDEN and seq == m["seq"] and B == m["B"]
    B_pad, S_pad, O_pad = m["B_pad"], m["S_pad"], m["O_pad"]
    K, K_pad, TK, nk = m["K"], m["K_pad"], m["TK"], m["nk"]

    # Per-call activation prep only (the .reshape from forward() + pad + cast).
    x = last_hidden_state.reshape(B, K)
    x_p = jnp.pad(x, ((0, B_pad - B), (0, K_pad - K))).astype(jnp.bfloat16)

    kernel = functools.partial(_base_model_kernel, b_actual=B)

    grid_spec = pltpu.PrefetchScalarGridSpec(
        num_scalar_prefetch=0,
        grid=(nk,),
        in_specs=[
            pl.BlockSpec((B_pad, TK), lambda k: (0, k)),           # x K-tile
            pl.BlockSpec((TK, S_pad), lambda k: (k, 0)),           # w3 K-tile (stream)
            pl.BlockSpec((1, S_pad), lambda k: (0, 0)),            # b3 (resident)
            pl.BlockSpec((3, S_pad, S_pad), lambda k: (0, 0, 0)),  # conv weight (k,in,out)
            pl.BlockSpec((1, S_pad), lambda k: (0, 0)),            # conv bias
            pl.BlockSpec((S_pad, O_pad), lambda k: (0, 0)),        # w6
            pl.BlockSpec((1, O_pad), lambda k: (0, 0)),            # b6
        ],
        out_specs=pl.BlockSpec((B_pad, O_pad), lambda k: (0, 0)),
        scratch_shapes=[pltpu.VMEM((B_pad, S_pad), jnp.float32)],
    )

    # Explicit VMEM budget: double-buffered streamed tiles + (conservatively
    # double-buffered) resident operands + accumulator + margin.
    nbytes = lambda a: a.size * a.dtype.itemsize
    x_tile = B_pad * TK * 2
    w3_tile = TK * S_pad * 2
    resident = (nbytes(b3_p) + nbytes(convw_p) + nbytes(convb_p)
                + nbytes(w6_p) + nbytes(b6_p))
    out_bytes = B_pad * O_pad * 4
    acc_bytes = B_pad * S_pad * 4
    vmem_limit = int(2 * (x_tile + w3_tile) + 2 * (resident + out_bytes)
                     + acc_bytes + (4 << 20))
    vmem_limit = int(min(vmem_limit, 64 * 1024 * 1024))   # v7x physical ceiling

    cost = pl.CostEstimate(
        flops=int(2 * B_pad * (K_pad * S_pad + 3 * S_pad * S_pad + S_pad * O_pad)),
        transcendentals=0,
        bytes_accessed=int(nbytes(x_p) + nbytes(w3_p) + resident + out_bytes),
    )

    out = pl.pallas_call(
        kernel,
        out_shape=jax.ShapeDtypeStruct((B_pad, O_pad), jnp.float32),
        grid_spec=grid_spec,
        compiler_params=pltpu.CompilerParams(
            dimension_semantics=("arbitrary",),   # K axis is a reduction
            vmem_limit_bytes=vmem_limit),
        cost_estimate=cost,
    )(x_p, w3_p, b3_p, convw_p, convb_p, w6_p, b6_p)
    return out[:B, :m["num_outputs"]]


def init_params(key, seq, num_outputs):
    """Deterministic synthetic parameters matching the PyTorch shapes/init."""
    k1, k2, k3, k4, k5, k6 = jax.random.split(key, 6)
    in3 = seq * HIDDEN
    lim3 = 1.0 / jnp.sqrt(jnp.float32(in3))
    w3 = jax.random.uniform(k1, (in3, seq), jnp.float32, -lim3, lim3)       # Linear(seq*768, seq)^T
    b3 = jax.random.uniform(k2, (1, seq), jnp.float32, -lim3, lim3)

    limc = 1.0 / jnp.sqrt(jnp.float32(seq * 3))
    convw_torch = jax.random.uniform(k3, (seq, seq, 3), jnp.float32, -limc, limc)  # (out, in, k)
    convw = jnp.transpose(convw_torch, (2, 1, 0))                           # (k, in, out)
    convb = jax.random.uniform(k4, (1, seq), jnp.float32, -limc, limc)

    lim6 = 1.0 / jnp.sqrt(jnp.float32(seq))
    w6 = jax.random.uniform(k5, (seq, num_outputs), jnp.float32, -lim6, lim6)  # Linear(seq, num_outputs)^T
    b6 = jax.random.uniform(k6, (1, num_outputs), jnp.float32, -lim6, lim6)
    return (w3, b3, convw, convb, w6, b6)


def _reference_forward(last_hidden_state, params):
    """Plain-JAX f32 reference of the same math (for a sanity check)."""
    w3, b3, convw, convb, w6, b6 = params
    B, seq, hid = last_hidden_state.shape
    x = last_hidden_state.reshape(B, seq * hid)
    h = x @ w3 + b3                                        # (B, seq)
    hp = jnp.pad(h, ((1, 1), (0, 0)))                      # 'same' pad along batch
    acc = jnp.broadcast_to(convb, (B, seq))
    for k in range(3):
        acc = acc + hp[k:k + B, :] @ convw[k]
    act = jnp.maximum(acc, 0.0)
    return act @ w6 + b6


if __name__ == "__main__":
    B, seq_length, num_outputs = 2, 8, 4
    key = jax.random.PRNGKey(0)
    kx, kp = jax.random.split(key)

    # Synthetic stand-in for the pretrained transformer's last_hidden_state.
    last_hidden_state = jax.random.normal(kx, (B, seq_length, HIDDEN), jnp.float32)
    params = init_params(kp, seq_length, num_outputs)

    # One-time weight preparation (pad + bf16 cast), then the per-call forward.
    prepared = prepare_params(params, B, seq_length, num_outputs)

    out = base_model_forward(last_hidden_state, prepared)
    out = jax.block_until_ready(out)
    assert out.shape == (B, num_outputs)

    ref = _reference_forward(last_hidden_state, params)
    assert jnp.allclose(out, ref, rtol=5e-2, atol=5e-2), "mismatch vs reference"

    print("KERNEL_OK")
</pallas_src>

<mosaic_0001>
module attributes {stable_mosaic.version = 11 : i64} {
  func.func @_base_model_kernel(%arg0: i32, %arg1: memref<16x6144xbf16, #tpu.memory_space<vmem>>, %arg2: memref<6144x128xbf16, #tpu.memory_space<vmem>>, %arg3: memref<1x128xf32, #tpu.memory_space<vmem>>, %arg4: memref<3x128x128xbf16, #tpu.memory_space<vmem>>, %arg5: memref<1x128xf32, #tpu.memory_space<vmem>>, %arg6: memref<128x128xbf16, #tpu.memory_space<vmem>>, %arg7: memref<1x128xf32, #tpu.memory_space<vmem>>, %arg8: memref<16x128xf32, #tpu.memory_space<vmem>>, %arg9: memref<16x128xf32, #tpu.memory_space<vmem>>) attributes {dimension_semantics = [#tpu.dimension_semantics<arbitrary>], iteration_bounds = array<i64: 1>, scalar_prefetch = 0 : i64, scratch_operands = 1 : i64, tpu.core_type = #tpu.core_type<tc>, window_params = [{transform_indices = @transform_0, window_bounds = array<i64: 16, 6144>}, {transform_indices = @transform_1, window_bounds = array<i64: 6144, 128>}, {pipeline_mode = #tpu.pipeline_mode<synchronous>, transform_indices = @transform_2, window_bounds = array<i64: 1, 128>}, {pipeline_mode = #tpu.pipeline_mode<synchronous>, transform_indices = @transform_3, window_bounds = array<i64: 3, 128, 128>}, {pipeline_mode = #tpu.pipeline_mode<synchronous>, transform_indices = @transform_4, window_bounds = array<i64: 1, 128>}, {pipeline_mode = #tpu.pipeline_mode<synchronous>, transform_indices = @transform_5, window_bounds = array<i64: 128, 128>}, {pipeline_mode = #tpu.pipeline_mode<synchronous>, transform_indices = @transform_6, window_bounds = array<i64: 1, 128>}, {pipeline_mode = #tpu.pipeline_mode<synchronous>, transform_indices = @transform_7, window_bounds = array<i64: 16, 128>}]} {
    %c0_i32 = arith.constant 0 : i32
    %0 = arith.cmpi eq, %arg0, %c0_i32 : i32
    %1 = arith.extui %0 : i1 to i32
    %c0_i32_0 = arith.constant 0 : i32
    %2 = arith.cmpi ne, %1, %c0_i32_0 : i32
    scf.if %2 {
      %cst_10 = arith.constant 0.000000e+00 : f32
      %12 = vector.broadcast %cst_10 : f32 to vector<16x128xf32>
      %c0_11 = arith.constant 0 : index
      %c0_12 = arith.constant 0 : index
      %13 = vector.load %arg9[%c0_11, %c0_12] : memref<16x128xf32, #tpu.memory_space<vmem>>, vector<16x128xf32>
      tpu.vector_store %arg9[%c0_11, %c0_12], %12 {strides = array<i32>} : memref<16x128xf32, #tpu.memory_space<vmem>>, vector<16x128xf32>,
    } else {
    }
    %c0 = arith.constant 0 : index
    %c0_1 = arith.constant 0 : index
    %3 = vector.load %arg9[%c0, %c0_1] : memref<16x128xf32, #tpu.memory_space<vmem>>, vector<16x128xf32>
    %c0_2 = arith.constant 0 : index
    %c0_3 = arith.constant 0 : index
    %4 = vector.load %arg1[%c0_2, %c0_3] : memref<16x6144xbf16, #tpu.memory_space<vmem>>, vector<16x6144xbf16>
    %c0_4 = arith.constant 0 : index
    %c0_5 = arith.constant 0 : index
    %5 = vector.load %arg2[%c0_4, %c0_5] : memref<6144x128xbf16, #tpu.memory_space<vmem>>, vector<6144x128xbf16>
    %cst = arith.constant dense<0.000000e+00> : vector<16x128xf32>
    %6 = tpu.matmul %4, %5, %cst {dimension_numbers = #tpu.dot_dimension_numbers<[1], [0], [0], [1], [0, 0, 1, 1], [], []>} : vector<16x6144xbf16>, vector<6144x128xbf16>, vector<16x128xf32> -> vector<16x128xf32>
    %7 = arith.addf %3, %6 : vector<16x128xf32>
    %c0_6 = arith.constant 0 : index
    %c0_7 = arith.constant 0 : index
    %8 = vector.load %arg9[%c0_6, %c0_7] : memref<16x128xf32, #tpu.memory_space<vmem>>, vector<16x128xf32>
    tpu.vector_store %arg9[%c0_6, %c0_7], %7 {strides = array<i32>} : memref<16x128xf32, #tpu.memory_space<vmem>>, vector<16x128xf32>,
    %c0_i32_8 = arith.constant 0 : i32
    %9 = arith.cmpi eq, %arg0, %c0_i32_8 : i32
    %10 = arith.extui %9 : i1 to i32
    %c0_i32_9 = arith.constant 0 : i32
    %11 = arith.cmpi ne, %10, %c0_i32_9 : i32
    scf.if %11 {
      %c0_10 = arith.constant 0 : index
      %c0_11 = arith.constant 0 : index
      %12 = vector.load %arg9[%c0_10, %c0_11] : memref<16x128xf32, #tpu.memory_space<vmem>>, vector<16x128xf32>
      %c0_12 = arith.constant 0 : index
      %c0_13 = arith.constant 0 : index
      %13 = vector.load %arg3[%c0_12, %c0_13] : memref<1x128xf32, #tpu.memory_space<vmem>>, vector<1x128xf32>
      %14 = vector.broadcast %13 : vector<1x128xf32> to vector<16x128xf32>
      %15 = arith.addf %12, %14 : vector<16x128xf32>
      %16 = tpu.iota {dimensions = array<i32: 0>} : vector<16x128xi32>
      %c2_i32 = arith.constant 2 : i32
      %17 = vector.broadcast %c2_i32 : i32 to vector<16x128xi32>
      %18 = arith.cmpi slt, %16, %17 : vector<16x128xi32>
      %cst_14 = arith.constant 0.000000e+00 : f32
      %19 = vector.broadcast %cst_14 : f32 to vector<16x128xf32>
      %20 = arith.select %18, %15, %19 : vector<16x128xi1>, vector<16x128xf32>
      %21 = arith.truncf %20 : vector<16x128xf32> to vector<16x128xbf16>
      %cst_15 = arith.constant 0.000000e+00 : bf16
      %22 = vector.broadcast %cst_15 : bf16 to vector<1x128xbf16>
      %23 = vector.extract_strided_slice %21 {offsets = [0, 0], sizes = [15, 128], strides = [1, 1]} : vector<16x128xbf16> to vector<15x128xbf16>
      %24 = tpu.concatenate %22, %23 in 0 : vector<1x128xbf16>, vector<15x128xbf16> -> vector<16x128xbf16>
      %25 = vector.extract_strided_slice %21 {offsets = [1, 0], sizes = [15, 128], strides = [1, 1]} : vector<16x128xbf16> to vector<15x128xbf16>
      %26 = tpu.concatenate %25, %22 in 0 : vector<15x128xbf16>, vector<1x128xbf16> -> vector<16x128xbf16>
      %c0_16 = arith.constant 0 : index
      %c0_17 = arith.constant 0 : index
      %c0_18 = arith.constant 0 : index
      %27 = vector.load %arg4[%c0_16, %c0_17, %c0_18] : memref<3x128x128xbf16, #tpu.memory_space<vmem>>, vector<1x128x128xbf16>
      %28 = vector.shape_cast %27 : vector<1x128x128xbf16> to vector<128x128xbf16>
      %cst_19 = arith.constant dense<0.000000e+00> : vector<16x128xf32>
      %29 = tpu.matmul %24, %28, %cst_19 {dimension_numbers = #tpu.dot_dimension_numbers<[1], [0], [0], [1], [0, 0, 1, 1], [], []>} : vector<16x128xbf16>, vector<128x128xbf16>, vector<16x128xf32> -> vector<16x128xf32>
      %c1 = arith.constant 1 : index
      %c0_20 = arith.constant 0 : index
      %c0_21 = arith.constant 0 : index
      %30 = vector.load %arg4[%c1, %c0_20, %c0_21] : memref<3x128x128xbf16, #tpu.memory_space<vmem>>, vector<1x128x128xbf16>
      %31 = vector.shape_cast %30 : vector<1x128x128xbf16> to vector<128x128xbf16>
      %cst_22 = arith.constant dense<0.000000e+00> : vector<16x128xf32>
      %32 = tpu.matmul %21, %31, %cst_22 {dimension_numbers = #tpu.dot_dimension_numbers<[1], [0], [0], [1], [0, 0, 1, 1], [], []>} : vector<16x128xbf16>, vector<128x128xbf16>, vector<16x128xf32> -> vector<16x128xf32>
      %33 = arith.addf %29, %32 : vector<16x128xf32>
      %c2 = arith.constant 2 : index
      %c0_23 = arith.constant 0 : index
      %c0_24 = arith.constant 0 : index
      %34 = vector.load %arg4[%c2, %c0_23, %c0_24] : memref<3x128x128xbf16, #tpu.memory_space<vmem>>, vector<1x128x128xbf16>
      %35 = vector.shape_cast %34 : vector<1x128x128xbf16> to vector<128x128xbf16>
      %cst_25 = arith.constant dense<0.000000e+00> : vector<16x128xf32>
      %36 = tpu.matmul %26, %35, %cst_25 {dimension_numbers = #tpu.dot_dimension_numbers<[1], [0], [0], [1], [0, 0, 1, 1], [], []>} : vector<16x128xbf16>, vector<128x128xbf16>, vector<16x128xf32> -> vector<16x128xf32>
      %37 = arith.addf %33, %36 : vector<16x128xf32>
      %c0_26 = arith.constant 0 : index
      %c0_27 = arith.constant 0 : index
      %38 = vector.load %arg5[%c0_26, %c0_27] : memref<1x128xf32, #tpu.memory_space<vmem>>, vector<1x128xf32>
      %39 = vector.broadcast %38 : vector<1x128xf32> to vector<16x128xf32>
      %40 = arith.addf %37, %39 : vector<16x128xf32>
      %cst_28 = arith.constant 0.000000e+00 : f32
      %41 = vector.broadcast %cst_28 : f32 to vector<16x128xf32>
      %42 = arith.maximumf %40, %41 : vector<16x128xf32>
      %43 = arith.truncf %42 : vector<16x128xf32> to vector<16x128xbf16>
      %c0_29 = arith.constant 0 : index
      %c0_30 = arith.constant 0 : index
      %44 = vector.load %arg6[%c0_29, %c0_30] : memref<128x128xbf16, #tpu.memory_space<vmem>>, vector<128x128xbf16>
      %cst_31 = arith.constant dense<0.000000e+00> : vector<16x128xf32>
      %45 = tpu.matmul %43, %44, %cst_31 {dimension_numbers = #tpu.dot_dimension_numbers<[1], [0], [0], [1], [0, 0, 1, 1], [], []>} : vector<16x128xbf16>, vector<128x128xbf16>, vector<16x128xf32> -> vector<16x128xf32>
      %c0_32 = arith.constant 0 : index
      %c0_33 = arith.constant 0 : index
      %46 = vector.load %arg7[%c0_32, %c0_33] : memref<1x128xf32, #tpu.memory_space<vmem>>, vector<1x128xf32>
      %47 = vector.broadcast %46 : vector<1x128xf32> to vector<16x128xf32>
      %48 = arith.addf %45, %47 : vector<16x128xf32>
      %c0_34 = arith.constant 0 : index
      %c0_35 = arith.constant 0 : index
      %49 = vector.load %arg8[%c0_34, %c0_35] : memref<16x128xf32, #tpu.memory_space<vmem>>, vector<16x128xf32>
      tpu.vector_store %arg8[%c0_34, %c0_35], %48 {strides = array<i32>} : memref<16x128xf32, #tpu.memory_space<vmem>>, vector<16x128xf32>,
    } else {
    }
    return
  }
  func.func @transform_0(%arg0: i32) -> (i32, i32) {
    %c0_i32 = arith.constant 0 : i32
    %c0_i32_0 = arith.constant 0 : i32
    return %c0_i32, %arg0 : i32, i32
  }
  func.func @transform_1(%arg0: i32) -> (i32, i32) {
    %c0_i32 = arith.constant 0 : i32
    %c0_i32_0 = arith.constant 0 : i32
    return %arg0, %c0_i32 : i32, i32
  }
  func.func @transform_2(%arg0: i32) -> (i32, i32) {
    %c0_i32 = arith.constant 0 : i32
    %c0_i32_0 = arith.constant 0 : i32
    %c0_i32_1 = arith.constant 0 : i32
    return %c0_i32, %c0_i32_0 : i32, i32
  }
  func.func @transform_3(%arg0: i32) -> (i32, i32, i32) {
    %c0_i32 = arith.constant 0 : i32
    %c0_i32_0 = arith.constant 0 : i32
    %c0_i32_1 = arith.constant 0 : i32
    %c0_i32_2 = arith.constant 0 : i32
    return %c0_i32, %c0_i32_0, %c0_i32_1 : i32, i32, i32
  }
  func.func @transform_4(%arg0: i32) -> (i32, i32) {
    %c0_i32 = arith.constant 0 : i32
    %c0_i32_0 = arith.constant 0 : i32
    %c0_i32_1 = arith.constant 0 : i32
    return %c0_i32, %c0_i32_0 : i32, i32
  }
  func.func @transform_5(%arg0: i32) -> (i32, i32) {
    %c0_i32 = arith.constant 0 : i32
    %c0_i32_0 = arith.constant 0 : i32
    %c0_i32_1 = arith.constant 0 : i32
    return %c0_i32, %c0_i32_0 : i32, i32
  }
  func.func @transform_6(%arg0: i32) -> (i32, i32) {
    %c0_i32 = arith.constant 0 : i32
    %c0_i32_0 = arith.constant 0 : i32
    %c0_i32_1 = arith.constant 0 : i32
    return %c0_i32, %c0_i32_0 : i32, i32
  }
  func.func @transform_7(%arg0: i32) -> (i32, i32) {
    %c0_i32 = arith.constant 0 : i32
    %c0_i32_0 = arith.constant 0 : i32
    %c0_i32_1 = arith.constant 0 : i32
    return %c0_i32, %c0_i32_0 : i32, i32
  }
}

</mosaic_0001>

<llo_original>
// kernel: tpu_custom_call.1
$region0: #{tpu_custom_call.1}
  #allocation0 [shape = 'u32[]', space=smem, size = 0x4, offset = 0x4, fixed_abs, tag = 'smem constant byte address 0x4 - core index']
  #allocation1 [shape = 'u32[144,128]{1,0:T(1,128)}', space=vmem, size = 0x12000, scoped, tag = 'internal scratch']
  #allocation2 [shape = 'f32[16,128]{1,0:T(8,128)}', space=vmem, size = 0x2000, scoped, tag = 'scratch operand']
  %s0 = inlined_call_operand.hbm [shape: bf16[16,6144], index: 0, kind: input, shape index: {}]
  %s1 = inlined_call_operand.hbm [shape: bf16[6144,128], index: 1, kind: input, shape index: {}]
  %s2 = inlined_call_operand.hbm [shape: f32[1,128], index: 2, kind: input, shape index: {}]
  %s3 = inlined_call_operand.hbm [shape: bf16[3,128,128], index: 3, kind: input, shape index: {}]
  %s4 = inlined_call_operand.hbm [shape: f32[1,128], index: 4, kind: input, shape index: {}]
  %s5 = inlined_call_operand.hbm [shape: bf16[128,128], index: 5, kind: input, shape index: {}]
  %s6 = inlined_call_operand.hbm [shape: f32[1,128], index: 6, kind: input, shape index: {}]
  %s7 = inlined_call_operand.hbm [shape: f32[16,128], index: 7, kind: output, shape index: {}]
  %s8 = sld [smem:[#allocation0]]
  $region74: #{tpu_custom_call.1} parent=0
    _
  %s10 = ssub.s32 1, %s8
  %s11 = scalar_select 0, %s10, %s8
  $region1: #{tpu_custom_call.1} parent=0
    #allocation3 [shape = 'u8[196608]{0}', space=vmem, size = 0x30000, scoped, tag = 'input window, operand 0, single buffered']
    #allocation4 [shape = 's32[1]{0}', space=sflag, size = 0x4, scoped, tag = 'scoped memory for tpu_custom_call.1']
    #allocation5 [shape = 's32[1]{0}', space=sflag, size = 0x4, scoped, tag = 'scoped memory for tpu_custom_call.1']
    #allocation6 [shape = 'u8[1572864]{0}', space=vmem, size = 0x180000, scoped, tag = 'input window, operand 1, single buffered']
    #allocation7 [shape = 's32[1]{0}', space=sflag, size = 0x4, scoped, tag = 'scoped memory for tpu_custom_call.1']
    #allocation8 [shape = 'u8[512]{0}', space=vmem, size = 0x400, scoped, tag = 'input window, operand 2, single buffered']
    #allocation9 [shape = 'u8[98304]{0}', space=vmem, size = 0x18000, scoped, tag = 'input window, operand 3, single buffered']
    #allocation10 [shape = 's32[1]{0}', space=sflag, size = 0x4, scoped, tag = 'scoped memory for tpu_custom_call.1']
    #allocation11 [shape = 'u8[512]{0}', space=vmem, size = 0x400, scoped, tag = 'input window, operand 4, single buffered']
    #allocation12 [shape = 'u8[32768]{0}', space=vmem, size = 0x8000, scoped, tag = 'input window, operand 5, single buffered']
    #allocation13 [shape = 's32[1]{0}', space=sflag, size = 0x4, scoped, tag = 'scoped memory for tpu_custom_call.1']
    #allocation14 [shape = 'u8[512]{0}', space=vmem, size = 0x400, scoped, tag = 'input window, operand 6, single buffered']
    #allocation15 [shape = 'u8[8192]{0}', space=vmem, size = 0x2000, scoped, tag = 'output window, operand 0, single buffered']
    %12 = vsyncpa [#allocation4], 0
    %13 = vsyncpa [#allocation7], 0
    %14 = vsyncpa [#allocation10], 0
    %15 = vsyncpa [#allocation13], 0
    %16 = vsyncpa [#allocation5], 0
    // Predicated region
    $region2: #{tpu_custom_call.1} parent=1 // pred_check
      _
    $region3: #{tpu_custom_call.1} parent=1 // pred_check_branch
      %18 = sbr.rel (0) target = $region5
    $region4: #{tpu_custom_call.1} parent=1 // pred_region
      %s20 = ssub.s32 6144, 6144
      %21 = vsyncadd [#allocation4], %s20
      %s22 = sshll.u32 [#allocation3], 4
      %s23 = int_to_ptr.vmem [resolvable:$true] %s22
      %28 = dma.hbm_to_vmem [thread:$0]  %s0, 6144, %s23, [#allocation4], 3072, 3072, 192
    $region5: #{tpu_custom_call.1} parent=1 // pred_fallthru
      _
    // Predicated region
    $region6: #{tpu_custom_call.1} parent=1 // pred_check
      _
    $region7: #{tpu_custom_call.1} parent=1 // pred_check_branch
      %30 = sbr.rel (0) target = $region9
    $region8: #{tpu_custom_call.1} parent=1 // pred_region
      %s32 = ssub.s32 49152, 49152
      %33 = vsyncadd [#allocation7], %s32
      %s34 = sshll.u32 [#allocation6], 4
      %s35 = int_to_ptr.vmem [resolvable:$true] %s34
      %40 = dma.hbm_to_vmem [thread:$0]  %s1, 49152, %s35, [#allocation7], 64, 64, 4
    $region9: #{tpu_custom_call.1} parent=1 // pred_fallthru
      _
    // Predicated region
    $region10: #{tpu_custom_call.1} parent=1 // pred_check
      _
    $region11: #{tpu_custom_call.1} parent=1 // pred_check_branch
      %42 = sbr.rel (0) target = $region13
    $region12: #{tpu_custom_call.1} parent=1 // pred_region
      %s44 = ssub.s32 16, 16
      %45 = vsyncadd [#allocation7], %s44
      %s47 = sshll.u32 [#allocation8], 4
      %s48 = int_to_ptr.vmem [resolvable:$true] %s47
      %50 = dma.hbm_to_vmem [thread:$0]  %s2, 16, %s48, [#allocation7]
    $region13: #{tpu_custom_call.1} parent=1 // pred_fallthru
      _
    // Predicated region
    $region14: #{tpu_custom_call.1} parent=1 // pred_check
      _
    $region15: #{tpu_custom_call.1} parent=1 // pred_check_branch
      %52 = sbr.rel (0) target = $region17
    $region16: #{tpu_custom_call.1} parent=1 // pred_region
      %s54 = ssub.s32 3072, 3072
      %55 = vsyncadd [#allocation10], %s54
      %s56 = sshll.u32 [#allocation9], 4
      %s57 = int_to_ptr.vmem [resolvable:$true] %s56
      %62 = dma.hbm_to_vmem [thread:$0]  %s3, 3072, %s57, [#allocation10], 64, 64, 4
    $region17: #{tpu_custom_call.1} parent=1 // pred_fallthru
      _
    // Predicated region
    $region18: #{tpu_custom_call.1} parent=1 // pred_check
      _
    $region19: #{tpu_custom_call.1} parent=1 // pred_check_branch
      %64 = sbr.rel (0) target = $region21
    $region20: #{tpu_custom_call.1} parent=1 // pred_region
      %s66 = ssub.s32 16, 16
      %67 = vsyncadd [#allocation10], %s66
      %s69 = sshll.u32 [#allocation11], 4
      %s70 = int_to_ptr.vmem [resolvable:$true] %s69
      %72 = dma.hbm_to_vmem [thread:$0]  %s4, 16, %s70, [#allocation10]
    $region21: #{tpu_custom_call.1} parent=1 // pred_fallthru
      _
    // Predicated region
    $region22: #{tpu_custom_call.1} parent=1 // pred_check
      _
    $region23: #{tpu_custom_call.1} parent=1 // pred_check_branch
      %74 = sbr.rel (0) target = $region25
    $region24: #{tpu_custom_call.1} parent=1 // pred_region
      %s76 = ssub.s32 1024, 1024
      %77 = vsyncadd [#allocation13], %s76
      %s78 = sshll.u32 [#allocation12], 4
      %s79 = int_to_ptr.vmem [resolvable:$true] %s78
      %84 = dma.hbm_to_vmem [thread:$0]  %s5, 1024, %s79, [#allocation13], 64, 64, 4
    $region25: #{tpu_custom_call.1} parent=1 // pred_fallthru
      _
    // Predicated region
    $region26: #{tpu_custom_call.1} parent=1 // pred_check
      _
    $region27: #{tpu_custom_call.1} parent=1 // pred_check_branch
      %86 = sbr.rel (0) target = $region29
    $region28: #{tpu_custom_call.1} parent=1 // pred_region
      %s88 = ssub.s32 16, 16
      %89 = vsyncadd [#allocation13], %s88
      %s91 = sshll.u32 [#allocation14], 4
      %s92 = int_to_ptr.vmem [resolvable:$true] %s91
      %94 = dma.hbm_to_vmem [thread:$0]  %s6, 16, %s92, [#allocation13]
    $region29: #{tpu_custom_call.1} parent=1 // pred_fallthru
      _
    // Predicated region
    $region30: #{tpu_custom_call.1} parent=1 // pred_check
      _
    $region31: #{tpu_custom_call.1} parent=1 // pred_check_branch
      %96 = sbr.rel (0) target = $region33
    $region32: #{tpu_custom_call.1} parent=1 // pred_region
      %97 = dma.done [#allocation4], 6144
    $region33: #{tpu_custom_call.1} parent=1 // pred_fallthru
      _
    // Predicated region
    $region34: #{tpu_custom_call.1} parent=1 // pred_check
      _
    $region35: #{tpu_custom_call.1} parent=1 // pred_check_branch
      %99 = sbr.rel (0) target = $region37
    $region36: #{tpu_custom_call.1} parent=1 // pred_region
      %100 = dma.done [#allocation7], 49152
    $region37: #{tpu_custom_call.1} parent=1 // pred_fallthru
      _
    // Predicated region
    $region38: #{tpu_custom_call.1} parent=1 // pred_check
      _
    $region39: #{tpu_custom_call.1} parent=1 // pred_check_branch
      %102 = sbr.rel (0) target = $region41
    $region40: #{tpu_custom_call.1} parent=1 // pred_region
      %103 = dma.done [#allocation7], 16
    $region41: #{tpu_custom_call.1} parent=1 // pred_fallthru
      _
    // Predicated region
    $region42: #{tpu_custom_call.1} parent=1 // pred_check
      _
    $region43: #{tpu_custom_call.1} parent=1 // pred_check_branch
      %105 = sbr.rel (0) target = $region45
    $region44: #{tpu_custom_call.1} parent=1 // pred_region
      %106 = dma.done [#allocation10], 3072
    $region45: #{tpu_custom_call.1} parent=1 // pred_fallthru
      _
    // Predicated region
    $region46: #{tpu_custom_call.1} parent=1 // pred_check
      _
    $region47: #{tpu_custom_call.1} parent=1 // pred_check_branch
      %108 = sbr.rel (0) target = $region49
    $region48: #{tpu_custom_call.1} parent=1 // pred_region
      %109 = dma.done [#allocation10], 16
    $region49: #{tpu_custom_call.1} parent=1 // pred_fallthru
      _
    // Predicated region
    $region50: #{tpu_custom_call.1} parent=1 // pred_check
      _
    $region51: #{tpu_custom_call.1} parent=1 // pred_check_branch
      %111 = sbr.rel (0) target = $region53
    $region52: #{tpu_custom_call.1} parent=1 // pred_region
      %112 = dma.done [#allocation13], 1024
    $region53: #{tpu_custom_call.1} parent=1 // pred_fallthru
      _
    // Predicated region
    $region54: #{tpu_custom_call.1} parent=1 // pred_check
      _
    $region55: #{tpu_custom_call.1} parent=1 // pred_check_branch
      %114 = sbr.rel (0) target = $region57
    $region56: #{tpu_custom_call.1} parent=1 // pred_region
      %115 = dma.done [#allocation13], 16
    $region57: #{tpu_custom_call.1} parent=1 // pred_fallthru
      _
    %p117 = scmp.eq.s32.totalorder 0, 0
    // Predicated region
    $region58: #{tpu_custom_call.1} parent=1 // pred_check
      %p118 = pneg %p117
    $region59: #{tpu_custom_call.1} parent=1 // pred_check_branch
      %120 = sbr.rel (%p118) target = $region61
    $region60: #{tpu_custom_call.1} parent=1 // pred_region
      %121 = vst [vmem:[#allocation2] sm:$0xff] 0.0
      %122 = vst [vmem:[#allocation2 + $0x8] sm:$0xff] 0.0
    $region61: #{tpu_custom_call.1} parent=1 // pred_fallthru
      _
    %v123 = vld [vmem:[#allocation2] sm:$0xff]
    %v124 = vld [vmem:[#allocation2 + $0x8] sm:$0xff]
    %v125 = vld [vmem:[#allocation3] sm:$0xff]
    %v126 = vld [vmem:[#allocation3 + $0x8] sm:$0xff]
    %v127 = vld [vmem:[#allocation3 + $0x10] sm:$0xff]
    %v128 = vld [vmem:[#allocation3 + $0x18] sm:$0xff]
    %v129 = vld [vmem:[#allocation3 + $0x20] sm:$0xff]
    %v130 = vld [vmem:[#allocation3 + $0x28] sm:$0xff]
    %v131 = vld [vmem:[#allocation3 + $0x30] sm:$0xff]
    %v132 = vld [vmem:[#allocation3 + $0x38] sm:$0xff]
    %v133 = vld [vmem:[#allocation3 + $0x40] sm:$0xff]
    %v134 = vld [vmem:[#allocation3 + $0x48] sm:$0xff]
    %v135 = vld [vmem:[#allocation3 + $0x50] sm:$0xff]
    %v136 = vld [vmem:[#allocation3 + $0x58] sm:$0xff]
    %v137 = vld [vmem:[#allocation3 + $0x60] sm:$0xff]
    %v138 = vld [vmem:[#allocation3 + $0x68] sm:$0xff]
    %v139 = vld [vmem:[#allocation3 + $0x70] sm:$0xff]
    %v140 = vld [vmem:[#allocation3 + $0x78] sm:$0xff]
    %v141 = vld [vmem:[#allocation3 + $0x80] sm:$0xff]
    %v142 = vld [vmem:[#allocation3 + $0x88] sm:$0xff]
    %v143 = vld [vmem:[#allocation3 + $0x90] sm:$0xff]
    %v144 = vld [vmem:[#allocation3 + $0x98] sm:$0xff]
    %v145 = vld [vmem:[#allocation3 + $0xa0] sm:$0xff]
    %v146 = vld [vmem:[#allocation3 + $0xa8] sm:$0xff]
    %v147 = vld [vmem:[#allocation3 + $0xb0] sm:$0xff]
    %v148 = vld [vmem:[#allocation3 + $0xb8] sm:$0xff]
    %v149 = vld [vmem:[#allocation3 + $0xc0] sm:$0xff]
    %v150 = vld [vmem:[#allocation3 + $0xc8] sm:$0xff]
    %v151 = vld [vmem:[#allocation3 + $0xd0] sm:$0xff]
    %v152 = vld [vmem:[#allocation3 + $0xd8] sm:$0xff]
    %v153 = vld [vmem:[#allocation3 + $0xe0] sm:$0xff]
    %v154 = vld [vmem:[#allocation3 + $0xe8] sm:$0xff]
    %v155 = vld [vmem:[#allocation3 + $0xf0] sm:$0xff]
    %v156 = vld [vmem:[#allocation3 + $0xf8] sm:$0xff]
    %v157 = vld [vmem:[#allocation3 + $0x100] sm:$0xff]
    %v158 = vld [vmem:[#allocation3 + $0x108] sm:$0xff]
    %v159 = vld [vmem:[#allocation3 + $0x110] sm:$0xff]
    %v160 = vld [vmem:[#allocation3 + $0x118] sm:$0xff]
    %v161 = vld [vmem:[#allocation3 + $0x120] sm:$0xff]
    %v162 = vld [vmem:[#allocation3 + $0x128] sm:$0xff]
    %v163 = vld [vmem:[#allocation3 + $0x130] sm:$0xff]
    %v164 = vld [vmem:[#allocation3 + $0x138] sm:$0xff]
    %v165 = vld [vmem:[#allocation3 + $0x140] sm:$0xff]
    %v166 = vld [vmem:[#allocation3 + $0x148] sm:$0xff]
    %v167 = vld [vmem:[#allocation3 + $0x150] sm:$0xff]
    %v168 = vld [vmem:[#allocation3 + $0x158] sm:$0xff]
    %v169 = vld [vmem:[#allocation3 + $0x160] sm:$0xff]
    %v170 = vld [vmem:[#allocation3 + $0x168] sm:$0xff]
    %v171 = vld [vmem:[#allocation3 + $0x170] sm:$0xff]
    %v172 = vld [vmem:[#allocation3 + $0x178] sm:$0xff]
    %v173 = vld [vmem:[#allocation6] sm:$0xf]
    %v174 = vld [vmem:[#allocation6 + $0x4] sm:$0xf]
    %v175 = vld [vmem:[#allocation6 + $0x8] sm:$0xf]
    %v176 = vld [vmem:[#allocation6 + $0xc] sm:$0xf]
    %v177 = vld [vmem:[#allocation6 + $0x10] sm:$0xf]
    %v178 = vld [vmem:[#allocation6 + $0x14] sm:$0xf]
    %v179 = vld [vmem:[#allocation6 + $0x18] sm:$0xf]
    %v180 = vld [vmem:[#allocation6 + $0x1c] sm:$0xf]
    %v181 = vld [vmem:[#allocation6 + $0x20] sm:$0xf]
    %v182 = vld [vmem:[#allocation6 + $0x24] sm:$0xf]
    %v183 = vld [vmem:[#allocation6 + $0x28] sm:$0xf]
    %v184 = vld [vmem:[#allocation6 + $0x2c] sm:$0xf]
    %v185 = vld [vmem:[#allocation6 + $0x30] sm:$0xf]
    %v186 = vld [vmem:[#allocation6 + $0x34] sm:$0xf]
    %v187 = vld [vmem:[#allocation6 + $0x38] sm:$0xf]
    %v188 = vld [vmem:[#allocation6 + $0x3c] sm:$0xf]
    %v189 = vld [vmem:[#allocation6 + $0x40] sm:$0xf]
    %v190 = vld [vmem:[#allocation6 + $0x44] sm:$0xf]
    %v191 = vld [vmem:[#allocation6 + $0x48] sm:$0xf]
    %v192 = vld [vmem:[#allocation6 + $0x4c] sm:$0xf]
    %v193 = vld [vmem:[#allocation6 + $0x50] sm:$0xf]
    %v194 = vld [vmem:[#allocation6 + $0x54] sm:$0xf]
    %v195 = vld [vmem:[#allocation6 + $0x58] sm:$0xf]
    %v196 = vld [vmem:[#allocation6 + $0x5c] sm:$0xf]
    %v197 = vld [vmem:[#allocation6 + $0x60] sm:$0xf]
    %v198 = vld [vmem:[#allocation6 + $0x64] sm:$0xf]
    %v199 = vld [vmem:[#allocation6 + $0x68] sm:$0xf]
    %v200 = vld [vmem:[#allocation6 + $0x6c] sm:$0xf]
    %v201 = vld [vmem:[#allocation6 + $0x70] sm:$0xf]
    %v202 = vld [vmem:[#allocation6 + $0x74] sm:$0xf]
    %v203 = vld [vmem:[#allocation6 + $0x78] sm:$0xf]
    %v204 = vld [vmem:[#allocation6 + $0x7c] sm:$0xf]
    %v205 = vld [vmem:[#allocation6 + $0x80] sm:$0xf]
    %v206 = vld [vmem:[#allocation6 + $0x84] sm:$0xf]
    %v207 = vld [vmem:[#allocation6 + $0x88] sm:$0xf]
    %v208 = vld [vmem:[#allocation6 + $0x8c] sm:$0xf]
    %v209 = vld [vmem:[#allocation6 + $0x90] sm:$0xf]
    %v210 = vld [vmem:[#allocation6 + $0x94] sm:$0xf]
    %v211 = vld [vmem:[#allocation6 + $0x98] sm:$0xf]
    %v212 = vld [vmem:[#allocation6 + $0x9c] sm:$0xf]
    %v213 = vld [vmem:[#allocation6 + $0xa0] sm:$0xf]
    %v214 = vld [vmem:[#allocation6 + $0xa4] sm:$0xf]
    %v215 = vld [vmem:[#allocation6 + $0xa8] sm:$0xf]
    %v216 = vld [vmem:[#allocation6 + $0xac] sm:$0xf]
    %v217 = vld [vmem:[#allocation6 + $0xb0] sm:$0xf]
    %v218 = vld [vmem:[#allocation6 + $0xb4] sm:$0xf]
    %v219 = vld [vmem:[#allocation6 + $0xb8] sm:$0xf]
    %v220 = vld [vmem:[#allocation6 + $0xbc] sm:$0xf]
    %v221 = vld [vmem:[#allocation6 + $0xc0] sm:$0xf]
    %v222 = vld [vmem:[#allocation6 + $0xc4] sm:$0xf]
    %v223 = vld [vmem:[#allocation6 + $0xc8] sm:$0xf]
    %v224 = vld [vmem:[#allocation6 + $0xcc] sm:$0xf]
    %v225 = vld [vmem:[#allocation6 + $0xd0] sm:$0xf]
    %v226 = vld [vmem:[#allocation6 + $0xd4] sm:$0xf]
    %v227 = vld [vmem:[#allocation6 + $0xd8] sm:$0xf]
    %v228 = vld [vmem:[#allocation6 + $0xdc] sm:$0xf]
    %v229 = vld [vmem:[#allocation6 + $0xe0] sm:$0xf]
    %v230 = vld [vmem:[#allocation6 + $0xe4] sm:$0xf]
    %v231 = vld [vmem:[#allocation6 + $0xe8] sm:$0xf]
    %v232 = vld [vmem:[#allocation6 + $0xec] sm:$0xf]
    %v233 = vld [vmem:[#allocation6 + $0xf0] sm:$0xf]
    %v234 = vld [vmem:[#allocation6 + $0xf4] sm:$0xf]
    %v235 = vld [vmem:[#allocation6 + $0xf8] sm:$0xf]
    %v236 = vld [vmem:[#allocation6 + $0xfc] sm:$0xf]
    %v237 = vld [vmem:[#allocation6 + $0x100] sm:$0xf]
    %v238 = vld [vmem:[#allocation6 + $0x104] sm:$0xf]
    %v239 = vld [vmem:[#allocation6 + $0x108] sm:$0xf]
    %v240 = vld [vmem:[#allocation6 + $0x10c] sm:$0xf]
    %v241 = vld [vmem:[#allocation6 + $0x110] sm:$0xf]
    %v242 = vld [vmem:[#allocation6 + $0x114] sm:$0xf]
    %v243 = vld [vmem:[#allocation6 + $0x118] sm:$0xf]
    %v244 = vld [vmem:[#allocation6 + $0x11c] sm:$0xf]
    %v245 = vld [vmem:[#allocation6 + $0x120] sm:$0xf]
    %v246 = vld [vmem:[#allocation6 + $0x124] sm:$0xf]
    %v247 = vld [vmem:[#allocation6 + $0x128] sm:$0xf]
    %v248 = vld [vmem:[#allocation6 + $0x12c] sm:$0xf]
    %v249 = vld [vmem:[#allocation6 + $0x130] sm:$0xf]
    %v250 = vld [vmem:[#allocation6 + $0x134] sm:$0xf]
    %v251 = vld [vmem:[#allocation6 + $0x138] sm:$0xf]
    %v252 = vld [vmem:[#allocation6 + $0x13c] sm:$0xf]
    %v253 = vld [vmem:[#allocation6 + $0x140] sm:$0xf]
    %v254 = vld [vmem:[#allocation6 + $0x144] sm:$0xf]
    %v255 = vld [vmem:[#allocation6 + $0x148] sm:$0xf]
    %v256 = vld [vmem:[#allocation6 + $0x14c] sm:$0xf]
    %v257 = vld [vmem:[#allocation6 + $0x150] sm:$0xf]
    %v258 = vld [vmem:[#allocation6 + $0x154] sm:$0xf]
    %v259 = vld [vmem:[#allocation6 + $0x158] sm:$0xf]
    %v260 = vld [vmem:[#allocation6 + $0x15c] sm:$0xf]
    %v261 = vld [vmem:[#allocation6 + $0x160] sm:$0xf]
    %v262 = vld [vmem:[#allocation6 + $0x164] sm:$0xf]
    %v263 = vld [vmem:[#allocation6 + $0x168] sm:$0xf]
    %v264 = vld [vmem:[#allocation6 + $0x16c] sm:$0xf]
    %v265 = vld [vmem:[#allocation6 + $0x170] sm:$0xf]
    %v266 = vld [vmem:[#allocation6 + $0x174] sm:$0xf]
    %v267 = vld [vmem:[#allocation6 + $0x178] sm:$0xf]
    %v268 = vld [vmem:[#allocation6 + $0x17c] sm:$0xf]
    %v269 = vld [vmem:[#allocation6 + $0x180] sm:$0xf]
    %v270 = vld [vmem:[#allocation6 + $0x184] sm:$0xf]
    %v271 = vld [vmem:[#allocation6 + $0x188] sm:$0xf]
    %v272 = vld [vmem:[#allocation6 + $0x18c] sm:$0xf]
    %v273 = vld [vmem:[#allocation6 + $0x190] sm:$0xf]
    %v274 = vld [vmem:[#allocation6 + $0x194] sm:$0xf]
    %v275 = vld [vmem:[#allocation6 + $0x198] sm:$0xf]
    %v276 = vld [vmem:[#allocation6 + $0x19c] sm:$0xf]
    %v277 = vld [vmem:[#allocation6 + $0x1a0] sm:$0xf]
    %v278 = vld [vmem:[#allocation6 + $0x1a4] sm:$0xf]
    %v279 = vld [vmem:[#allocation6 + $0x1a8] sm:$0xf]
    %v280 = vld [vmem:[#allocation6 + $0x1ac] sm:$0xf]
    %v281 = vld [vmem:[#allocation6 + $0x1b0] sm:$0xf]
    %v282 = vld [vmem:[#allocation6 + $0x1b4] sm:$0xf]
    %v283 = vld [vmem:[#allocation6 + $0x1b8] sm:$0xf]
    %v284 = vld [vmem:[#allocation6 + $0x1bc] sm:$0xf]
    %v285 = vld [vmem:[#allocation6 + $0x1c0] sm:$0xf]
    %v286 = vld [vmem:[#allocation6 + $0x1c4] sm:$0xf]
    %v287 = vld [vmem:[#allocation6 + $0x1c8] sm:$0xf]
    %v288 = vld [vmem:[#allocation6 + $0x1cc] sm:$0xf]
    %v289 = vld [vmem:[#allocation6 + $0x1d0] sm:$0xf]
    %v290 = vld [vmem:[#allocation6 + $0x1d4] sm:$0xf]
    %v291 = vld [vmem:[#allocation6 + $0x1d8] sm:$0xf]
    %v292 = vld [vmem:[#allocation6 + $0x1dc] sm:$0xf]
    %v293 = vld [vmem:[#allocation6 + $0x1e0] sm:$0xf]
    %v294 = vld [vmem:[#allocation6 + $0x1e4] sm:$0xf]
    %v295 = vld [vmem:[#allocation6 + $0x1e8] sm:$0xf]
    %v296 = vld [vmem:[#allocation6 + $0x1ec] sm:$0xf]
    %v297 = vld [vmem:[#allocation6 + $0x1f0] sm:$0xf]
    %v298 = vld [vmem:[#allocation6 + $0x1f4] sm:$0xf]
    %v299 = vld [vmem:[#allocation6 + $0x1f8] sm:$0xf]
    %v300 = vld [vmem:[#allocation6 + $0x1fc] sm:$0xf]
    %v301 = vld [vmem:[#allocation6 + $0x200] sm:$0xf]
    %v302 = vld [vmem:[#allocation6 + $0x204] sm:$0xf]
    %v303 = vld [vmem:[#allocation6 + $0x208] sm:$0xf]
    %v304 = vld [vmem:[#allocation6 + $0x20c] sm:$0xf]
    %v305 = vld [vmem:[#allocation6 + $0x210] sm:$0xf]
    %v306 = vld [vmem:[#allocation6 + $0x214] sm:$0xf]
    %v307 = vld [vmem:[#allocation6 + $0x218] sm:$0xf]
    %v308 = vld [vmem:[#allocation6 + $0x21c] sm:$0xf]
    %v309 = vld [vmem:[#allocation6 + $0x220] sm:$0xf]
    %v310 = vld [vmem:[#allocation6 + $0x224] sm:$0xf]
    %v311 = vld [vmem:[#allocation6 + $0x228] sm:$0xf]
    %v312 = vld [vmem:[#allocation6 + $0x22c] sm:$0xf]
    %v313 = vld [vmem:[#allocation6 + $0x230] sm:$0xf]
    %v314 = vld [vmem:[#allocation6 + $0x234] sm:$0xf]
    %v315 = vld [vmem:[#allocation6 + $0x238] sm:$0xf]
    %v316 = vld [vmem:[#allocation6 + $0x23c] sm:$0xf]
    %v317 = vld [vmem:[#allocation6 + $0x240] sm:$0xf]
    %v318 = vld [vmem:[#allocation6 + $0x244] sm:$0xf]
    %v319 = vld [vmem:[#allocation6 + $0x248] sm:$0xf]
    %v320 = vld [vmem:[#allocation6 + $0x24c] sm:$0xf]
    %v321 = vld [vmem:[#allocation6 + $0x250] sm:$0xf]
    %v322 = vld [vmem:[#allocation6 + $0x254] sm:$0xf]
    %v323 = vld [vmem:[#allocation6 + $0x258] sm:$0xf]
    %v324 = vld [vmem:[#allocation6 + $0x25c] sm:$0xf]
    %v325 = vld [vmem:[#allocation6 + $0x260] sm:$0xf]
    %v326 = vld [vmem:[#allocation6 + $0x264] sm:$0xf]
    %v327 = vld [vmem:[#allocation6 + $0x268] sm:$0xf]
    %v328 = vld [vmem:[#allocation6 + $0x26c] sm:$0xf]
    %v329 = vld [vmem:[#allocation6 + $0x270] sm:$0xf]
    %v330 = vld [vmem:[#allocation6 + $0x274] sm:$0xf]
    %v331 = vld [vmem:[#allocation6 + $0x278] sm:$0xf]
    %v332 = vld [vmem:[#allocation6 + $0x27c] sm:$0xf]
    %v333 = vld [vmem:[#allocation6 + $0x280] sm:$0xf]
    %v334 = vld [vmem:[#allocation6 + $0x284] sm:$0xf]
    %v335 = vld [vmem:[#allocation6 + $0x288] sm:$0xf]
    %v336 = vld [vmem:[#allocation6 + $0x28c] sm:$0xf]
    %v337 = vld [vmem:[#allocation6 + $0x290] sm:$0xf]
    %v338 = vld [vmem:[#allocation6 + $0x294] sm:$0xf]
    %v339 = vld [vmem:[#allocation6 + $0x298] sm:$0xf]
    %v340 = vld [vmem:[#allocation6 + $0x29c] sm:$0xf]
    %v341 = vld [vmem:[#allocation6 + $0x2a0] sm:$0xf]
    %v342 = vld [vmem:[#allocation6 + $0x2a4] sm:$0xf]
    %v343 = vld [vmem:[#allocation6 + $0x2a8] sm:$0xf]
    %v344 = vld [vmem:[#allocation6 + $0x2ac] sm:$0xf]
    %v345 = vld [vmem:[#allocation6 + $0x2b0] sm:$0xf]
    %v346 = vld [vmem:[#allocation6 + $0x2b4] sm:$0xf]
    %v347 = vld [vmem:[#allocation6 + $0x2b8] sm:$0xf]
    %v348 = vld [vmem:[#allocation6 + $0x2bc] sm:$0xf]
    %v349 = vld [vmem:[#allocation6 + $0x2c0] sm:$0xf]
    %v350 = vld [vmem:[#allocation6 + $0x2c4] sm:$0xf]
    %v351 = vld [vmem:[#allocation6 + $0x2c8] sm:$0xf]
    %v352 = vld [vmem:[#allocation6 + $0x2cc] sm:$0xf]
    %v353 = vld [vmem:[#allocation6 + $0x2d0] sm:$0xf]
    %v354 = vld [vmem:[#allocation6 + $0x2d4] sm:$0xf]
    %v355 = vld [vmem:[#allocation6 + $0x2d8] sm:$0xf]
    %v356 = vld [vmem:[#allocation6 + $0x2dc] sm:$0xf]
    %v357 = vld [vmem:[#allocation6 + $0x2e0] sm:$0xf]
    %v358 = vld [vmem:[#allocation6 + $0x2e4] sm:$0xf]
    %v359 = vld [vmem:[#allocation6 + $0x2e8] sm:$0xf]
    %v360 = vld [vmem:[#allocation6 + $0x2ec] sm:$0xf]
    %v361 = vld [vmem:[#allocation6 + $0x2f0] sm:$0xf]
    %v362 = vld [vmem:[#allocation6 + $0x2f4] sm:$0xf]
    %v363 = vld [vmem:[#allocation6 + $0x2f8] sm:$0xf]
    %v364 = vld [vmem:[#allocation6 + $0x2fc] sm:$0xf]
    %v365 = vld [vmem:[#allocation6 + $0x300] sm:$0xf]
    %v366 = vld [vmem:[#allocation6 + $0x304] sm:$0xf]
    %v367 = vld [vmem:[#allocation6 + $0x308] sm:$0xf]
    %v368 = vld [vmem:[#allocation6 + $0x30c] sm:$0xf]
    %v369 = vld [vmem:[#allocation6 + $0x310] sm:$0xf]
    %v370 = vld [vmem:[#allocation6 + $0x314] sm:$0xf]
    %v371 = vld [vmem:[#allocation6 + $0x318] sm:$0xf]
    %v372 = vld [vmem:[#allocation6 + $0x31c] sm:$0xf]
    %v373 = vld [vmem:[#allocation6 + $0x320] sm:$0xf]
    %v374 = vld [vmem:[#allocation6 + $0x324] sm:$0xf]
    %v375 = vld [vmem:[#allocation6 + $0x328] sm:$0xf]
    %v376 = vld [vmem:[#allocation6 + $0x32c] sm:$0xf]
    %v377 = vld [vmem:[#allocation6 + $0x330] sm:$0xf]
    %v378 = vld [vmem:[#allocation6 + $0x334] sm:$0xf]
    %v379 = vld [vmem:[#allocation6 + $0x338] sm:$0xf]
    %v380 = vld [vmem:[#allocation6 + $0x33c] sm:$0xf]
    %v381 = vld [vmem:[#allocation6 + $0x340] sm:$0xf]
    %v382 = vld [vmem:[#allocation6 + $0x344] sm:$0xf]
    %v383 = vld [vmem:[#allocation6 + $0x348] sm:$0xf]
    %v384 = vld [vmem:[#allocation6 + $0x34c] sm:$0xf]
    %v385 = vld [vmem:[#allocation6 + $0x350] sm:$0xf]
    %v386 = vld [vmem:[#allocation6 + $0x354] sm:$0xf]
    %v387 = vld [vmem:[#allocation6 + $0x358] sm:$0xf]
    %v388 = vld [vmem:[#allocation6 + $0x35c] sm:$0xf]
    %v389 = vld [vmem:[#allocation6 + $0x360] sm:$0xf]
    %v390 = vld [vmem:[#allocation6 + $0x364] sm:$0xf]
    %v391 = vld [vmem:[#allocation6 + $0x368] sm:$0xf]
    %v392 = vld [vmem:[#allocation6 + $0x36c] sm:$0xf]
    %v393 = vld [vmem:[#allocation6 + $0x370] sm:$0xf]
    %v394 = vld [vmem:[#allocation6 + $0x374] sm:$0xf]
    %v395 = vld [vmem:[#allocation6 + $0x378] sm:$0xf]
    %v396 = vld [vmem:[#allocation6 + $0x37c] sm:$0xf]
    %v397 = vld [vmem:[#allocation6 + $0x380] sm:$0xf]
    %v398 = vld [vmem:[#allocation6 + $0x384] sm:$0xf]
    %v399 = vld [vmem:[#allocation6 + $0x388] sm:$0xf]
    %v400 = vld [vmem:[#allocation6 + $0x38c] sm:$0xf]
    %v401 = vld [vmem:[#allocation6 + $0x390] sm:$0xf]
    %v402 = vld [vmem:[#allocation6 + $0x394] sm:$0xf]
    %v403 = vld [vmem:[#allocation6 + $0x398] sm:$0xf]
    %v404 = vld [vmem:[#allocation6 + $0x39c] sm:$0xf]
    %v405 = vld [vmem:[#allocation6 + $0x3a0] sm:$0xf]
    %v406 = vld [vmem:[#allocation6 + $0x3a4] sm:$0xf]
    %v407 = vld [vmem:[#allocation6 + $0x3a8] sm:$0xf]
    %v408 = vld [vmem:[#allocation6 + $0x3ac] sm:$0xf]
    %v409 = vld [vmem:[#allocation6 + $0x3b0] sm:$0xf]
    %v410 = vld [vmem:[#allocation6 + $0x3b4] sm:$0xf]
    %v411 = vld [vmem:[#allocation6 + $0x3b8] sm:$0xf]
    %v412 = vld [vmem:[#allocation6 + $0x3bc] sm:$0xf]
    %v413 = vld [vmem:[#allocation6 + $0x3c0] sm:$0xf]
    %v414 = vld [vmem:[#allocation6 + $0x3c4] sm:$0xf]
    %v415 = vld [vmem:[#allocation6 + $0x3c8] sm:$0xf]
    %v416 = vld [vmem:[#allocation6 + $0x3cc] sm:$0xf]
    %v417 = vld [vmem:[#allocation6 + $0x3d0] sm:$0xf]
    %v418 = vld [vmem:[#allocation6 + $0x3d4] sm:$0xf]
    %v419 = vld [vmem:[#allocation6 + $0x3d8] sm:$0xf]
    %v420 = vld [vmem:[#allocation6 + $0x3dc] sm:$0xf]
    %v421 = vld [vmem:[#allocation6 + $0x3e0] sm:$0xf]
    %v422 = vld [vmem:[#allocation6 + $0x3e4] sm:$0xf]
    %v423 = vld [vmem:[#allocation6 + $0x3e8] sm:$0xf]
    %v424 = vld [vmem:[#allocation6 + $0x3ec] sm:$0xf]
    %v425 = vld [vmem:[#allocation6 + $0x3f0] sm:$0xf]
    %v426 = vld [vmem:[#allocation6 + $0x3f4] sm:$0xf]
    %v427 = vld [vmem:[#allocation6 + $0x3f8] sm:$0xf]
    %v428 = vld [vmem:[#allocation6 + $0x3fc] sm:$0xf]
    %v429 = vld [vmem:[#allocation6 + $0x400] sm:$0xf]
    %v430 = vld [vmem:[#allocation6 + $0x404] sm:$0xf]
    %v431 = vld [vmem:[#allocation6 + $0x408] sm:$0xf]
    %v432 = vld [vmem:[#allocation6 + $0x40c] sm:$0xf]
    %v433 = vld [vmem:[#allocation6 + $0x410] sm:$0xf]
    %v434 = vld [vmem:[#allocation6 + $0x414] sm:$0xf]
    %v435 = vld [vmem:[#allocation6 + $0x418] sm:$0xf]
    %v436 = vld [vmem:[#allocation6 + $0x41c] sm:$0xf]
    %v437 = vld [vmem:[#allocation6 + $0x420] sm:$0xf]
    %v438 = vld [vmem:[#allocation6 + $0x424] sm:$0xf]
    %v439 = vld [vmem:[#allocation6 + $0x428] sm:$0xf]
    %v440 = vld [vmem:[#allocation6 + $0x42c] sm:$0xf]
    %v441 = vld [vmem:[#allocation6 + $0x430] sm:$0xf]
    %v442 = vld [vmem:[#allocation6 + $0x434] sm:$0xf]
    %v443 = vld [vmem:[#allocation6 + $0x438] sm:$0xf]
    %v444 = vld [vmem:[#allocation6 + $0x43c] sm:$0xf]
    %v445 = vld [vmem:[#allocation6 + $0x440] sm:$0xf]
    %v446 = vld [vmem:[#allocation6 + $0x444] sm:$0xf]
    %v447 = vld [vmem:[#allocation6 + $0x448] sm:$0xf]
    %v448 = vld [vmem:[#allocation6 + $0x44c] sm:$0xf]
    %v449 = vld [vmem:[#allocation6 + $0x450] sm:$0xf]
    %v450 = vld [vmem:[#allocation6 + $0x454] sm:$0xf]
    %v451 = vld [vmem:[#allocation6 + $0x458] sm:$0xf]
    %v452 = vld [vmem:[#allocation6 + $0x45c] sm:$0xf]
    %v453 = vld [vmem:[#allocation6 + $0x460] sm:$0xf]
    %v454 = vld [vmem:[#allocation6 + $0x464] sm:$0xf]
    %v455 = vld [vmem:[#allocation6 + $0x468] sm:$0xf]
    %v456 = vld [vmem:[#allocation6 + $0x46c] sm:$0xf]
    %v457 = vld [vmem:[#allocation6 + $0x470] sm:$0xf]
    %v458 = vld [vmem:[#allocation6 + $0x474] sm:$0xf]
    %v459 = vld [vmem:[#allocation6 + $0x478] sm:$0xf]
    %v460 = vld [vmem:[#allocation6 + $0x47c] sm:$0xf]
    %v461 = vld [vmem:[#allocation6 + $0x480] sm:$0xf]
    %v462 = vld [vmem:[#allocation6 + $0x484] sm:$0xf]
    %v463 = vld [vmem:[#allocation6 + $0x488] sm:$0xf]
    %v464 = vld [vmem:[#allocation6 + $0x48c] sm:$0xf]
    %v465 = vld [vmem:[#allocation6 + $0x490] sm:$0xf]
    %v466 = vld [vmem:[#allocation6 + $0x494] sm:$0xf]
    %v467 = vld [vmem:[#allocation6 + $0x498] sm:$0xf]
    %v468 = vld [vmem:[#allocation6 + $0x49c] sm:$0xf]
    %v469 = vld [vmem:[#allocation6 + $0x4a0] sm:$0xf]
    %v470 = vld [vmem:[#allocation6 + $0x4a4] sm:$0xf]
    %v471 = vld [vmem:[#allocation6 + $0x4a8] sm:$0xf]
    %v472 = vld [vmem:[#allocation6 + $0x4ac] sm:$0xf]
    %v473 = vld [vmem:[#allocation6 + $0x4b0] sm:$0xf]
    %v474 = vld [vmem:[#allocation6 + $0x4b4] sm:$0xf]
    %v475 = vld [vmem:[#allocation6 + $0x4b8] sm:$0xf]
    %v476 = vld [vmem:[#allocation6 + $0x4bc] sm:$0xf]
    %v477 = vld [vmem:[#allocation6 + $0x4c0] sm:$0xf]
    %v478 = vld [vmem:[#allocation6 + $0x4c4] sm:$0xf]
    %v479 = vld [vmem:[#allocation6 + $0x4c8] sm:$0xf]
    %v480 = vld [vmem:[#allocation6 + $0x4cc] sm:$0xf]
    %v481 = vld [vmem:[#allocation6 + $0x4d0] sm:$0xf]
    %v482 = vld [vmem:[#allocation6 + $0x4d4] sm:$0xf]
    %v483 = vld [vmem:[#allocation6 + $0x4d8] sm:$0xf]
    %v484 = vld [vmem:[#allocation6 + $0x4dc] sm:$0xf]
    %v485 = vld [vmem:[#allocation6 + $0x4e0] sm:$0xf]
    %v486 = vld [vmem:[#allocation6 + $0x4e4] sm:$0xf]
    %v487 = vld [vmem:[#allocation6 + $0x4e8] sm:$0xf]
    %v488 = vld [vmem:[#allocation6 + $0x4ec] sm:$0xf]
    %v489 = vld [vmem:[#allocation6 + $0x4f0] sm:$0xf]
    %v490 = vld [vmem:[#allocation6 + $0x4f4] sm:$0xf]
    %v491 = vld [vmem:[#allocation6 + $0x4f8] sm:$0xf]
    %v492 = vld [vmem:[#allocation6 + $0x4fc] sm:$0xf]
    %v493 = vld [vmem:[#allocation6 + $0x500] sm:$0xf]
    %v494 = vld [vmem:[#allocation6 + $0x504] sm:$0xf]
    %v495 = vld [vmem:[#allocation6 + $0x508] sm:$0xf]
    %v496 = vld [vmem:[#allocation6 + $0x50c] sm:$0xf]
    %v497 = vld [vmem:[#allocation6 + $0x510] sm:$0xf]
    %v498 = vld [vmem:[#allocation6 + $0x514] sm:$0xf]
    %v499 = vld [vmem:[#allocation6 + $0x518] sm:$0xf]
    %v500 = vld [vmem:[#allocation6 + $0x51c] sm:$0xf]
    %v501 = vld [vmem:[#allocation6 + $0x520] sm:$0xf]
    %v502 = vld [vmem:[#allocation6 + $0x524] sm:$0xf]
    %v503 = vld [vmem:[#allocation6 + $0x528] sm:$0xf]
    %v504 = vld [vmem:[#allocation6 + $0x52c] sm:$0xf]
    %v505 = vld [vmem:[#allocation6 + $0x530] sm:$0xf]
    %v506 = vld [vmem:[#allocation6 + $0x534] sm:$0xf]
    %v507 = vld [vmem:[#allocation6 + $0x538] sm:$0xf]
    %v508 = vld [vmem:[#allocation6 + $0x53c] sm:$0xf]
    %v509 = vld [vmem:[#allocation6 + $0x540] sm:$0xf]
    %v510 = vld [vmem:[#allocation6 + $0x544] sm:$0xf]
    %v511 = vld [vmem:[#allocation6 + $0x548] sm:$0xf]
    %v512 = vld [vmem:[#allocation6 + $0x54c] sm:$0xf]
    %v513 = vld [vmem:[#allocation6 + $0x550] sm:$0xf]
    %v514 = vld [vmem:[#allocation6 + $0x554] sm:$0xf]
    %v515 = vld [vmem:[#allocation6 + $0x558] sm:$0xf]
    %v516 = vld [vmem:[#allocation6 + $0x55c] sm:$0xf]
    %v517 = vld [vmem:[#allocation6 + $0x560] sm:$0xf]
    %v518 = vld [vmem:[#allocation6 + $0x564] sm:$0xf]
    %v519 = vld [vmem:[#allocation6 + $0x568] sm:$0xf]
    %v520 = vld [vmem:[#allocation6 + $0x56c] sm:$0xf]
    %v521 = vld [vmem:[#allocation6 + $0x570] sm:$0xf]
    %v522 = vld [vmem:[#allocation6 + $0x574] sm:$0xf]
    %v523 = vld [vmem:[#allocation6 + $0x578] sm:$0xf]
    %v524 = vld [vmem:[#allocation6 + $0x57c] sm:$0xf]
    %v525 = vld [vmem:[#allocation6 + $0x580] sm:$0xf]
    %v526 = vld [vmem:[#allocation6 + $0x584] sm:$0xf]
    %v527 = vld [vmem:[#allocation6 + $0x588] sm:$0xf]
    %v528 = vld [vmem:[#allocation6 + $0x58c] sm:$0xf]
    %v529 = vld [vmem:[#allocation6 + $0x590] sm:$0xf]
    %v530 = vld [vmem:[#allocation6 + $0x594] sm:$0xf]
    %v531 = vld [vmem:[#allocation6 + $0x598] sm:$0xf]
    %v532 = vld [vmem:[#allocation6 + $0x59c] sm:$0xf]
    %v533 = vld [vmem:[#allocation6 + $0x5a0] sm:$0xf]
    %v534 = vld [vmem:[#allocation6 + $0x5a4] sm:$0xf]
    %v535 = vld [vmem:[#allocation6 + $0x5a8] sm:$0xf]
    %v536 = vld [vmem:[#allocation6 + $0x5ac] sm:$0xf]
    %v537 = vld [vmem:[#allocation6 + $0x5b0] sm:$0xf]
    %v538 = vld [vmem:[#allocation6 + $0x5b4] sm:$0xf]
    %v539 = vld [vmem:[#allocation6 + $0x5b8] sm:$0xf]
    %v540 = vld [vmem:[#allocation6 + $0x5bc] sm:$0xf]
    %v541 = vld [vmem:[#allocation6 + $0x5c0] sm:$0xf]
    %v542 = vld [vmem:[#allocation6 + $0x5c4] sm:$0xf]
    %v543 = vld [vmem:[#allocation6 + $0x5c8] sm:$0xf]
    %v544 = vld [vmem:[#allocation6 + $0x5cc] sm:$0xf]
    %v545 = vld [vmem:[#allocation6 + $0x5d0] sm:$0xf]
    %v546 = vld [vmem:[#allocation6 + $0x5d4] sm:$0xf]
    %v547 = vld [vmem:[#allocation6 + $0x5d8] sm:$0xf]
    %v548 = vld [vmem:[#allocation6 + $0x5dc] sm:$0xf]
    %v549 = vld [vmem:[#allocation6 + $0x5e0] sm:$0xf]
    %v550 = vld [vmem:[#allocation6 + $0x5e4] sm:$0xf]
    %v551 = vld [vmem:[#allocation6 + $0x5e8] sm:$0xf]
    %v552 = vld [vmem:[#allocation6 + $0x5ec] sm:$0xf]
    %v553 = vld [vmem:[#allocation6 + $0x5f0] sm:$0xf]
    %v554 = vld [vmem:[#allocation6 + $0x5f4] sm:$0xf]
    %v555 = vld [vmem:[#allocation6 + $0x5f8] sm:$0xf]
    %v556 = vld [vmem:[#allocation6 + $0x5fc] sm:$0xf]
    %v557 = vld [vmem:[#allocation6 + $0x600] sm:$0xf]
    %v558 = vld [vmem:[#allocation6 + $0x604] sm:$0xf]
    %v559 = vld [vmem:[#allocation6 + $0x608] sm:$0xf]
    %v560 = vld [vmem:[#allocation6 + $0x60c] sm:$0xf]
    %v561 = vld [vmem:[#allocation6 + $0x610] sm:$0xf]
    %v562 = vld [vmem:[#allocation6 + $0x614] sm:$0xf]
    %v563 = vld [vmem:[#allocation6 + $0x618] sm:$0xf]
    %v564 = vld [vmem:[#allocation6 + $0x61c] sm:$0xf]
    %v565 = vld [vmem:[#allocation6 + $0x620] sm:$0xf]
    %v566 = vld [vmem:[#allocation6 + $0x624] sm:$0xf]
    %v567 = vld [vmem:[#allocation6 + $0x628] sm:$0xf]
    %v568 = vld [vmem:[#allocation6 + $0x62c] sm:$0xf]
    %v569 = vld [vmem:[#allocation6 + $0x630] sm:$0xf]
    %v570 = vld [vmem:[#allocation6 + $0x634] sm:$0xf]
    %v571 = vld [vmem:[#allocation6 + $0x638] sm:$0xf]
    %v572 = vld [vmem:[#allocation6 + $0x63c] sm:$0xf]
    %v573 = vld [vmem:[#allocation6 + $0x640] sm:$0xf]
    %v574 = vld [vmem:[#allocation6 + $0x644] sm:$0xf]
    %v575 = vld [vmem:[#allocation6 + $0x648] sm:$0xf]
    %v576 = vld [vmem:[#allocation6 + $0x64c] sm:$0xf]
    %v577 = vld [vmem:[#allocation6 + $0x650] sm:$0xf]
    %v578 = vld [vmem:[#allocation6 + $0x654] sm:$0xf]
    %v579 = vld [vmem:[#allocation6 + $0x658] sm:$0xf]
    %v580 = vld [vmem:[#allocation6 + $0x65c] sm:$0xf]
    %v581 = vld [vmem:[#allocation6 + $0x660] sm:$0xf]
    %v582 = vld [vmem:[#allocation6 + $0x664] sm:$0xf]
    %v583 = vld [vmem:[#allocation6 + $0x668] sm:$0xf]
    %v584 = vld [vmem:[#allocation6 + $0x66c] sm:$0xf]
    %v585 = vld [vmem:[#allocation6 + $0x670] sm:$0xf]
    %v586 = vld [vmem:[#allocation6 + $0x674] sm:$0xf]
    %v587 = vld [vmem:[#allocation6 + $0x678] sm:$0xf]
    %v588 = vld [vmem:[#allocation6 + $0x67c] sm:$0xf]
    %v589 = vld [vmem:[#allocation6 + $0x680] sm:$0xf]
    %v590 = vld [vmem:[#allocation6 + $0x684] sm:$0xf]
    %v591 = vld [vmem:[#allocation6 + $0x688] sm:$0xf]
    %v592 = vld [vmem:[#allocation6 + $0x68c] sm:$0xf]
    %v593 = vld [vmem:[#allocation6 + $0x690] sm:$0xf]
    %v594 = vld [vmem:[#allocation6 + $0x694] sm:$0xf]
    %v595 = vld [vmem:[#allocation6 + $0x698] sm:$0xf]
    %v596 = vld [vmem:[#allocation6 + $0x69c] sm:$0xf]
    %v597 = vld [vmem:[#allocation6 + $0x6a0] sm:$0xf]
    %v598 = vld [vmem:[#allocation6 + $0x6a4] sm:$0xf]
    %v599 = vld [vmem:[#allocation6 + $0x6a8] sm:$0xf]
    %v600 = vld [vmem:[#allocation6 + $0x6ac] sm:$0xf]
    %v601 = vld [vmem:[#allocation6 + $0x6b0] sm:$0xf]
    %v602 = vld [vmem:[#allocation6 + $0x6b4] sm:$0xf]
    %v603 = vld [vmem:[#allocation6 + $0x6b8] sm:$0xf]
    %v604 = vld [vmem:[#allocation6 + $0x6bc] sm:$0xf]
    %v605 = vld [vmem:[#allocation6 + $0x6c0] sm:$0xf]
    %v606 = vld [vmem:[#allocation6 + $0x6c4] sm:$0xf]
    %v607 = vld [vmem:[#allocation6 + $0x6c8] sm:$0xf]
    %v608 = vld [vmem:[#allocation6 + $0x6cc] sm:$0xf]
    %v609 = vld [vmem:[#allocation6 + $0x6d0] sm:$0xf]
    %v610 = vld [vmem:[#allocation6 + $0x6d4] sm:$0xf]
    %v611 = vld [vmem:[#allocation6 + $0x6d8] sm:$0xf]
    %v612 = vld [vmem:[#allocation6 + $0x6dc] sm:$0xf]
    %v613 = vld [vmem:[#allocation6 + $0x6e0] sm:$0xf]
    %v614 = vld [vmem:[#allocation6 + $0x6e4] sm:$0xf]
    %v615 = vld [vmem:[#allocation6 + $0x6e8] sm:$0xf]
    %v616 = vld [vmem:[#allocation6 + $0x6ec] sm:$0xf]
    %v617 = vld [vmem:[#allocation6 + $0x6f0] sm:$0xf]
    %v618 = vld [vmem:[#allocation6 + $0x6f4] sm:$0xf]
    %v619 = vld [vmem:[#allocation6 + $0x6f8] sm:$0xf]
    %v620 = vld [vmem:[#allocation6 + $0x6fc] sm:$0xf]
    %v621 = vld [vmem:[#allocation6 + $0x700] sm:$0xf]
    %v622 = vld [vmem:[#allocation6 + $0x704] sm:$0xf]
    %v623 = vld [vmem:[#allocation6 + $0x708] sm:$0xf]
    %v624 = vld [vmem:[#allocation6 + $0x70c] sm:$0xf]
    %v625 = vld [vmem:[#allocation6 + $0x710] sm:$0xf]
    %v626 = vld [vmem:[#allocation6 + $0x714] sm:$0xf]
    %v627 = vld [vmem:[#allocation6 + $0x718] sm:$0xf]
    %v628 = vld [vmem:[#allocation6 + $0x71c] sm:$0xf]
    %v629 = vld [vmem:[#allocation6 + $0x720] sm:$0xf]
    %v630 = vld [vmem:[#allocation6 + $0x724] sm:$0xf]
    %v631 = vld [vmem:[#allocation6 + $0x728] sm:$0xf]
    %v632 = vld [vmem:[#allocation6 + $0x72c] sm:$0xf]
    %v633 = vld [vmem:[#allocation6 + $0x730] sm:$0xf]
    %v634 = vld [vmem:[#allocation6 + $0x734] sm:$0xf]
    %v635 = vld [vmem:[#allocation6 + $0x738] sm:$0xf]
    %v636 = vld [vmem:[#allocation6 + $0x73c] sm:$0xf]
    %v637 = vld [vmem:[#allocation6 + $0x740] sm:$0xf]
    %v638 = vld [vmem:[#allocation6 + $0x744] sm:$0xf]
    %v639 = vld [vmem:[#allocation6 + $0x748] sm:$0xf]
    %v640 = vld [vmem:[#allocation6 + $0x74c] sm:$0xf]
    %v641 = vld [vmem:[#allocation6 + $0x750] sm:$0xf]
    %v642 = vld [vmem:[#allocation6 + $0x754] sm:$0xf]
    %v643 = vld [vmem:[#allocation6 + $0x758] sm:$0xf]
    %v644 = vld [vmem:[#allocation6 + $0x75c] sm:$0xf]
    %v645 = vld [vmem:[#allocation6 + $0x760] sm:$0xf]
    %v646 = vld [vmem:[#allocation6 + $0x764] sm:$0xf]
    %v647 = vld [vmem:[#allocation6 + $0x768] sm:$0xf]
    %v648 = vld [vmem:[#allocation6 + $0x76c] sm:$0xf]
    %v649 = vld [vmem:[#allocation6 + $0x770] sm:$0xf]
    %v650 = vld [vmem:[#allocation6 + $0x774] sm:$0xf]
    %v651 = vld [vmem:[#allocation6 + $0x778] sm:$0xf]
    %v652 = vld [vmem:[#allocation6 + $0x77c] sm:$0xf]
    %v653 = vld [vmem:[#allocation6 + $0x780] sm:$0xf]
    %v654 = vld [vmem:[#allocation6 + $0x784] sm:$0xf]
    %v655 = vld [vmem:[#allocation6 + $0x788] sm:$0xf]
    %v656 = vld [vmem:[#allocation6 + $0x78c] sm:$0xf]
    %v657 = vld [vmem:[#allocation6 + $0x790] sm:$0xf]
    %v658 = vld [vmem:[#allocation6 + $0x794] sm:$0xf]
    %v659 = vld [vmem:[#allocation6 + $0x798] sm:$0xf]
    %v660 = vld [vmem:[#allocation6 + $0x79c] sm:$0xf]
    %v661 = vld [vmem:[#allocation6 + $0x7a0] sm:$0xf]
    %v662 = vld [vmem:[#allocation6 + $0x7a4] sm:$0xf]
    %v663 = vld [vmem:[#allocation6 + $0x7a8] sm:$0xf]
    %v664 = vld [vmem:[#allocation6 + $0x7ac] sm:$0xf]
    %v665 = vld [vmem:[#allocation6 + $0x7b0] sm:$0xf]
    %v666 = vld [vmem:[#allocation6 + $0x7b4] sm:$0xf]
    %v667 = vld [vmem:[#allocation6 + $0x7b8] sm:$0xf]
    %v668 = vld [vmem:[#allocation6 + $0x7bc] sm:$0xf]
    %v669 = vld [vmem:[#allocation6 + $0x7c0] sm:$0xf]
    %v670 = vld [vmem:[#allocation6 + $0x7c4] sm:$0xf]
    %v671 = vld [vmem:[#allocation6 + $0x7c8] sm:$0xf]
    %v672 = vld [vmem:[#allocation6 + $0x7cc] sm:$0xf]
    %v673 = vld [vmem:[#allocation6 + $0x7d0] sm:$0xf]
    %v674 = vld [vmem:[#allocation6 + $0x7d4] sm:$0xf]
    %v675 = vld [vmem:[#allocation6 + $0x7d8] sm:$0xf]
    %v676 = vld [vmem:[#allocation6 + $0x7dc] sm:$0xf]
    %v677 = vld [vmem:[#allocation6 + $0x7e0] sm:$0xf]
    %v678 = vld [vmem:[#allocation6 + $0x7e4] sm:$0xf]
    %v679 = vld [vmem:[#allocation6 + $0x7e8] sm:$0xf]
    %v680 = vld [vmem:[#allocation6 + $0x7ec] sm:$0xf]
    %v681 = vld [vmem:[#allocation6 + $0x7f0] sm:$0xf]
    %v682 = vld [vmem:[#allocation6 + $0x7f4] sm:$0xf]
    %v683 = vld [vmem:[#allocation6 + $0x7f8] sm:$0xf]
    %v684 = vld [vmem:[#allocation6 + $0x7fc] sm:$0xf]
    %v685 = vld [vmem:[#allocation6 + $0x800] sm:$0xf]
    %v686 = vld [vmem:[#allocation6 + $0x804] sm:$0xf]
    %v687 = vld [vmem:[#allocation6 + $0x808] sm:$0xf]
    %v688 = vld [vmem:[#allocation6 + $0x80c] sm:$0xf]
    %v689 = vld [vmem:[#allocation6 + $0x810] sm:$0xf]
    %v690 = vld [vmem:[#allocation6 + $0x814] sm:$0xf]
    %v691 = vld [vmem:[#allocation6 + $0x818] sm:$0xf]
    %v692 = vld [vmem:[#allocation6 + $0x81c] sm:$0xf]
    %v693 = vld [vmem:[#allocation6 + $0x820] sm:$0xf]
    %v694 = vld [vmem:[#allocation6 + $0x824] sm:$0xf]
    %v695 = vld [vmem:[#allocation6 + $0x828] sm:$0xf]
    %v696 = vld [vmem:[#allocation6 + $0x82c] sm:$0xf]
    %v697 = vld [vmem:[#allocation6 + $0x830] sm:$0xf]
    %v698 = vld [vmem:[#allocation6 + $0x834] sm:$0xf]
    %v699 = vld [vmem:[#allocation6 + $0x838] sm:$0xf]
    %v700 = vld [vmem:[#allocation6 + $0x83c] sm:$0xf]
    %v701 = vld [vmem:[#allocation6 + $0x840] sm:$0xf]
    %v702 = vld [vmem:[#allocation6 + $0x844] sm:$0xf]
    %v703 = vld [vmem:[#allocation6 + $0x848] sm:$0xf]
    %v704 = vld [vmem:[#allocation6 + $0x84c] sm:$0xf]
    %v705 = vld [vmem:[#allocation6 + $0x850] sm:$0xf]
    %v706 = vld [vmem:[#allocation6 + $0x854] sm:$0xf]
    %v707 = vld [vmem:[#allocation6 + $0x858] sm:$0xf]
    %v708 = vld [vmem:[#allocation6 + $0x85c] sm:$0xf]
    %v709 = vld [vmem:[#allocation6 + $0x860] sm:$0xf]
    %v710 = vld [vmem:[#allocation6 + $0x864] sm:$0xf]
    %v711 = vld [vmem:[#allocation6 + $0x868] sm:$0xf]
    %v712 = vld [vmem:[#allocation6 + $0x86c] sm:$0xf]
    %v713 = vld [vmem:[#allocation6 + $0x870] sm:$0xf]
    %v714 = vld [vmem:[#allocation6 + $0x874] sm:$0xf]
    %v715 = vld [vmem:[#allocation6 + $0x878] sm:$0xf]
    %v716 = vld [vmem:[#allocation6 + $0x87c] sm:$0xf]
    %v717 = vld [vmem:[#allocation6 + $0x880] sm:$0xf]
    %v718 = vld [vmem:[#allocation6 + $0x884] sm:$0xf]
    %v719 = vld [vmem:[#allocation6 + $0x888] sm:$0xf]
    %v720 = vld [vmem:[#allocation6 + $0x88c] sm:$0xf]
    %v721 = vld [vmem:[#allocation6 + $0x890] sm:$0xf]
    %v722 = vld [vmem:[#allocation6 + $0x894] sm:$0xf]
    %v723 = vld [vmem:[#allocation6 + $0x898] sm:$0xf]
    %v724 = vld [vmem:[#allocation6 + $0x89c] sm:$0xf]
    %v725 = vld [vmem:[#allocation6 + $0x8a0] sm:$0xf]
    %v726 = vld [vmem:[#allocation6 + $0x8a4] sm:$0xf]
    %v727 = vld [vmem:[#allocation6 + $0x8a8] sm:$0xf]
    %v728 = vld [vmem:[#allocation6 + $0x8ac] sm:$0xf]
    %v729 = vld [vmem:[#allocation6 + $0x8b0] sm:$0xf]
    %v730 = vld [vmem:[#allocation6 + $0x8b4] sm:$0xf]
    %v731 = vld [vmem:[#allocation6 + $0x8b8] sm:$0xf]
    %v732 = vld [vmem:[#allocation6 + $0x8bc] sm:$0xf]
    %v733 = vld [vmem:[#allocation6 + $0x8c0] sm:$0xf]
    %v734 = vld [vmem:[#allocation6 + $0x8c4] sm:$0xf]
    %v735 = vld [vmem:[#allocation6 + $0x8c8] sm:$0xf]
    %v736 = vld [vmem:[#allocation6 + $0x8cc] sm:$0xf]
    %v737 = vld [vmem:[#allocation6 + $0x8d0] sm:$0xf]
    %v738 = vld [vmem:[#allocation6 + $0x8d4] sm:$0xf]
    %v739 = vld [vmem:[#allocation6 + $0x8d8] sm:$0xf]
    %v740 = vld [vmem:[#allocation6 + $0x8dc] sm:$0xf]
    %v741 = vld [vmem:[#allocation6 + $0x8e0] sm:$0xf]
    %v742 = vld [vmem:[#allocation6 + $0x8e4] sm:$0xf]
    %v743 = vld [vmem:[#allocation6 + $0x8e8] sm:$0xf]
    %v744 = vld [vmem:[#allocation6 + $0x8ec] sm:$0xf]
    %v745 = vld [vmem:[#allocation6 + $0x8f0] sm:$0xf]
    %v746 = vld [vmem:[#allocation6 + $0x8f4] sm:$0xf]
    %v747 = vld [vmem:[#allocation6 + $0x8f8] sm:$0xf]
    %v748 = vld [vmem:[#allocation6 + $0x8fc] sm:$0xf]
    %v749 = vld [vmem:[#allocation6 + $0x900] sm:$0xf]
    %v750 = vld [vmem:[#allocation6 + $0x904] sm:$0xf]
    %v751 = vld [vmem:[#allocation6 + $0x908] sm:$0xf]
    %v752 = vld [vmem:[#allocation6 + $0x90c] sm:$0xf]
    %v753 = vld [vmem:[#allocation6 + $0x910] sm:$0xf]
    %v754 = vld [vmem:[#allocation6 + $0x914] sm:$0xf]
    %v755 = vld [vmem:[#allocation6 + $0x918] sm:$0xf]
    %v756 = vld [vmem:[#allocation6 + $0x91c] sm:$0xf]
    %v757 = vld [vmem:[#allocation6 + $0x920] sm:$0xf]
    %v758 = vld [vmem:[#allocation6 + $0x924] sm:$0xf]
    %v759 = vld [vmem:[#allocation6 + $0x928] sm:$0xf]
    %v760 = vld [vmem:[#allocation6 + $0x92c] sm:$0xf]
    %v761 = vld [vmem:[#allocation6 + $0x930] sm:$0xf]
    %v762 = vld [vmem:[#allocation6 + $0x934] sm:$0xf]
    %v763 = vld [vmem:[#allocation6 + $0x938] sm:$0xf]
    %v764 = vld [vmem:[#allocation6 + $0x93c] sm:$0xf]
    %v765 = vld [vmem:[#allocation6 + $0x940] sm:$0xf]
    %v766 = vld [vmem:[#allocation6 + $0x944] sm:$0xf]
    %v767 = vld [vmem:[#allocation6 + $0x948] sm:$0xf]
    %v768 = vld [vmem:[#allocation6 + $0x94c] sm:$0xf]
    %v769 = vld [vmem:[#allocation6 + $0x950] sm:$0xf]
    %v770 = vld [vmem:[#allocation6 + $0x954] sm:$0xf]
    %v771 = vld [vmem:[#allocation6 + $0x958] sm:$0xf]
    %v772 = vld [vmem:[#allocation6 + $0x95c] sm:$0xf]
    %v773 = vld [vmem:[#allocation6 + $0x960] sm:$0xf]
    %v774 = vld [vmem:[#allocation6 + $0x964] sm:$0xf]
    %v775 = vld [vmem:[#allocation6 + $0x968] sm:$0xf]
    %v776 = vld [vmem:[#allocation6 + $0x96c] sm:$0xf]
    %v777 = vld [vmem:[#allocation6 + $0x970] sm:$0xf]
    %v778 = vld [vmem:[#allocation6 + $0x974] sm:$0xf]
    %v779 = vld [vmem:[#allocation6 + $0x978] sm:$0xf]
    %v780 = vld [vmem:[#allocation6 + $0x97c] sm:$0xf]
    %v781 = vld [vmem:[#allocation6 + $0x980] sm:$0xf]
    %v782 = vld [vmem:[#allocation6 + $0x984] sm:$0xf]
    %v783 = vld [vmem:[#allocation6 + $0x988] sm:$0xf]
    %v784 = vld [vmem:[#allocation6 + $0x98c] sm:$0xf]
    %v785 = vld [vmem:[#allocation6 + $0x990] sm:$0xf]
    %v786 = vld [vmem:[#allocation6 + $0x994] sm:$0xf]
    %v787 = vld [vmem:[#allocation6 + $0x998] sm:$0xf]
    %v788 = vld [vmem:[#allocation6 + $0x99c] sm:$0xf]
    %v789 = vld [vmem:[#allocation6 + $0x9a0] sm:$0xf]
    %v790 = vld [vmem:[#allocation6 + $0x9a4] sm:$0xf]
    %v791 = vld [vmem:[#allocation6 + $0x9a8] sm:$0xf]
    %v792 = vld [vmem:[#allocation6 + $0x9ac] sm:$0xf]
    %v793 = vld [vmem:[#allocation6 + $0x9b0] sm:$0xf]
    %v794 = vld [vmem:[#allocation6 + $0x9b4] sm:$0xf]
    %v795 = vld [vmem:[#allocation6 + $0x9b8] sm:$0xf]
    %v796 = vld [vmem:[#allocation6 + $0x9bc] sm:$0xf]
    %v797 = vld [vmem:[#allocation6 + $0x9c0] sm:$0xf]
    %v798 = vld [vmem:[#allocation6 + $0x9c4] sm:$0xf]
    %v799 = vld [vmem:[#allocation6 + $0x9c8] sm:$0xf]
    %v800 = vld [vmem:[#allocation6 + $0x9cc] sm:$0xf]
    %v801 = vld [vmem:[#allocation6 + $0x9d0] sm:$0xf]
    %v802 = vld [vmem:[#allocation6 + $0x9d4] sm:$0xf]
    %v803 = vld [vmem:[#allocation6 + $0x9d8] sm:$0xf]
    %v804 = vld [vmem:[#allocation6 + $0x9dc] sm:$0xf]
    %v805 = vld [vmem:[#allocation6 + $0x9e0] sm:$0xf]
    %v806 = vld [vmem:[#allocation6 + $0x9e4] sm:$0xf]
    %v807 = vld [vmem:[#allocation6 + $0x9e8] sm:$0xf]
    %v808 = vld [vmem:[#allocation6 + $0x9ec] sm:$0xf]
    %v809 = vld [vmem:[#allocation6 + $0x9f0] sm:$0xf]
    %v810 = vld [vmem:[#allocation6 + $0x9f4] sm:$0xf]
    %v811 = vld [vmem:[#allocation6 + $0x9f8] sm:$0xf]
    %v812 = vld [vmem:[#allocation6 + $0x9fc] sm:$0xf]
    %v813 = vld [vmem:[#allocation6 + $0xa00] sm:$0xf]
    %v814 = vld [vmem:[#allocation6 + $0xa04] sm:$0xf]
    %v815 = vld [vmem:[#allocation6 + $0xa08] sm:$0xf]
    %v816 = vld [vmem:[#allocation6 + $0xa0c] sm:$0xf]
    %v817 = vld [vmem:[#allocation6 + $0xa10] sm:$0xf]
    %v818 = vld [vmem:[#allocation6 + $0xa14] sm:$0xf]
    %v819 = vld [vmem:[#allocation6 + $0xa18] sm:$0xf]
    %v820 = vld [vmem:[#allocation6 + $0xa1c] sm:$0xf]
    %v821 = vld [vmem:[#allocation6 + $0xa20] sm:$0xf]
    %v822 = vld [vmem:[#allocation6 + $0xa24] sm:$0xf]
    %v823 = vld [vmem:[#allocation6 + $0xa28] sm:$0xf]
    %v824 = vld [vmem:[#allocation6 + $0xa2c] sm:$0xf]
    %v825 = vld [vmem:[#allocation6 + $0xa30] sm:$0xf]
    %v826 = vld [vmem:[#allocation6 + $0xa34] sm:$0xf]
    %v827 = vld [vmem:[#allocation6 + $0xa38] sm:$0xf]
    %v828 = vld [vmem:[#allocation6 + $0xa3c] sm:$0xf]
    %v829 = vld [vmem:[#allocation6 + $0xa40] sm:$0xf]
    %v830 = vld [vmem:[#allocation6 + $0xa44] sm:$0xf]
    %v831 = vld [vmem:[#allocation6 + $0xa48] sm:$0xf]
    %v832 = vld [vmem:[#allocation6 + $0xa4c] sm:$0xf]
    %v833 = vld [vmem:[#allocation6 + $0xa50] sm:$0xf]
    %v834 = vld [vmem:[#allocation6 + $0xa54] sm:$0xf]
    %v835 = vld [vmem:[#allocation6 + $0xa58] sm:$0xf]
    %v836 = vld [vmem:[#allocation6 + $0xa5c] sm:$0xf]
    %v837 = vld [vmem:[#allocation6 + $0xa60] sm:$0xf]
    %v838 = vld [vmem:[#allocation6 + $0xa64] sm:$0xf]
    %v839 = vld [vmem:[#allocation6 + $0xa68] sm:$0xf]
    %v840 = vld [vmem:[#allocation6 + $0xa6c] sm:$0xf]
    %v841 = vld [vmem:[#allocation6 + $0xa70] sm:$0xf]
    %v842 = vld [vmem:[#allocation6 + $0xa74] sm:$0xf]
    %v843 = vld [vmem:[#allocation6 + $0xa78] sm:$0xf]
    %v844 = vld [vmem:[#allocation6 + $0xa7c] sm:$0xf]
    %v845 = vld [vmem:[#allocation6 + $0xa80] sm:$0xf]
    %v846 = vld [vmem:[#allocation6 + $0xa84] sm:$0xf]
    %v847 = vld [vmem:[#allocation6 + $0xa88] sm:$0xf]
    %v848 = vld [vmem:[#allocation6 + $0xa8c] sm:$0xf]
    %v849 = vld [vmem:[#allocation6 + $0xa90] sm:$0xf]
    %v850 = vld [vmem:[#allocation6 + $0xa94] sm:$0xf]
    %v851 = vld [vmem:[#allocation6 + $0xa98] sm:$0xf]
    %v852 = vld [vmem:[#allocation6 + $0xa9c] sm:$0xf]
    %v853 = vld [vmem:[#allocation6 + $0xaa0] sm:$0xf]
    %v854 = vld [vmem:[#allocation6 + $0xaa4] sm:$0xf]
    %v855 = vld [vmem:[#allocation6 + $0xaa8] sm:$0xf]
    %v856 = vld [vmem:[#allocation6 + $0xaac] sm:$0xf]
    %v857 = vld [vmem:[#allocation6 + $0xab0] sm:$0xf]
    %v858 = vld [vmem:[#allocation6 + $0xab4] sm:$0xf]
    %v859 = vld [vmem:[#allocation6 + $0xab8] sm:$0xf]
    %v860 = vld [vmem:[#allocation6 + $0xabc] sm:$0xf]
    %v861 = vld [vmem:[#allocation6 + $0xac0] sm:$0xf]
    %v862 = vld [vmem:[#allocation6 + $0xac4] sm:$0xf]
    %v863 = vld [vmem:[#allocation6 + $0xac8] sm:$0xf]
    %v864 = vld [vmem:[#allocation6 + $0xacc] sm:$0xf]
    %v865 = vld [vmem:[#allocation6 + $0xad0] sm:$0xf]
    %v866 = vld [vmem:[#allocation6 + $0xad4] sm:$0xf]
    %v867 = vld [vmem:[#allocation6 + $0xad8] sm:$0xf]
    %v868 = vld [vmem:[#allocation6 + $0xadc] sm:$0xf]
    %v869 = vld [vmem:[#allocation6 + $0xae0] sm:$0xf]
    %v870 = vld [vmem:[#allocation6 + $0xae4] sm:$0xf]
    %v871 = vld [vmem:[#allocation6 + $0xae8] sm:$0xf]
    %v872 = vld [vmem:[#allocation6 + $0xaec] sm:$0xf]
    %v873 = vld [vmem:[#allocation6 + $0xaf0] sm:$0xf]
    %v874 = vld [vmem:[#allocation6 + $0xaf4] sm:$0xf]
    %v875 = vld [vmem:[#allocation6 + $0xaf8] sm:$0xf]
    %v876 = vld [vmem:[#allocation6 + $0xafc] sm:$0xf]
    %v877 = vld [vmem:[#allocation6 + $0xb00] sm:$0xf]
    %v878 = vld [vmem:[#allocation6 + $0xb04] sm:$0xf]
    %v879 = vld [vmem:[#allocation6 + $0xb08] sm:$0xf]
    %v880 = vld [vmem:[#allocation6 + $0xb0c] sm:$0xf]
    %v881 = vld [vmem:[#allocation6 + $0xb10] sm:$0xf]
    %v882 = vld [vmem:[#allocation6 + $0xb14] sm:$0xf]
    %v883 = vld [vmem:[#allocation6 + $0xb18] sm:$0xf]
    %v884 = vld [vmem:[#allocation6 + $0xb1c] sm:$0xf]
    %v885 = vld [vmem:[#allocation6 + $0xb20] sm:$0xf]
    %v886 = vld [vmem:[#allocation6 + $0xb24] sm:$0xf]
    %v887 = vld [vmem:[#allocation6 + $0xb28] sm:$0xf]
    %v888 = vld [vmem:[#allocation6 + $0xb2c] sm:$0xf]
    %v889 = vld [vmem:[#allocation6 + $0xb30] sm:$0xf]
    %v890 = vld [vmem:[#allocation6 + $0xb34] sm:$0xf]
    %v891 = vld [vmem:[#allocation6 + $0xb38] sm:$0xf]
    %v892 = vld [vmem:[#allocation6 + $0xb3c] sm:$0xf]
    %v893 = vld [vmem:[#allocation6 + $0xb40] sm:$0xf]
    %v894 = vld [vmem:[#allocation6 + $0xb44] sm:$0xf]
    %v895 = vld [vmem:[#allocation6 + $0xb48] sm:$0xf]
    %v896 = vld [vmem:[#allocation6 + $0xb4c] sm:$0xf]
    %v897 = vld [vmem:[#allocation6 + $0xb50] sm:$0xf]
    %v898 = vld [vmem:[#allocation6 + $0xb54] sm:$0xf]
    %v899 = vld [vmem:[#allocation6 + $0xb58] sm:$0xf]
    %v900 = vld [vmem:[#allocation6 + $0xb5c] sm:$0xf]
    %v901 = vld [vmem:[#allocation6 + $0xb60] sm:$0xf]
    %v902 = vld [vmem:[#allocation6 + $0xb64] sm:$0xf]
    %v903 = vld [vmem:[#allocation6 + $0xb68] sm:$0xf]
    %v904 = vld [vmem:[#allocation6 + $0xb6c] sm:$0xf]
    %v905 = vld [vmem:[#allocation6 + $0xb70] sm:$0xf]
    %v906 = vld [vmem:[#allocation6 + $0xb74] sm:$0xf]
    %v907 = vld [vmem:[#allocation6 + $0xb78] sm:$0xf]
    %v908 = vld [vmem:[#allocation6 + $0xb7c] sm:$0xf]
    %v909 = vld [vmem:[#allocation6 + $0xb80] sm:$0xf]
    %v910 = vld [vmem:[#allocation6 + $0xb84] sm:$0xf]
    %v911 = vld [vmem:[#allocation6 + $0xb88] sm:$0xf]
    %v912 = vld [vmem:[#allocation6 + $0xb8c] sm:$0xf]
    %v913 = vld [vmem:[#allocation6 + $0xb90] sm:$0xf]
    %v914 = vld [vmem:[#allocation6 + $0xb94] sm:$0xf]
    %v915 = vld [vmem:[#allocation6 + $0xb98] sm:$0xf]
    %v916 = vld [vmem:[#allocation6 + $0xb9c] sm:$0xf]
    %v917 = vld [vmem:[#allocation6 + $0xba0] sm:$0xf]
    %v918 = vld [vmem:[#allocation6 + $0xba4] sm:$0xf]
    %v919 = vld [vmem:[#allocation6 + $0xba8] sm:$0xf]
    %v920 = vld [vmem:[#allocation6 + $0xbac] sm:$0xf]
    %v921 = vld [vmem:[#allocation6 + $0xbb0] sm:$0xf]
    %v922 = vld [vmem:[#allocation6 + $0xbb4] sm:$0xf]
    %v923 = vld [vmem:[#allocation6 + $0xbb8] sm:$0xf]
    %v924 = vld [vmem:[#allocation6 + $0xbbc] sm:$0xf]
    %v925 = vld [vmem:[#allocation6 + $0xbc0] sm:$0xf]
    %v926 = vld [vmem:[#allocation6 + $0xbc4] sm:$0xf]
    %v927 = vld [vmem:[#allocation6 + $0xbc8] sm:$0xf]
    %v928 = vld [vmem:[#allocation6 + $0xbcc] sm:$0xf]
    %v929 = vld [vmem:[#allocation6 + $0xbd0] sm:$0xf]
    %v930 = vld [vmem:[#allocation6 + $0xbd4] sm:$0xf]
    %v931 = vld [vmem:[#allocation6 + $0xbd8] sm:$0xf]
    %v932 = vld [vmem:[#allocation6 + $0xbdc] sm:$0xf]
    %v933 = vld [vmem:[#allocation6 + $0xbe0] sm:$0xf]
    %v934 = vld [vmem:[#allocation6 + $0xbe4] sm:$0xf]
    %v935 = vld [vmem:[#allocation6 + $0xbe8] sm:$0xf]
    %v936 = vld [vmem:[#allocation6 + $0xbec] sm:$0xf]
    %v937 = vld [vmem:[#allocation6 + $0xbf0] sm:$0xf]
    %v938 = vld [vmem:[#allocation6 + $0xbf4] sm:$0xf]
    %v939 = vld [vmem:[#allocation6 + $0xbf8] sm:$0xf]
    %v940 = vld [vmem:[#allocation6 + $0xbfc] sm:$0xf]
    %v989 = vunpack.c.l.b16 %v125
    %v990 = vunpack.c.h.b16 %v125
    %v991 = vunpack.c.l.b16 %v126
    %v992 = vunpack.c.h.b16 %v126
    %v993 = vunpack.c.l.b16 %v127
    %v994 = vunpack.c.h.b16 %v127
    %v995 = vunpack.c.l.b16 %v128
    %v996 = vunpack.c.h.b16 %v128
    %v997 = vunpack.c.l.b16 %v129
    %v998 = vunpack.c.h.b16 %v129
    %v999 = vunpack.c.l.b16 %v130
    %v1000 = vunpack.c.h.b16 %v130
    %v1001 = vunpack.c.l.b16 %v131
    %v1002 = vunpack.c.h.b16 %v131
    %v1003 = vunpack.c.l.b16 %v132
    %v1004 = vunpack.c.h.b16 %v132
    %v1005 = vunpack.c.l.b16 %v133
    %v1006 = vunpack.c.h.b16 %v133
    %v1007 = vunpack.c.l.b16 %v134
    %v1008 = vunpack.c.h.b16 %v134
    %v1009 = vunpack.c.l.b16 %v135
    %v1010 = vunpack.c.h.b16 %v135
    %v1011 = vunpack.c.l.b16 %v136
    %v1012 = vunpack.c.h.b16 %v136
    %v1013 = vunpack.c.l.b16 %v137
    %v1014 = vunpack.c.h.b16 %v137
    %v1015 = vunpack.c.l.b16 %v138
    %v1016 = vunpack.c.h.b16 %v138
    %v1017 = vunpack.c.l.b16 %v139
    %v1018 = vunpack.c.h.b16 %v139
    %v1019 = vunpack.c.l.b16 %v140
    %v1020 = vunpack.c.h.b16 %v140
    %v1021 = vunpack.c.l.b16 %v141
    %v1022 = vunpack.c.h.b16 %v141
    %v1023 = vunpack.c.l.b16 %v142
    %v1024 = vunpack.c.h.b16 %v142
    %v1025 = vunpack.c.l.b16 %v143
    %v1026 = vunpack.c.h.b16 %v143
    %v1027 = vunpack.c.l.b16 %v144
    %v1028 = vunpack.c.h.b16 %v144
    %v1029 = vunpack.c.l.b16 %v145
    %v1030 = vunpack.c.h.b16 %v145
    %v1031 = vunpack.c.l.b16 %v146
    %v1032 = vunpack.c.h.b16 %v146
    %v1033 = vunpack.c.l.b16 %v147
    %v1034 = vunpack.c.h.b16 %v147
    %v1035 = vunpack.c.l.b16 %v148
    %v1036 = vunpack.c.h.b16 %v148
    %v1037 = vunpack.c.l.b16 %v149
    %v1038 = vunpack.c.h.b16 %v149
    %v1039 = vunpack.c.l.b16 %v150
    %v1040 = vunpack.c.h.b16 %v150
    %v1041 = vunpack.c.l.b16 %v151
    %v1042 = vunpack.c.h.b16 %v151
    %v1043 = vunpack.c.l.b16 %v152
    %v1044 = vunpack.c.h.b16 %v152
    %v1045 = vunpack.c.l.b16 %v153
    %v1046 = vunpack.c.h.b16 %v153
    %v1047 = vunpack.c.l.b16 %v154
    %v1048 = vunpack.c.h.b16 %v154
    %v1049 = vunpack.c.l.b16 %v155
    %v1050 = vunpack.c.h.b16 %v155
    %v1051 = vunpack.c.l.b16 %v156
    %v1052 = vunpack.c.h.b16 %v156
    %v1053 = vunpack.c.l.b16 %v157
    %v1054 = vunpack.c.h.b16 %v157
    %v1055 = vunpack.c.l.b16 %v158
    %v1056 = vunpack.c.h.b16 %v158
    %v1057 = vunpack.c.l.b16 %v159
    %v1058 = vunpack.c.h.b16 %v159
    %v1059 = vunpack.c.l.b16 %v160
    %v1060 = vunpack.c.h.b16 %v160
    %v1061 = vunpack.c.l.b16 %v161
    %v1062 = vunpack.c.h.b16 %v161
    %v1063 = vunpack.c.l.b16 %v162
    %v1064 = vunpack.c.h.b16 %v162
    %v1065 = vunpack.c.l.b16 %v163
    %v1066 = vunpack.c.h.b16 %v163
    %v1067 = vunpack.c.l.b16 %v164
    %v1068 = vunpack.c.h.b16 %v164
    %v1069 = vunpack.c.l.b16 %v165
    %v1070 = vunpack.c.h.b16 %v165
    %v1071 = vunpack.c.l.b16 %v166
    %v1072 = vunpack.c.h.b16 %v166
    %v1073 = vunpack.c.l.b16 %v167
    %v1074 = vunpack.c.h.b16 %v167
    %v1075 = vunpack.c.l.b16 %v168
    %v1076 = vunpack.c.h.b16 %v168
    %v1077 = vunpack.c.l.b16 %v169
    %v1078 = vunpack.c.h.b16 %v169
    %v1079 = vunpack.c.l.b16 %v170
    %v1080 = vunpack.c.h.b16 %v170
    %v1081 = vunpack.c.l.b16 %v171
    %v1082 = vunpack.c.h.b16 %v171
    %v1083 = vunpack.c.l.b16 %v172
    %v1084 = vunpack.c.h.b16 %v172
    %v1085 = vpack.c.b16 %v1037, %v989
    %v1086 = vpack.c.b16 %v1038, %v990
    %v1087 = vpack.c.b16 %v1039, %v991
    %v1088 = vpack.c.b16 %v1040, %v992
    %v1089 = vpack.c.b16 %v1041, %v993
    %v1090 = vpack.c.b16 %v1042, %v994
    %v1091 = vpack.c.b16 %v1043, %v995
    %v1092 = vpack.c.b16 %v1044, %v996
    %v1093 = vpack.c.b16 %v1045, %v997
    %v1094 = vpack.c.b16 %v1046, %v998
    %v1095 = vpack.c.b16 %v1047, %v999
    %v1096 = vpack.c.b16 %v1048, %v1000
    %v1097 = vpack.c.b16 %v1049, %v1001
    %v1098 = vpack.c.b16 %v1050, %v1002
    %v1099 = vpack.c.b16 %v1051, %v1003
    %v1100 = vpack.c.b16 %v1052, %v1004
    %v1101 = vpack.c.b16 %v1053, %v1005
    %v1102 = vpack.c.b16 %v1054, %v1006
    %v1103 = vpack.c.b16 %v1055, %v1007
    %v1104 = vpack.c.b16 %v1056, %v1008
    %v1105 = vpack.c.b16 %v1057, %v1009
    %v1106 = vpack.c.b16 %v1058, %v1010
    %v1107 = vpack.c.b16 %v1059, %v1011
    %v1108 = vpack.c.b16 %v1060, %v1012
    %v1109 = vpack.c.b16 %v1061, %v1013
    %v1110 = vpack.c.b16 %v1062, %v1014
    %v1111 = vpack.c.b16 %v1063, %v1015
    %v1112 = vpack.c.b16 %v1064, %v1016
    %v1113 = vpack.c.b16 %v1065, %v1017
    %v1114 = vpack.c.b16 %v1066, %v1018
    %v1115 = vpack.c.b16 %v1067, %v1019
    %v1116 = vpack.c.b16 %v1068, %v1020
    %v1117 = vpack.c.b16 %v1069, %v1021
    %v1118 = vpack.c.b16 %v1070, %v1022
    %v1119 = vpack.c.b16 %v1071, %v1023
    %v1120 = vpack.c.b16 %v1072, %v1024
    %v1121 = vpack.c.b16 %v1073, %v1025
    %v1122 = vpack.c.b16 %v1074, %v1026
    %v1123 = vpack.c.b16 %v1075, %v1027
    %v1124 = vpack.c.b16 %v1076, %v1028
    %v1125 = vpack.c.b16 %v1077, %v1029
    %v1126 = vpack.c.b16 %v1078, %v1030
    %v1127 = vpack.c.b16 %v1079, %v1031
    %v1128 = vpack.c.b16 %v1080, %v1032
    %v1129 = vpack.c.b16 %v1081, %v1033
    %v1130 = vpack.c.b16 %v1082, %v1034
    %v1131 = vpack.c.b16 %v1083, %v1035
    %v1132 = vpack.c.b16 %v1084, %v1036
    %v1949 = vunpack.c.l.b16 %v173
    %v1950 = vunpack.c.l.b16 %v174
    %v1951 = vunpack.c.l.b16 %v175
    %v1952 = vunpack.c.l.b16 %v176
    %v1953 = vunpack.c.l.b16 %v177
    %v1954 = vunpack.c.l.b16 %v178
    %v1955 = vunpack.c.l.b16 %v179
    %v1956 = vunpack.c.l.b16 %v180
    %v1957 = vunpack.c.l.b16 %v181
    %v1958 = vunpack.c.l.b16 %v182
    %v1959 = vunpack.c.l.b16 %v183
    %v1960 = vunpack.c.l.b16 %v184
    %v1961 = vunpack.c.l.b16 %v185
    %v1962 = vunpack.c.l.b16 %v186
    %v1963 = vunpack.c.l.b16 %v187
    %v1964 = vunpack.c.l.b16 %v188
    %v1965 = vunpack.c.l.b16 %v189
    %v1966 = vunpack.c.l.b16 %v190
    %v1967 = vunpack.c.l.b16 %v191
    %v1968 = vunpack.c.l.b16 %v192
    %v1969 = vunpack.c.l.b16 %v193
    %v1970 = vunpack.c.l.b16 %v194
    %v1971 = vunpack.c.l.b16 %v195
    %v1972 = vunpack.c.l.b16 %v196
    %v1973 = vunpack.c.l.b16 %v197
    %v1974 = vunpack.c.l.b16 %v198
    %v1975 = vunpack.c.l.b16 %v199
    %v1976 = vunpack.c.l.b16 %v200
    %v1977 = vunpack.c.l.b16 %v201
    %v1978 = vunpack.c.l.b16 %v202
    %v1979 = vunpack.c.l.b16 %v203
    %v1980 = vunpack.c.l.b16 %v204
    %v1981 = vunpack.c.l.b16 %v205
    %v1982 = vunpack.c.l.b16 %v206
    %v1983 = vunpack.c.l.b16 %v207
    %v1984 = vunpack.c.l.b16 %v208
    %v1985 = vunpack.c.l.b16 %v209
    %v1986 = vunpack.c.l.b16 %v210
    %v1987 = vunpack.c.l.b16 %v211
    %v1988 = vunpack.c.l.b16 %v212
    %v1989 = vunpack.c.l.b16 %v213
    %v1990 = vunpack.c.l.b16 %v214
    %v1991 = vunpack.c.l.b16 %v215
    %v1992 = vunpack.c.l.b16 %v216
    %v1993 = vunpack.c.l.b16 %v217
    %v1994 = vunpack.c.l.b16 %v218
    %v1995 = vunpack.c.l.b16 %v219
    %v1996 = vunpack.c.l.b16 %v220
    %v1997 = vunpack.c.l.b16 %v221
    %v1998 = vunpack.c.l.b16 %v222
    %v1999 = vunpack.c.l.b16 %v223
    %v2000 = vunpack.c.l.b16 %v224
    %v2001 = vunpack.c.l.b16 %v225
    %v2002 = vunpack.c.l.b16 %v226
    %v2003 = vunpack.c.l.b16 %v227
    %v2004 = vunpack.c.l.b16 %v228
    %v2005 = vunpack.c.l.b16 %v229
    %v2006 = vunpack.c.l.b16 %v230
    %v2007 = vunpack.c.l.b16 %v231
    %v2008 = vunpack.c.l.b16 %v232
    %v2009 = vunpack.c.l.b16 %v233
    %v2010 = vunpack.c.l.b16 %v234
    %v2011 = vunpack.c.l.b16 %v235
    %v2012 = vunpack.c.l.b16 %v236
    %v2013 = vunpack.c.l.b16 %v237
    %v2014 = vunpack.c.l.b16 %v238
    %v2015 = vunpack.c.l.b16 %v239
    %v2016 = vunpack.c.l.b16 %v240
    %v2017 = vunpack.c.l.b16 %v241
    %v2018 = vunpack.c.l.b16 %v242
    %v2019 = vunpack.c.l.b16 %v243
    %v2020 = vunpack.c.l.b16 %v244
    %v2021 = vunpack.c.l.b16 %v245
    %v2022 = vunpack.c.l.b16 %v246
    %v2023 = vunpack.c.l.b16 %v247
    %v2024 = vunpack.c.l.b16 %v248
    %v2025 = vunpack.c.l.b16 %v249
    %v2026 = vunpack.c.l.b16 %v250
    %v2027 = vunpack.c.l.b16 %v251
    %v2028 = vunpack.c.l.b16 %v252
    %v2029 = vunpack.c.l.b16 %v253
    %v2030 = vunpack.c.l.b16 %v254
    %v2031 = vunpack.c.l.b16 %v255
    %v2032 = vunpack.c.l.b16 %v256
    %v2033 = vunpack.c.l.b16 %v257
    %v2034 = vunpack.c.l.b16 %v258
    %v2035 = vunpack.c.l.b16 %v259
    %v2036 = vunpack.c.l.b16 %v260
    %v2037 = vunpack.c.l.b16 %v261
    %v2038 = vunpack.c.l.b16 %v262
    %v2039 = vunpack.c.l.b16 %v263
    %v2040 = vunpack.c.l.b16 %v264
    %v2041 = vunpack.c.l.b16 %v265
    %v2042 = vunpack.c.l.b16 %v266
    %v2043 = vunpack.c.l.b16 %v267
    %v2044 = vunpack.c.l.b16 %v268
    %v2045 = vunpack.c.l.b16 %v269
    %v2046 = vunpack.c.l.b16 %v270
    %v2047 = vunpack.c.l.b16 %v271
    %v2048 = vunpack.c.l.b16 %v272
    %v2049 = vunpack.c.l.b16 %v273
    %v2050 = vunpack.c.l.b16 %v274
    %v2051 = vunpack.c.l.b16 %v275
    %v2052 = vunpack.c.l.b16 %v276
    %v2053 = vunpack.c.l.b16 %v277
    %v2054 = vunpack.c.l.b16 %v278
    %v2055 = vunpack.c.l.b16 %v279
    %v2056 = vunpack.c.l.b16 %v280
    %v2057 = vunpack.c.l.b16 %v281
    %v2058 = vunpack.c.l.b16 %v282
    %v2059 = vunpack.c.l.b16 %v283
    %v2060 = vunpack.c.l.b16 %v284
    %v2061 = vunpack.c.l.b16 %v285
    %v2062 = vunpack.c.l.b16 %v286
    %v2063 = vunpack.c.l.b16 %v287
    %v2064 = vunpack.c.l.b16 %v288
    %v2065 = vunpack.c.l.b16 %v289
    %v2066 = vunpack.c.l.b16 %v290
    %v2067 = vunpack.c.l.b16 %v291
    %v2068 = vunpack.c.l.b16 %v292
    %v2069 = vunpack.c.l.b16 %v293
    %v2070 = vunpack.c.l.b16 %v294
    %v2071 = vunpack.c.l.b16 %v295
    %v2072 = vunpack.c.l.b16 %v296
    %v2073 = vunpack.c.l.b16 %v297
    %v2074 = vunpack.c.l.b16 %v298
    %v2075 = vunpack.c.l.b16 %v299
    %v2076 = vunpack.c.l.b16 %v300
    %v2077 = vunpack.c.l.b16 %v301
    %v2078 = vunpack.c.l.b16 %v302
    %v2079 = vunpack.c.l.b16 %v303
    %v2080 = vunpack.c.l.b16 %v304
    %v2081 = vunpack.c.l.b16 %v305
    %v2082 = vunpack.c.l.b16 %v306
    %v2083 = vunpack.c.l.b16 %v307
    %v2084 = vunpack.c.l.b16 %v308
    %v2085 = vunpack.c.l.b16 %v309
    %v2086 = vunpack.c.l.b16 %v310
    %v2087 = vunpack.c.l.b16 %v311
    %v2088 = vunpack.c.l.b16 %v312
    %v2089 = vunpack.c.l.b16 %v313
    %v2090 = vunpack.c.l.b16 %v314
    %v2091 = vunpack.c.l.b16 %v315
    %v2092 = vunpack.c.l.b16 %v316
    %v2093 = vunpack.c.l.b16 %v317
    %v2094 = vunpack.c.l.b16 %v318
    %v2095 = vunpack.c.l.b16 %v319
    %v2096 = vunpack.c.l.b16 %v320
    %v2097 = vunpack.c.l.b16 %v321
    %v2098 = vunpack.c.l.b16 %v322
    %v2099 = vunpack.c.l.b16 %v323
    %v2100 = vunpack.c.l.b16 %v324
    %v2101 = vunpack.c.l.b16 %v325
    %v2102 = vunpack.c.l.b16 %v326
    %v2103 = vunpack.c.l.b16 %v327
    %v2104 = vunpack.c.l.b16 %v328
    %v2105 = vunpack.c.l.b16 %v329
    %v2106 = vunpack.c.l.b16 %v330
    %v2107 = vunpack.c.l.b16 %v331
    %v2108 = vunpack.c.l.b16 %v332
    %v2109 = vunpack.c.l.b16 %v333
    %v2110 = vunpack.c.l.b16 %v334
    %v2111 = vunpack.c.l.b16 %v335
    %v2112 = vunpack.c.l.b16 %v336
    %v2113 = vunpack.c.l.b16 %v337
    %v2114 = vunpack.c.l.b16 %v338
    %v2115 = vunpack.c.l.b16 %v339
    %v2116 = vunpack.c.l.b16 %v340
    %v2117 = vunpack.c.l.b16 %v341
    %v2118 = vunpack.c.l.b16 %v342
    %v2119 = vunpack.c.l.b16 %v343
    %v2120 = vunpack.c.l.b16 %v344
    %v2121 = vunpack.c.l.b16 %v345
    %v2122 = vunpack.c.l.b16 %v346
    %v2123 = vunpack.c.l.b16 %v347
    %v2124 = vunpack.c.l.b16 %v348
    %v2125 = vunpack.c.l.b16 %v349
    %v2126 = vunpack.c.l.b16 %v350
    %v2127 = vunpack.c.l.b16 %v351
    %v2128 = vunpack.c.l.b16 %v352
    %v2129 = vunpack.c.l.b16 %v353
    %v2130 = vunpack.c.l.b16 %v354
    %v2131 = vunpack.c.l.b16 %v355
    %v2132 = vunpack.c.l.b16 %v356
    %v2133 = vunpack.c.l.b16 %v357
    %v2134 = vunpack.c.l.b16 %v358
    %v2135 = vunpack.c.l.b16 %v359
    %v2136 = vunpack.c.l.b16 %v360
    %v2137 = vunpack.c.l.b16 %v361
    %v2138 = vunpack.c.l.b16 %v362
    %v2139 = vunpack.c.l.b16 %v363
    %v2140 = vunpack.c.l.b16 %v364
    %v2141 = vunpack.c.l.b16 %v365
    %v2142 = vunpack.c.l.b16 %v366
    %v2143 = vunpack.c.l.b16 %v367
    %v2144 = vunpack.c.l.b16 %v368
    %v2145 = vunpack.c.l.b16 %v369
    %v2146 = vunpack.c.l.b16 %v370
    %v2147 = vunpack.c.l.b16 %v371
    %v2148 = vunpack.c.l.b16 %v372
    %v2149 = vunpack.c.l.b16 %v373
    %v2150 = vunpack.c.l.b16 %v374
    %v2151 = vunpack.c.l.b16 %v375
    %v2152 = vunpack.c.l.b16 %v376
    %v2153 = vunpack.c.l.b16 %v377
    %v2154 = vunpack.c.l.b16 %v378
    %v2155 = vunpack.c.l.b16 %v379
    %v2156 = vunpack.c.l.b16 %v380
    %v2157 = vunpack.c.l.b16 %v381
    %v2158 = vunpack.c.l.b16 %v382
    %v2159 = vunpack.c.l.b16 %v383
    %v2160 = vunpack.c.l.b16 %v384
    %v2161 = vunpack.c.l.b16 %v385
    %v2162 = vunpack.c.l.b16 %v386
    %v2163 = vunpack.c.l.b16 %v387
    %v2164 = vunpack.c.l.b16 %v388
    %v2165 = vunpack.c.l.b16 %v389
    %v2166 = vunpack.c.l.b16 %v390
    %v2167 = vunpack.c.l.b16 %v391
    %v2168 = vunpack.c.l.b16 %v392
    %v2169 = vunpack.c.l.b16 %v393
    %v2170 = vunpack.c.l.b16 %v394
    %v2171 = vunpack.c.l.b16 %v395
    %v2172 = vunpack.c.l.b16 %v396
    %v2173 = vunpack.c.l.b16 %v397
    %v2174 = vunpack.c.l.b16 %v398
    %v2175 = vunpack.c.l.b16 %v399
    %v2176 = vunpack.c.l.b16 %v400
    %v2177 = vunpack.c.l.b16 %v401
    %v2178 = vunpack.c.l.b16 %v402
    %v2179 = vunpack.c.l.b16 %v403
    %v2180 = vunpack.c.l.b16 %v404
    %v2181 = vunpack.c.l.b16 %v405
    %v2182 = vunpack.c.l.b16 %v406
    %v2183 = vunpack.c.l.b16 %v407
    %v2184 = vunpack.c.l.b16 %v408
    %v2185 = vunpack.c.l.b16 %v409
    %v2186 = vunpack.c.l.b16 %v410
    %v2187 = vunpack.c.l.b16 %v411
    %v2188 = vunpack.c.l.b16 %v412
    %v2189 = vunpack.c.l.b16 %v413
    %v2190 = vunpack.c.l.b16 %v414
    %v2191 = vunpack.c.l.b16 %v415
    %v2192 = vunpack.c.l.b16 %v416
    %v2193 = vunpack.c.l.b16 %v417
    %v2194 = vunpack.c.l.b16 %v418
    %v2195 = vunpack.c.l.b16 %v419
    %v2196 = vunpack.c.l.b16 %v420
    %v2197 = vunpack.c.l.b16 %v421
    %v2198 = vunpack.c.l.b16 %v422
    %v2199 = vunpack.c.l.b16 %v423
    %v2200 = vunpack.c.l.b16 %v424
    %v2201 = vunpack.c.l.b16 %v425
    %v2202 = vunpack.c.l.b16 %v426
    %v2203 = vunpack.c.l.b16 %v427
    %v2204 = vunpack.c.l.b16 %v428
    %v2205 = vunpack.c.l.b16 %v429
    %v2206 = vunpack.c.l.b16 %v430
    %v2207 = vunpack.c.l.b16 %v431
    %v2208 = vunpack.c.l.b16 %v432
    %v2209 = vunpack.c.l.b16 %v433
    %v2210 = vunpack.c.l.b16 %v434
    %v2211 = vunpack.c.l.b16 %v435
    %v2212 = vunpack.c.l.b16 %v436
    %v2213 = vunpack.c.l.b16 %v437
    %v2214 = vunpack.c.l.b16 %v438
    %v2215 = vunpack.c.l.b16 %v439
    %v2216 = vunpack.c.l.b16 %v440
    %v2217 = vunpack.c.l.b16 %v441
    %v2218 = vunpack.c.l.b16 %v442
    %v2219 = vunpack.c.l.b16 %v443
    %v2220 = vunpack.c.l.b16 %v444
    %v2221 = vunpack.c.l.b16 %v445
    %v2222 = vunpack.c.l.b16 %v446
    %v2223 = vunpack.c.l.b16 %v447
    %v2224 = vunpack.c.l.b16 %v448
    %v2225 = vunpack.c.l.b16 %v449
    %v2226 = vunpack.c.l.b16 %v450
    %v2227 = vunpack.c.l.b16 %v451
    %v2228 = vunpack.c.l.b16 %v452
    %v2229 = vunpack.c.l.b16 %v453
    %v2230 = vunpack.c.l.b16 %v454
    %v2231 = vunpack.c.l.b16 %v455
    %v2232 = vunpack.c.l.b16 %v456
    %v2233 = vunpack.c.l.b16 %v457
    %v2234 = vunpack.c.l.b16 %v458
    %v2235 = vunpack.c.l.b16 %v459
    %v2236 = vunpack.c.l.b16 %v460
    %v2237 = vunpack.c.l.b16 %v461
    %v2238 = vunpack.c.l.b16 %v462
    %v2239 = vunpack.c.l.b16 %v463
    %v2240 = vunpack.c.l.b16 %v464
    %v2241 = vunpack.c.l.b16 %v465
    %v2242 = vunpack.c.l.b16 %v466
    %v2243 = vunpack.c.l.b16 %v467
    %v2244 = vunpack.c.l.b16 %v468
    %v2245 = vunpack.c.l.b16 %v469
    %v2246 = vunpack.c.l.b16 %v470
    %v2247 = vunpack.c.l.b16 %v471
    %v2248 = vunpack.c.l.b16 %v472
    %v2249 = vunpack.c.l.b16 %v473
    %v2250 = vunpack.c.l.b16 %v474
    %v2251 = vunpack.c.l.b16 %v475
    %v2252 = vunpack.c.l.b16 %v476
    %v2253 = vunpack.c.l.b16 %v477
    %v2254 = vunpack.c.l.b16 %v478
    %v2255 = vunpack.c.l.b16 %v479
    %v2256 = vunpack.c.l.b16 %v480
    %v2257 = vunpack.c.l.b16 %v481
    %v2258 = vunpack.c.l.b16 %v482
    %v2259 = vunpack.c.l.b16 %v483
    %v2260 = vunpack.c.l.b16 %v484
    %v2261 = vunpack.c.l.b16 %v485
    %v2262 = vunpack.c.l.b16 %v486
    %v2263 = vunpack.c.l.b16 %v487
    %v2264 = vunpack.c.l.b16 %v488
    %v2265 = vunpack.c.l.b16 %v489
    %v2266 = vunpack.c.l.b16 %v490
    %v2267 = vunpack.c.l.b16 %v491
    %v2268 = vunpack.c.l.b16 %v492
    %v2269 = vunpack.c.l.b16 %v493
    %v2270 = vunpack.c.l.b16 %v494
    %v2271 = vunpack.c.l.b16 %v495
    %v2272 = vunpack.c.l.b16 %v496
    %v2273 = vunpack.c.l.b16 %v497
    %v2274 = vunpack.c.l.b16 %v498
    %v2275 = vunpack.c.l.b16 %v499
    %v2276 = vunpack.c.l.b16 %v500
    %v2277 = vunpack.c.l.b16 %v501
    %v2278 = vunpack.c.l.b16 %v502
    %v2279 = vunpack.c.l.b16 %v503
    %v2280 = vunpack.c.l.b16 %v504
    %v2281 = vunpack.c.l.b16 %v505
    %v2282 = vunpack.c.l.b16 %v506
    %v2283 = vunpack.c.l.b16 %v507
    %v2284 = vunpack.c.l.b16 %v508
    %v2285 = vunpack.c.l.b16 %v509
    %v2286 = vunpack.c.l.b16 %v510
    %v2287 = vunpack.c.l.b16 %v511
    %v2288 = vunpack.c.l.b16 %v512
    %v2289 = vunpack.c.l.b16 %v513
    %v2290 = vunpack.c.l.b16 %v514
    %v2291 = vunpack.c.l.b16 %v515
    %v2292 = vunpack.c.l.b16 %v516
    %v2293 = vunpack.c.l.b16 %v517
    %v2294 = vunpack.c.l.b16 %v518
    %v2295 = vunpack.c.l.b16 %v519
    %v2296 = vunpack.c.l.b16 %v520
    %v2297 = vunpack.c.l.b16 %v521
    %v2298 = vunpack.c.l.b16 %v522
    %v2299 = vunpack.c.l.b16 %v523
    %v2300 = vunpack.c.l.b16 %v524
    %v2301 = vunpack.c.l.b16 %v525
    %v2302 = vunpack.c.l.b16 %v526
    %v2303 = vunpack.c.l.b16 %v527
    %v2304 = vunpack.c.l.b16 %v528
    %v2305 = vunpack.c.l.b16 %v529
    %v2306 = vunpack.c.l.b16 %v530
    %v2307 = vunpack.c.l.b16 %v531
    %v2308 = vunpack.c.l.b16 %v532
    %v2309 = vunpack.c.l.b16 %v533
    %v2310 = vunpack.c.l.b16 %v534
    %v2311 = vunpack.c.l.b16 %v535
    %v2312 = vunpack.c.l.b16 %v536
    %v2313 = vunpack.c.l.b16 %v537
    %v2314 = vunpack.c.l.b16 %v538
    %v2315 = vunpack.c.l.b16 %v539
    %v2316 = vunpack.c.l.b16 %v540
    %v2317 = vunpack.c.l.b16 %v541
    %v2318 = vunpack.c.l.b16 %v542
    %v2319 = vunpack.c.l.b16 %v543
    %v2320 = vunpack.c.l.b16 %v544
    %v2321 = vunpack.c.l.b16 %v545
    %v2322 = vunpack.c.l.b16 %v546
    %v2323 = vunpack.c.l.b16 %v547
    %v2324 = vunpack.c.l.b16 %v548
    %v2325 = vunpack.c.l.b16 %v549
    %v2326 = vunpack.c.l.b16 %v550
    %v2327 = vunpack.c.l.b16 %v551
    %v2328 = vunpack.c.l.b16 %v552
    %v2329 = vunpack.c.l.b16 %v553
    %v2330 = vunpack.c.l.b16 %v554
    %v2331 = vunpack.c.l.b16 %v555
    %v2332 = vunpack.c.l.b16 %v556
    %v2333 = vunpack.c.l.b16 %v557
    %v2334 = vunpack.c.l.b16 %v558
    %v2335 = vunpack.c.l.b16 %v559
    %v2336 = vunpack.c.l.b16 %v560
    %v2337 = vunpack.c.l.b16 %v561
    %v2338 = vunpack.c.l.b16 %v562
    %v2339 = vunpack.c.l.b16 %v563
    %v2340 = vunpack.c.l.b16 %v564
    %v2341 = vunpack.c.l.b16 %v565
    %v2342 = vunpack.c.l.b16 %v566
    %v2343 = vunpack.c.l.b16 %v567
    %v2344 = vunpack.c.l.b16 %v568
    %v2345 = vunpack.c.l.b16 %v569
    %v2346 = vunpack.c.l.b16 %v570
    %v2347 = vunpack.c.l.b16 %v571
    %v2348 = vunpack.c.l.b16 %v572
    %v2349 = vunpack.c.l.b16 %v573
    %v2350 = vunpack.c.l.b16 %v574
    %v2351 = vunpack.c.l.b16 %v575
    %v2352 = vunpack.c.l.b16 %v576
    %v2353 = vunpack.c.l.b16 %v577
    %v2354 = vunpack.c.l.b16 %v578
    %v2355 = vunpack.c.l.b16 %v579
    %v2356 = vunpack.c.l.b16 %v580
    %v2357 = vunpack.c.l.b16 %v581
    %v2358 = vunpack.c.l.b16 %v582
    %v2359 = vunpack.c.l.b16 %v583
    %v2360 = vunpack.c.l.b16 %v584
    %v2361 = vunpack.c.l.b16 %v585
    %v2362 = vunpack.c.l.b16 %v586
    %v2363 = vunpack.c.l.b16 %v587
    %v2364 = vunpack.c.l.b16 %v588
    %v2365 = vunpack.c.l.b16 %v589
    %v2366 = vunpack.c.l.b16 %v590
    %v2367 = vunpack.c.l.b16 %v591
    %v2368 = vunpack.c.l.b16 %v592
    %v2369 = vunpack.c.l.b16 %v593
    %v2370 = vunpack.c.l.b16 %v594
    %v2371 = vunpack.c.l.b16 %v595
    %v2372 = vunpack.c.l.b16 %v596
    %v2373 = vunpack.c.l.b16 %v597
    %v2374 = vunpack.c.l.b16 %v598
    %v2375 = vunpack.c.l.b16 %v599
    %v2376 = vunpack.c.l.b16 %v600
    %v2377 = vunpack.c.l.b16 %v601
    %v2378 = vunpack.c.l.b16 %v602
    %v2379 = vunpack.c.l.b16 %v603
    %v2380 = vunpack.c.l.b16 %v604
    %v2381 = vunpack.c.l.b16 %v605
    %v2382 = vunpack.c.l.b16 %v606
    %v2383 = vunpack.c.l.b16 %v607
    %v2384 = vunpack.c.l.b16 %v608
    %v2385 = vunpack.c.l.b16 %v609
    %v2386 = vunpack.c.l.b16 %v610
    %v2387 = vunpack.c.l.b16 %v611
    %v2388 = vunpack.c.l.b16 %v612
    %v2389 = vunpack.c.l.b16 %v613
    %v2390 = vunpack.c.l.b16 %v614
    %v2391 = vunpack.c.l.b16 %v615
    %v2392 = vunpack.c.l.b16 %v616
    %v2393 = vunpack.c.l.b16 %v617
    %v2394 = vunpack.c.l.b16 %v618
    %v2395 = vunpack.c.l.b16 %v619
    %v2396 = vunpack.c.l.b16 %v620
    %v2397 = vunpack.c.l.b16 %v621
    %v2398 = vunpack.c.l.b16 %v622
    %v2399 = vunpack.c.l.b16 %v623
    %v2400 = vunpack.c.l.b16 %v624
    %v2401 = vunpack.c.l.b16 %v625
    %v2402 = vunpack.c.l.b16 %v626
    %v2403 = vunpack.c.l.b16 %v627
    %v2404 = vunpack.c.l.b16 %v628
    %v2405 = vunpack.c.l.b16 %v629
    %v2406 = vunpack.c.l.b16 %v630
    %v2407 = vunpack.c.l.b16 %v631
    %v2408 = vunpack.c.l.b16 %v632
    %v2409 = vunpack.c.l.b16 %v633
    %v2410 = vunpack.c.l.b16 %v634
    %v2411 = vunpack.c.l.b16 %v635
    %v2412 = vunpack.c.l.b16 %v636
    %v2413 = vunpack.c.l.b16 %v637
    %v2414 = vunpack.c.l.b16 %v638
    %v2415 = vunpack.c.l.b16 %v639
    %v2416 = vunpack.c.l.b16 %v640
    %v2417 = vunpack.c.l.b16 %v641
    %v2418 = vunpack.c.l.b16 %v642
    %v2419 = vunpack.c.l.b16 %v643
    %v2420 = vunpack.c.l.b16 %v644
    %v2421 = vunpack.c.l.b16 %v645
    %v2422 = vunpack.c.l.b16 %v646
    %v2423 = vunpack.c.l.b16 %v647
    %v2424 = vunpack.c.l.b16 %v648
    %v2425 = vunpack.c.l.b16 %v649
    %v2426 = vunpack.c.l.b16 %v650
    %v2427 = vunpack.c.l.b16 %v651
    %v2428 = vunpack.c.l.b16 %v652
    %v2429 = vunpack.c.l.b16 %v653
    %v2430 = vunpack.c.l.b16 %v654
    %v2431 = vunpack.c.l.b16 %v655
    %v2432 = vunpack.c.l.b16 %v656
    %v2433 = vunpack.c.l.b16 %v657
    %v2434 = vunpack.c.l.b16 %v658
    %v2435 = vunpack.c.l.b16 %v659
    %v2436 = vunpack.c.l.b16 %v660
    %v2437 = vunpack.c.l.b16 %v661
    %v2438 = vunpack.c.l.b16 %v662
    %v2439 = vunpack.c.l.b16 %v663
    %v2440 = vunpack.c.l.b16 %v664
    %v2441 = vunpack.c.l.b16 %v665
    %v2442 = vunpack.c.l.b16 %v666
    %v2443 = vunpack.c.l.b16 %v667
    %v2444 = vunpack.c.l.b16 %v668
    %v2445 = vunpack.c.l.b16 %v669
    %v2446 = vunpack.c.l.b16 %v670
    %v2447 = vunpack.c.l.b16 %v671
    %v2448 = vunpack.c.l.b16 %v672
    %v2449 = vunpack.c.l.b16 %v673
    %v2450 = vunpack.c.l.b16 %v674
    %v2451 = vunpack.c.l.b16 %v675
    %v2452 = vunpack.c.l.b16 %v676
    %v2453 = vunpack.c.l.b16 %v677
    %v2454 = vunpack.c.l.b16 %v678
    %v2455 = vunpack.c.l.b16 %v679
    %v2456 = vunpack.c.l.b16 %v680
    %v2457 = vunpack.c.l.b16 %v681
    %v2458 = vunpack.c.l.b16 %v682
    %v2459 = vunpack.c.l.b16 %v683
    %v2460 = vunpack.c.l.b16 %v684
    %v2461 = vunpack.c.l.b16 %v685
    %v2462 = vunpack.c.l.b16 %v686
    %v2463 = vunpack.c.l.b16 %v687
    %v2464 = vunpack.c.l.b16 %v688
    %v2465 = vunpack.c.l.b16 %v689
    %v2466 = vunpack.c.l.b16 %v690
    %v2467 = vunpack.c.l.b16 %v691
    %v2468 = vunpack.c.l.b16 %v692
    %v2469 = vunpack.c.l.b16 %v693
    %v2470 = vunpack.c.l.b16 %v694
    %v2471 = vunpack.c.l.b16 %v695
    %v2472 = vunpack.c.l.b16 %v696
    %v2473 = vunpack.c.l.b16 %v697
    %v2474 = vunpack.c.l.b16 %v698
    %v2475 = vunpack.c.l.b16 %v699
    %v2476 = vunpack.c.l.b16 %v700
    %v2477 = vunpack.c.l.b16 %v701
    %v2478 = vunpack.c.l.b16 %v702
    %v2479 = vunpack.c.l.b16 %v703
    %v2480 = vunpack.c.l.b16 %v704
    %v2481 = vunpack.c.l.b16 %v705
    %v2482 = vunpack.c.l.b16 %v706
    %v2483 = vunpack.c.l.b16 %v707
    %v2484 = vunpack.c.l.b16 %v708
    %v2485 = vunpack.c.l.b16 %v709
    %v2486 = vunpack.c.l.b16 %v710
    %v2487 = vunpack.c.l.b16 %v711
    %v2488 = vunpack.c.l.b16 %v712
    %v2489 = vunpack.c.l.b16 %v713
    %v2490 = vunpack.c.l.b16 %v714
    %v2491 = vunpack.c.l.b16 %v715
    %v2492 = vunpack.c.l.b16 %v716
    %v2493 = vunpack.c.l.b16 %v717
    %v2494 = vunpack.c.l.b16 %v718
    %v2495 = vunpack.c.l.b16 %v719
    %v2496 = vunpack.c.l.b16 %v720
    %v2497 = vunpack.c.l.b16 %v721
    %v2498 = vunpack.c.l.b16 %v722
    %v2499 = vunpack.c.l.b16 %v723
    %v2500 = vunpack.c.l.b16 %v724
    %v2501 = vunpack.c.l.b16 %v725
    %v2502 = vunpack.c.l.b16 %v726
    %v2503 = vunpack.c.l.b16 %v727
    %v2504 = vunpack.c.l.b16 %v728
    %v2505 = vunpack.c.l.b16 %v729
    %v2506 = vunpack.c.l.b16 %v730
    %v2507 = vunpack.c.l.b16 %v731
    %v2508 = vunpack.c.l.b16 %v732
    %v2509 = vunpack.c.l.b16 %v733
    %v2510 = vunpack.c.l.b16 %v734
    %v2511 = vunpack.c.l.b16 %v735
    %v2512 = vunpack.c.l.b16 %v736
    %v2513 = vunpack.c.l.b16 %v737
    %v2514 = vunpack.c.l.b16 %v738
    %v2515 = vunpack.c.l.b16 %v739
    %v2516 = vunpack.c.l.b16 %v740
    %v2517 = vunpack.c.l.b16 %v741
    %v2518 = vunpack.c.l.b16 %v742
    %v2519 = vunpack.c.l.b16 %v743
    %v2520 = vunpack.c.l.b16 %v744
    %v2521 = vunpack.c.l.b16 %v745
    %v2522 = vunpack.c.l.b16 %v746
    %v2523 = vunpack.c.l.b16 %v747
    %v2524 = vunpack.c.l.b16 %v748
    %v2525 = vunpack.c.l.b16 %v749
    %v2526 = vunpack.c.l.b16 %v750
    %v2527 = vunpack.c.l.b16 %v751
    %v2528 = vunpack.c.l.b16 %v752
    %v2529 = vunpack.c.l.b16 %v753
    %v2530 = vunpack.c.l.b16 %v754
    %v2531 = vunpack.c.l.b16 %v755
    %v2532 = vunpack.c.l.b16 %v756
    %v2533 = vunpack.c.l.b16 %v757
    %v2534 = vunpack.c.l.b16 %v758
    %v2535 = vunpack.c.l.b16 %v759
    %v2536 = vunpack.c.l.b16 %v760
    %v2537 = vunpack.c.l.b16 %v761
    %v2538 = vunpack.c.l.b16 %v762
    %v2539 = vunpack.c.l.b16 %v763
    %v2540 = vunpack.c.l.b16 %v764
    %v2541 = vunpack.c.l.b16 %v765
    %v2542 = vunpack.c.l.b16 %v766
    %v2543 = vunpack.c.l.b16 %v767
    %v2544 = vunpack.c.l.b16 %v768
    %v2545 = vunpack.c.l.b16 %v769
    %v2546 = vunpack.c.l.b16 %v770
    %v2547 = vunpack.c.l.b16 %v771
    %v2548 = vunpack.c.l.b16 %v772
    %v2549 = vunpack.c.l.b16 %v773
    %v2550 = vunpack.c.l.b16 %v774
    %v2551 = vunpack.c.l.b16 %v775
    %v2552 = vunpack.c.l.b16 %v776
    %v2553 = vunpack.c.l.b16 %v777
    %v2554 = vunpack.c.l.b16 %v778
    %v2555 = vunpack.c.l.b16 %v779
    %v2556 = vunpack.c.l.b16 %v780
    %v2557 = vunpack.c.l.b16 %v781
    %v2558 = vunpack.c.l.b16 %v782
    %v2559 = vunpack.c.l.b16 %v783
    %v2560 = vunpack.c.l.b16 %v784
    %v2561 = vunpack.c.l.b16 %v785
    %v2562 = vunpack.c.l.b16 %v786
    %v2563 = vunpack.c.l.b16 %v787
    %v2564 = vunpack.c.l.b16 %v788
    %v2565 = vunpack.c.l.b16 %v789
    %v2566 = vunpack.c.l.b16 %v790
    %v2567 = vunpack.c.l.b16 %v791
    %v2568 = vunpack.c.l.b16 %v792
    %v2569 = vunpack.c.l.b16 %v793
    %v2570 = vunpack.c.l.b16 %v794
    %v2571 = vunpack.c.l.b16 %v795
    %v2572 = vunpack.c.l.b16 %v796
    %v2573 = vunpack.c.l.b16 %v797
    %v2574 = vunpack.c.l.b16 %v798
    %v2575 = vunpack.c.l.b16 %v799
    %v2576 = vunpack.c.l.b16 %v800
    %v2577 = vunpack.c.l.b16 %v801
    %v2578 = vunpack.c.l.b16 %v802
    %v2579 = vunpack.c.l.b16 %v803
    %v2580 = vunpack.c.l.b16 %v804
    %v2581 = vunpack.c.l.b16 %v805
    %v2582 = vunpack.c.l.b16 %v806
    %v2583 = vunpack.c.l.b16 %v807
    %v2584 = vunpack.c.l.b16 %v808
    %v2585 = vunpack.c.l.b16 %v809
    %v2586 = vunpack.c.l.b16 %v810
    %v2587 = vunpack.c.l.b16 %v811
    %v2588 = vunpack.c.l.b16 %v812
    %v2589 = vunpack.c.l.b16 %v813
    %v2590 = vunpack.c.l.b16 %v814
    %v2591 = vunpack.c.l.b16 %v815
    %v2592 = vunpack.c.l.b16 %v816
    %v2593 = vunpack.c.l.b16 %v817
    %v2594 = vunpack.c.l.b16 %v818
    %v2595 = vunpack.c.l.b16 %v819
    %v2596 = vunpack.c.l.b16 %v820
    %v2597 = vunpack.c.l.b16 %v821
    %v2598 = vunpack.c.l.b16 %v822
    %v2599 = vunpack.c.l.b16 %v823
    %v2600 = vunpack.c.l.b16 %v824
    %v2601 = vunpack.c.l.b16 %v825
    %v2602 = vunpack.c.l.b16 %v826
    %v2603 = vunpack.c.l.b16 %v827
    %v2604 = vunpack.c.l.b16 %v828
    %v2605 = vunpack.c.l.b16 %v829
    %v2606 = vunpack.c.l.b16 %v830
    %v2607 = vunpack.c.l.b16 %v831
    %v2608 = vunpack.c.l.b16 %v832
    %v2609 = vunpack.c.l.b16 %v833
    %v2610 = vunpack.c.l.b16 %v834
    %v2611 = vunpack.c.l.b16 %v835
    %v2612 = vunpack.c.l.b16 %v836
    %v2613 = vunpack.c.l.b16 %v837
    %v2614 = vunpack.c.l.b16 %v838
    %v2615 = vunpack.c.l.b16 %v839
    %v2616 = vunpack.c.l.b16 %v840
    %v2617 = vunpack.c.l.b16 %v841
    %v2618 = vunpack.c.l.b16 %v842
    %v2619 = vunpack.c.l.b16 %v843
    %v2620 = vunpack.c.l.b16 %v844
    %v2621 = vunpack.c.l.b16 %v845
    %v2622 = vunpack.c.l.b16 %v846
    %v2623 = vunpack.c.l.b16 %v847
    %v2624 = vunpack.c.l.b16 %v848
    %v2625 = vunpack.c.l.b16 %v849
    %v2626 = vunpack.c.l.b16 %v850
    %v2627 = vunpack.c.l.b16 %v851
    %v2628 = vunpack.c.l.b16 %v852
    %v2629 = vunpack.c.l.b16 %v853
    %v2630 = vunpack.c.l.b16 %v854
    %v2631 = vunpack.c.l.b16 %v855
    %v2632 = vunpack.c.l.b16 %v856
    %v2633 = vunpack.c.l.b16 %v857
    %v2634 = vunpack.c.l.b16 %v858
    %v2635 = vunpack.c.l.b16 %v859
    %v2636 = vunpack.c.l.b16 %v860
    %v2637 = vunpack.c.l.b16 %v861
    %v2638 = vunpack.c.l.b16 %v862
    %v2639 = vunpack.c.l.b16 %v863
    %v2640 = vunpack.c.l.b16 %v864
    %v2641 = vunpack.c.l.b16 %v865
    %v2642 = vunpack.c.l.b16 %v866
    %v2643 = vunpack.c.l.b16 %v867
    %v2644 = vunpack.c.l.b16 %v868
    %v2645 = vunpack.c.l.b16 %v869
    %v2646 = vunpack.c.l.b16 %v870
    %v2647 = vunpack.c.l.b16 %v871
    %v2648 = vunpack.c.l.b16 %v872
    %v2649 = vunpack.c.l.b16 %v873
    %v2650 = vunpack.c.l.b16 %v874
    %v2651 = vunpack.c.l.b16 %v875
    %v2652 = vunpack.c.l.b16 %v876
    %v2653 = vunpack.c.l.b16 %v877
    %v2654 = vunpack.c.l.b16 %v878
    %v2655 = vunpack.c.l.b16 %v879
    %v2656 = vunpack.c.l.b16 %v880
    %v2657 = vunpack.c.l.b16 %v881
    %v2658 = vunpack.c.l.b16 %v882
    %v2659 = vunpack.c.l.b16 %v883
    %v2660 = vunpack.c.l.b16 %v884
    %v2661 = vunpack.c.l.b16 %v885
    %v2662 = vunpack.c.l.b16 %v886
    %v2663 = vunpack.c.l.b16 %v887
    %v2664 = vunpack.c.l.b16 %v888
    %v2665 = vunpack.c.l.b16 %v889
    %v2666 = vunpack.c.l.b16 %v890
    %v2667 = vunpack.c.l.b16 %v891
    %v2668 = vunpack.c.l.b16 %v892
    %v2669 = vunpack.c.l.b16 %v893
    %v2670 = vunpack.c.l.b16 %v894
    %v2671 = vunpack.c.l.b16 %v895
    %v2672 = vunpack.c.l.b16 %v896
    %v2673 = vunpack.c.l.b16 %v897
    %v2674 = vunpack.c.l.b16 %v898
    %v2675 = vunpack.c.l.b16 %v899
    %v2676 = vunpack.c.l.b16 %v900
    %v2677 = vunpack.c.l.b16 %v901
    %v2678 = vunpack.c.l.b16 %v902
    %v2679 = vunpack.c.l.b16 %v903
    %v2680 = vunpack.c.l.b16 %v904
    %v2681 = vunpack.c.l.b16 %v905
    %v2682 = vunpack.c.l.b16 %v906
    %v2683 = vunpack.c.l.b16 %v907
    %v2684 = vunpack.c.l.b16 %v908
    %v2685 = vunpack.c.l.b16 %v909
    %v2686 = vunpack.c.l.b16 %v910
    %v2687 = vunpack.c.l.b16 %v911
    %v2688 = vunpack.c.l.b16 %v912
    %v2689 = vunpack.c.l.b16 %v913
    %v2690 = vunpack.c.l.b16 %v914
    %v2691 = vunpack.c.l.b16 %v915
    %v2692 = vunpack.c.l.b16 %v916
    %v2693 = vunpack.c.l.b16 %v917
    %v2694 = vunpack.c.l.b16 %v918
    %v2695 = vunpack.c.l.b16 %v919
    %v2696 = vunpack.c.l.b16 %v920
    %v2697 = vunpack.c.l.b16 %v921
    %v2698 = vunpack.c.l.b16 %v922
    %v2699 = vunpack.c.l.b16 %v923
    %v2700 = vunpack.c.l.b16 %v924
    %v2701 = vunpack.c.l.b16 %v925
    %v2702 = vunpack.c.l.b16 %v926
    %v2703 = vunpack.c.l.b16 %v927
    %v2704 = vunpack.c.l.b16 %v928
    %v2705 = vunpack.c.l.b16 %v929
    %v2706 = vunpack.c.l.b16 %v930
    %v2707 = vunpack.c.l.b16 %v931
    %v2708 = vunpack.c.l.b16 %v932
    %v2709 = vunpack.c.l.b16 %v933
    %v2710 = vunpack.c.l.b16 %v934
    %v2711 = vunpack.c.l.b16 %v935
    %v2712 = vunpack.c.l.b16 %v936
    %v2713 = vunpack.c.l.b16 %v937
    %v2714 = vunpack.c.l.b16 %v938
    %v2715 = vunpack.c.l.b16 %v939
    %v2716 = vunpack.c.l.b16 %v940
    %v2717 = vpack.c.b16 %v1950, %v1949
    %v2718 = vpack.c.b16 %v1952, %v1951
    %v2719 = vpack.c.b16 %v1954, %v1953
    %v2720 = vpack.c.b16 %v1956, %v1955
    %v2721 = vpack.c.b16 %v1958, %v1957
    %v2722 = vpack.c.b16 %v1960, %v1959
    %v2723 = vpack.c.b16 %v1962, %v1961
    %v2724 = vpack.c.b16 %v1964, %v1963
    %v2725 = vpack.c.b16 %v1966, %v1965
    %v2726 = vpack.c.b16 %v1968, %v1967
    %v2727 = vpack.c.b16 %v1970, %v1969
    %v2728 = vpack.c.b16 %v1972, %v1971
    %v2729 = vpack.c.b16 %v1974, %v1973
    %v2730 = vpack.c.b16 %v1976, %v1975
    %v2731 = vpack.c.b16 %v1978, %v1977
    %v2732 = vpack.c.b16 %v1980, %v1979
    %v2733 = vpack.c.b16 %v1982, %v1981
    %v2734 = vpack.c.b16 %v1984, %v1983
    %v2735 = vpack.c.b16 %v1986, %v1985
    %v2736 = vpack.c.b16 %v1988, %v1987
    %v2737 = vpack.c.b16 %v1990, %v1989
    %v2738 = vpack.c.b16 %v1992, %v1991
    %v2739 = vpack.c.b16 %v1994, %v1993
    %v2740 = vpack.c.b16 %v1996, %v1995
    %v2741 = vpack.c.b16 %v1998, %v1997
    %v2742 = vpack.c.b16 %v2000, %v1999
    %v2743 = vpack.c.b16 %v2002, %v2001
    %v2744 = vpack.c.b16 %v2004, %v2003
    %v2745 = vpack.c.b16 %v2006, %v2005
    %v2746 = vpack.c.b16 %v2008, %v2007
    %v2747 = vpack.c.b16 %v2010, %v2009
    %v2748 = vpack.c.b16 %v2012, %v2011
    %v2749 = vpack.c.b16 %v2014, %v2013
    %v2750 = vpack.c.b16 %v2016, %v2015
    %v2751 = vpack.c.b16 %v2018, %v2017
    %v2752 = vpack.c.b16 %v2020, %v2019
    %v2753 = vpack.c.b16 %v2022, %v2021
    %v2754 = vpack.c.b16 %v2024, %v2023
    %v2755 = vpack.c.b16 %v2026, %v2025
    %v2756 = vpack.c.b16 %v2028, %v2027
    %v2757 = vpack.c.b16 %v2030, %v2029
    %v2758 = vpack.c.b16 %v2032, %v2031
    %v2759 = vpack.c.b16 %v2034, %v2033
    %v2760 = vpack.c.b16 %v2036, %v2035
    %v2761 = vpack.c.b16 %v2038, %v2037
    %v2762 = vpack.c.b16 %v2040, %v2039
    %v2763 = vpack.c.b16 %v2042, %v2041
    %v2764 = vpack.c.b16 %v2044, %v2043
    %v2765 = vpack.c.b16 %v2046, %v2045
    %v2766 = vpack.c.b16 %v2048, %v2047
    %v2767 = vpack.c.b16 %v2050, %v2049
    %v2768 = vpack.c.b16 %v2052, %v2051
    %v2769 = vpack.c.b16 %v2054, %v2053
    %v2770 = vpack.c.b16 %v2056, %v2055
    %v2771 = vpack.c.b16 %v2058, %v2057
    %v2772 = vpack.c.b16 %v2060, %v2059
    %v2773 = vpack.c.b16 %v2062, %v2061
    %v2774 = vpack.c.b16 %v2064, %v2063
    %v2775 = vpack.c.b16 %v2066, %v2065
    %v2776 = vpack.c.b16 %v2068, %v2067
    %v2777 = vpack.c.b16 %v2070, %v2069
    %v2778 = vpack.c.b16 %v2072, %v2071
    %v2779 = vpack.c.b16 %v2074, %v2073
    %v2780 = vpack.c.b16 %v2076, %v2075
    %v2781 = vpack.c.b16 %v2078, %v2077
    %v2782 = vpack.c.b16 %v2080, %v2079
    %v2783 = vpack.c.b16 %v2082, %v2081
    %v2784 = vpack.c.b16 %v2084, %v2083
    %v2785 = vpack.c.b16 %v2086, %v2085
    %v2786 = vpack.c.b16 %v2088, %v2087
    %v2787 = vpack.c.b16 %v2090, %v2089
    %v2788 = vpack.c.b16 %v2092, %v2091
    %v2789 = vpack.c.b16 %v2094, %v2093
    %v2790 = vpack.c.b16 %v2096, %v2095
    %v2791 = vpack.c.b16 %v2098, %v2097
    %v2792 = vpack.c.b16 %v2100, %v2099
    %v2793 = vpack.c.b16 %v2102, %v2101
    %v2794 = vpack.c.b16 %v2104, %v2103
    %v2795 = vpack.c.b16 %v2106, %v2105
    %v2796 = vpack.c.b16 %v2108, %v2107
    %v2797 = vpack.c.b16 %v2110, %v2109
    %v2798 = vpack.c.b16 %v2112, %v2111
    %v2799 = vpack.c.b16 %v2114, %v2113
    %v2800 = vpack.c.b16 %v2116, %v2115
    %v2801 = vpack.c.b16 %v2118, %v2117
    %v2802 = vpack.c.b16 %v2120, %v2119
    %v2803 = vpack.c.b16 %v2122, %v2121
    %v2804 = vpack.c.b16 %v2124, %v2123
    %v2805 = vpack.c.b16 %v2126, %v2125
    %v2806 = vpack.c.b16 %v2128, %v2127
    %v2807 = vpack.c.b16 %v2130, %v2129
    %v2808 = vpack.c.b16 %v2132, %v2131
    %v2809 = vpack.c.b16 %v2134, %v2133
    %v2810 = vpack.c.b16 %v2136, %v2135
    %v2811 = vpack.c.b16 %v2138, %v2137
    %v2812 = vpack.c.b16 %v2140, %v2139
    %v2813 = vpack.c.b16 %v2142, %v2141
    %v2814 = vpack.c.b16 %v2144, %v2143
    %v2815 = vpack.c.b16 %v2146, %v2145
    %v2816 = vpack.c.b16 %v2148, %v2147
    %v2817 = vpack.c.b16 %v2150, %v2149
    %v2818 = vpack.c.b16 %v2152, %v2151
    %v2819 = vpack.c.b16 %v2154, %v2153
    %v2820 = vpack.c.b16 %v2156, %v2155
    %v2821 = vpack.c.b16 %v2158, %v2157
    %v2822 = vpack.c.b16 %v2160, %v2159
    %v2823 = vpack.c.b16 %v2162, %v2161
    %v2824 = vpack.c.b16 %v2164, %v2163
    %v2825 = vpack.c.b16 %v2166, %v2165
    %v2826 = vpack.c.b16 %v2168, %v2167
    %v2827 = vpack.c.b16 %v2170, %v2169
    %v2828 = vpack.c.b16 %v2172, %v2171
    %v2829 = vpack.c.b16 %v2174, %v2173
    %v2830 = vpack.c.b16 %v2176, %v2175
    %v2831 = vpack.c.b16 %v2178, %v2177
    %v2832 = vpack.c.b16 %v2180, %v2179
    %v2833 = vpack.c.b16 %v2182, %v2181
    %v2834 = vpack.c.b16 %v2184, %v2183
    %v2835 = vpack.c.b16 %v2186, %v2185
    %v2836 = vpack.c.b16 %v2188, %v2187
    %v2837 = vpack.c.b16 %v2190, %v2189
    %v2838 = vpack.c.b16 %v2192, %v2191
    %v2839 = vpack.c.b16 %v2194, %v2193
    %v2840 = vpack.c.b16 %v2196, %v2195
    %v2841 = vpack.c.b16 %v2198, %v2197
    %v2842 = vpack.c.b16 %v2200, %v2199
    %v2843 = vpack.c.b16 %v2202, %v2201
    %v2844 = vpack.c.b16 %v2204, %v2203
    %v2845 = vpack.c.b16 %v2206, %v2205
    %v2846 = vpack.c.b16 %v2208, %v2207
    %v2847 = vpack.c.b16 %v2210, %v2209
    %v2848 = vpack.c.b16 %v2212, %v2211
    %v2849 = vpack.c.b16 %v2214, %v2213
    %v2850 = vpack.c.b16 %v2216, %v2215
    %v2851 = vpack.c.b16 %v2218, %v2217
    %v2852 = vpack.c.b16 %v2220, %v2219
    %v2853 = vpack.c.b16 %v2222, %v2221
    %v2854 = vpack.c.b16 %v2224, %v2223
    %v2855 = vpack.c.b16 %v2226, %v2225
    %v2856 = vpack.c.b16 %v2228, %v2227
    %v2857 = vpack.c.b16 %v2230, %v2229
    %v2858 = vpack.c.b16 %v2232, %v2231
    %v2859 = vpack.c.b16 %v2234, %v2233
    %v2860 = vpack.c.b16 %v2236, %v2235
    %v2861 = vpack.c.b16 %v2238, %v2237
    %v2862 = vpack.c.b16 %v2240, %v2239
    %v2863 = vpack.c.b16 %v2242, %v2241
    %v2864 = vpack.c.b16 %v2244, %v2243
    %v2865 = vpack.c.b16 %v2246, %v2245
    %v2866 = vpack.c.b16 %v2248, %v2247
    %v2867 = vpack.c.b16 %v2250, %v2249
    %v2868 = vpack.c.b16 %v2252, %v2251
    %v2869 = vpack.c.b16 %v2254, %v2253
    %v2870 = vpack.c.b16 %v2256, %v2255
    %v2871 = vpack.c.b16 %v2258, %v2257
    %v2872 = vpack.c.b16 %v2260, %v2259
    %v2873 = vpack.c.b16 %v2262, %v2261
    %v2874 = vpack.c.b16 %v2264, %v2263
    %v2875 = vpack.c.b16 %v2266, %v2265
    %v2876 = vpack.c.b16 %v2268, %v2267
    %v2877 = vpack.c.b16 %v2270, %v2269
    %v2878 = vpack.c.b16 %v2272, %v2271
    %v2879 = vpack.c.b16 %v2274, %v2273
    %v2880 = vpack.c.b16 %v2276, %v2275
    %v2881 = vpack.c.b16 %v2278, %v2277
    %v2882 = vpack.c.b16 %v2280, %v2279
    %v2883 = vpack.c.b16 %v2282, %v2281
    %v2884 = vpack.c.b16 %v2284, %v2283
    %v2885 = vpack.c.b16 %v2286, %v2285
    %v2886 = vpack.c.b16 %v2288, %v2287
    %v2887 = vpack.c.b16 %v2290, %v2289
    %v2888 = vpack.c.b16 %v2292, %v2291
    %v2889 = vpack.c.b16 %v2294, %v2293
    %v2890 = vpack.c.b16 %v2296, %v2295
    %v2891 = vpack.c.b16 %v2298, %v2297
    %v2892 = vpack.c.b16 %v2300, %v2299
    %v2893 = vpack.c.b16 %v2302, %v2301
    %v2894 = vpack.c.b16 %v2304, %v2303
    %v2895 = vpack.c.b16 %v2306, %v2305
    %v2896 = vpack.c.b16 %v2308, %v2307
    %v2897 = vpack.c.b16 %v2310, %v2309
    %v2898 = vpack.c.b16 %v2312, %v2311
    %v2899 = vpack.c.b16 %v2314, %v2313
    %v2900 = vpack.c.b16 %v2316, %v2315
    %v2901 = vpack.c.b16 %v2318, %v2317
    %v2902 = vpack.c.b16 %v2320, %v2319
    %v2903 = vpack.c.b16 %v2322, %v2321
    %v2904 = vpack.c.b16 %v2324, %v2323
    %v2905 = vpack.c.b16 %v2326, %v2325
    %v2906 = vpack.c.b16 %v2328, %v2327
    %v2907 = vpack.c.b16 %v2330, %v2329
    %v2908 = vpack.c.b16 %v2332, %v2331
    %v2909 = vpack.c.b16 %v2334, %v2333
    %v2910 = vpack.c.b16 %v2336, %v2335
    %v2911 = vpack.c.b16 %v2338, %v2337
    %v2912 = vpack.c.b16 %v2340, %v2339
    %v2913 = vpack.c.b16 %v2342, %v2341
    %v2914 = vpack.c.b16 %v2344, %v2343
    %v2915 = vpack.c.b16 %v2346, %v2345
    %v2916 = vpack.c.b16 %v2348, %v2347
    %v2917 = vpack.c.b16 %v2350, %v2349
    %v2918 = vpack.c.b16 %v2352, %v2351
    %v2919 = vpack.c.b16 %v2354, %v2353
    %v2920 = vpack.c.b16 %v2356, %v2355
    %v2921 = vpack.c.b16 %v2358, %v2357
    %v2922 = vpack.c.b16 %v2360, %v2359
    %v2923 = vpack.c.b16 %v2362, %v2361
    %v2924 = vpack.c.b16 %v2364, %v2363
    %v2925 = vpack.c.b16 %v2366, %v2365
    %v2926 = vpack.c.b16 %v2368, %v2367
    %v2927 = vpack.c.b16 %v2370, %v2369
    %v2928 = vpack.c.b16 %v2372, %v2371
    %v2929 = vpack.c.b16 %v2374, %v2373
    %v2930 = vpack.c.b16 %v2376, %v2375
    %v2931 = vpack.c.b16 %v2378, %v2377
    %v2932 = vpack.c.b16 %v2380, %v2379
    %v2933 = vpack.c.b16 %v2382, %v2381
    %v2934 = vpack.c.b16 %v2384, %v2383
    %v2935 = vpack.c.b16 %v2386, %v2385
    %v2936 = vpack.c.b16 %v2388, %v2387
    %v2937 = vpack.c.b16 %v2390, %v2389
    %v2938 = vpack.c.b16 %v2392, %v2391
    %v2939 = vpack.c.b16 %v2394, %v2393
    %v2940 = vpack.c.b16 %v2396, %v2395
    %v2941 = vpack.c.b16 %v2398, %v2397
    %v2942 = vpack.c.b16 %v2400, %v2399
    %v2943 = vpack.c.b16 %v2402, %v2401
    %v2944 = vpack.c.b16 %v2404, %v2403
    %v2945 = vpack.c.b16 %v2406, %v2405
    %v2946 = vpack.c.b16 %v2408, %v2407
    %v2947 = vpack.c.b16 %v2410, %v2409
    %v2948 = vpack.c.b16 %v2412, %v2411
    %v2949 = vpack.c.b16 %v2414, %v2413
    %v2950 = vpack.c.b16 %v2416, %v2415
    %v2951 = vpack.c.b16 %v2418, %v2417
    %v2952 = vpack.c.b16 %v2420, %v2419
    %v2953 = vpack.c.b16 %v2422, %v2421
    %v2954 = vpack.c.b16 %v2424, %v2423
    %v2955 = vpack.c.b16 %v2426, %v2425
    %v2956 = vpack.c.b16 %v2428, %v2427
    %v2957 = vpack.c.b16 %v2430, %v2429
    %v2958 = vpack.c.b16 %v2432, %v2431
    %v2959 = vpack.c.b16 %v2434, %v2433
    %v2960 = vpack.c.b16 %v2436, %v2435
    %v2961 = vpack.c.b16 %v2438, %v2437
    %v2962 = vpack.c.b16 %v2440, %v2439
    %v2963 = vpack.c.b16 %v2442, %v2441
    %v2964 = vpack.c.b16 %v2444, %v2443
    %v2965 = vpack.c.b16 %v2446, %v2445
    %v2966 = vpack.c.b16 %v2448, %v2447
    %v2967 = vpack.c.b16 %v2450, %v2449
    %v2968 = vpack.c.b16 %v2452, %v2451
    %v2969 = vpack.c.b16 %v2454, %v2453
    %v2970 = vpack.c.b16 %v2456, %v2455
    %v2971 = vpack.c.b16 %v2458, %v2457
    %v2972 = vpack.c.b16 %v2460, %v2459
    %v2973 = vpack.c.b16 %v2462, %v2461
    %v2974 = vpack.c.b16 %v2464, %v2463
    %v2975 = vpack.c.b16 %v2466, %v2465
    %v2976 = vpack.c.b16 %v2468, %v2467
    %v2977 = vpack.c.b16 %v2470, %v2469
    %v2978 = vpack.c.b16 %v2472, %v2471
    %v2979 = vpack.c.b16 %v2474, %v2473
    %v2980 = vpack.c.b16 %v2476, %v2475
    %v2981 = vpack.c.b16 %v2478, %v2477
    %v2982 = vpack.c.b16 %v2480, %v2479
    %v2983 = vpack.c.b16 %v2482, %v2481
    %v2984 = vpack.c.b16 %v2484, %v2483
    %v2985 = vpack.c.b16 %v2486, %v2485
    %v2986 = vpack.c.b16 %v2488, %v2487
    %v2987 = vpack.c.b16 %v2490, %v2489
    %v2988 = vpack.c.b16 %v2492, %v2491
    %v2989 = vpack.c.b16 %v2494, %v2493
    %v2990 = vpack.c.b16 %v2496, %v2495
    %v2991 = vpack.c.b16 %v2498, %v2497
    %v2992 = vpack.c.b16 %v2500, %v2499
    %v2993 = vpack.c.b16 %v2502, %v2501
    %v2994 = vpack.c.b16 %v2504, %v2503
    %v2995 = vpack.c.b16 %v2506, %v2505
    %v2996 = vpack.c.b16 %v2508, %v2507
    %v2997 = vpack.c.b16 %v2510, %v2509
    %v2998 = vpack.c.b16 %v2512, %v2511
    %v2999 = vpack.c.b16 %v2514, %v2513
    %v3000 = vpack.c.b16 %v2516, %v2515
    %v3001 = vpack.c.b16 %v2518, %v2517
    %v3002 = vpack.c.b16 %v2520, %v2519
    %v3003 = vpack.c.b16 %v2522, %v2521
    %v3004 = vpack.c.b16 %v2524, %v2523
    %v3005 = vpack.c.b16 %v2526, %v2525
    %v3006 = vpack.c.b16 %v2528, %v2527
    %v3007 = vpack.c.b16 %v2530, %v2529
    %v3008 = vpack.c.b16 %v2532, %v2531
    %v3009 = vpack.c.b16 %v2534, %v2533
    %v3010 = vpack.c.b16 %v2536, %v2535
    %v3011 = vpack.c.b16 %v2538, %v2537
    %v3012 = vpack.c.b16 %v2540, %v2539
    %v3013 = vpack.c.b16 %v2542, %v2541
    %v3014 = vpack.c.b16 %v2544, %v2543
    %v3015 = vpack.c.b16 %v2546, %v2545
    %v3016 = vpack.c.b16 %v2548, %v2547
    %v3017 = vpack.c.b16 %v2550, %v2549
    %v3018 = vpack.c.b16 %v2552, %v2551
    %v3019 = vpack.c.b16 %v2554, %v2553
    %v3020 = vpack.c.b16 %v2556, %v2555
    %v3021 = vpack.c.b16 %v2558, %v2557
    %v3022 = vpack.c.b16 %v2560, %v2559
    %v3023 = vpack.c.b16 %v2562, %v2561
    %v3024 = vpack.c.b16 %v2564, %v2563
    %v3025 = vpack.c.b16 %v2566, %v2565
    %v3026 = vpack.c.b16 %v2568, %v2567
    %v3027 = vpack.c.b16 %v2570, %v2569
    %v3028 = vpack.c.b16 %v2572, %v2571
    %v3029 = vpack.c.b16 %v2574, %v2573
    %v3030 = vpack.c.b16 %v2576, %v2575
    %v3031 = vpack.c.b16 %v2578, %v2577
    %v3032 = vpack.c.b16 %v2580, %v2579
    %v3033 = vpack.c.b16 %v2582, %v2581
    %v3034 = vpack.c.b16 %v2584, %v2583
    %v3035 = vpack.c.b16 %v2586, %v2585
    %v3036 = vpack.c.b16 %v2588, %v2587
    %v3037 = vpack.c.b16 %v2590, %v2589
    %v3038 = vpack.c.b16 %v2592, %v2591
    %v3039 = vpack.c.b16 %v2594, %v2593
    %v3040 = vpack.c.b16 %v2596, %v2595
    %v3041 = vpack.c.b16 %v2598, %v2597
    %v3042 = vpack.c.b16 %v2600, %v2599
    %v3043 = vpack.c.b16 %v2602, %v2601
    %v3044 = vpack.c.b16 %v2604, %v2603
    %v3045 = vpack.c.b16 %v2606, %v2605
    %v3046 = vpack.c.b16 %v2608, %v2607
    %v3047 = vpack.c.b16 %v2610, %v2609
    %v3048 = vpack.c.b16 %v2612, %v2611
    %v3049 = vpack.c.b16 %v2614, %v2613
    %v3050 = vpack.c.b16 %v2616, %v2615
    %v3051 = vpack.c.b16 %v2618, %v2617
    %v3052 = vpack.c.b16 %v2620, %v2619
    %v3053 = vpack.c.b16 %v2622, %v2621
    %v3054 = vpack.c.b16 %v2624, %v2623
    %v3055 = vpack.c.b16 %v2626, %v2625
    %v3056 = vpack.c.b16 %v2628, %v2627
    %v3057 = vpack.c.b16 %v2630, %v2629
    %v3058 = vpack.c.b16 %v2632, %v2631
    %v3059 = vpack.c.b16 %v2634, %v2633
    %v3060 = vpack.c.b16 %v2636, %v2635
    %v3061 = vpack.c.b16 %v2638, %v2637
    %v3062 = vpack.c.b16 %v2640, %v2639
    %v3063 = vpack.c.b16 %v2642, %v2641
    %v3064 = vpack.c.b16 %v2644, %v2643
    %v3065 = vpack.c.b16 %v2646, %v2645
    %v3066 = vpack.c.b16 %v2648, %v2647
    %v3067 = vpack.c.b16 %v2650, %v2649
    %v3068 = vpack.c.b16 %v2652, %v2651
    %v3069 = vpack.c.b16 %v2654, %v2653
    %v3070 = vpack.c.b16 %v2656, %v2655
    %v3071 = vpack.c.b16 %v2658, %v2657
    %v3072 = vpack.c.b16 %v2660, %v2659
    %v3073 = vpack.c.b16 %v2662, %v2661
    %v3074 = vpack.c.b16 %v2664, %v2663
    %v3075 = vpack.c.b16 %v2666, %v2665
    %v3076 = vpack.c.b16 %v2668, %v2667
    %v3077 = vpack.c.b16 %v2670, %v2669
    %v3078 = vpack.c.b16 %v2672, %v2671
    %v3079 = vpack.c.b16 %v2674, %v2673
    %v3080 = vpack.c.b16 %v2676, %v2675
    %v3081 = vpack.c.b16 %v2678, %v2677
    %v3082 = vpack.c.b16 %v2680, %v2679
    %v3083 = vpack.c.b16 %v2682, %v2681
    %v3084 = vpack.c.b16 %v2684, %v2683
    %v3085 = vpack.c.b16 %v2686, %v2685
    %v3086 = vpack.c.b16 %v2688, %v2687
    %v3087 = vpack.c.b16 %v2690, %v2689
    %v3088 = vpack.c.b16 %v2692, %v2691
    %v3089 = vpack.c.b16 %v2694, %v2693
    %v3090 = vpack.c.b16 %v2696, %v2695
    %v3091 = vpack.c.b16 %v2698, %v2697
    %v3092 = vpack.c.b16 %v2700, %v2699
    %v3093 = vpack.c.b16 %v2702, %v2701
    %v3094 = vpack.c.b16 %v2704, %v2703
    %v3095 = vpack.c.b16 %v2706, %v2705
    %v3096 = vpack.c.b16 %v2708, %v2707
    %v3097 = vpack.c.b16 %v2710, %v2709
    %v3098 = vpack.c.b16 %v2712, %v2711
    %v3099 = vpack.c.b16 %v2714, %v2713
    %v3100 = vpack.c.b16 %v2716, %v2715
    %3485 = vmatprep.subr.bf16.mxu0 0
    %3486 = vmatpush1.bf16.msra.mxu0 %v2717
    %3487 = vmatprep.subr.bf16.mxu0 0
    %3488 = vmatpush1.bf16.msra.mxu0 %v2718
    %3489 = vmatprep.subr.bf16.mxu0 0
    %3490 = vmatpush1.bf16.msra.mxu0 %v2719
    %3491 = vmatprep.subr.bf16.mxu0 0
    %3492 = vmatpush1.bf16.msra.mxu0 %v2720
    %3493 = vmatprep.subr.bf16.mxu0 0
    %3494 = vmatpush1.bf16.msra.mxu0 %v2721
    %3495 = vmatprep.subr.bf16.mxu0 0
    %3496 = vmatpush1.bf16.msra.mxu0 %v2722
    %3497 = vmatprep.subr.bf16.mxu0 0
    %3498 = vmatpush1.bf16.msra.mxu0 %v2723
    %3499 = vmatprep.subr.bf16.mxu0 0
    %3500 = vmatpush1.bf16.msra.mxu0 %v2724
    %3501 = vmatprep.subr.bf16.mxu0 0
    %3502 = vmatpush1.bf16.msra.mxu0 %v2725
    %3503 = vmatprep.subr.bf16.mxu0 0
    %3504 = vmatpush1.bf16.msra.mxu0 %v2726
    %3505 = vmatprep.subr.bf16.mxu0 0
    %3506 = vmatpush1.bf16.msra.mxu0 %v2727
    %3507 = vmatprep.subr.bf16.mxu0 0
    %3508 = vmatpush1.bf16.msra.mxu0 %v2728
    %3509 = vmatprep.subr.bf16.mxu0 0
    %3510 = vmatpush1.bf16.msra.mxu0 %v2729
    %3511 = vmatprep.subr.bf16.mxu0 0
    %3512 = vmatpush1.bf16.msra.mxu0 %v2730
    %3513 = vmatprep.subr.bf16.mxu0 0
    %3514 = vmatpush1.bf16.msra.mxu0 %v2731
    %3515 = vmatprep.subr.bf16.mxu0 0
    %3516 = vmatpush1.bf16.msra.mxu0 %v2732
    %3517 = vmatprep.mubr.bf16.mxu0 %v1086
    %3518 = vmatmul.mubr.bf16.gmra.mrb[0].mxu0 %v1085
    %v3519 = vpop.f32.mrb[0].mxu0
    %v3520 = vadd.f32 0.0, %v3519
    %v3521 = vpop.f32.mrb[0].mxu0
    %v3522 = vpop.f32.mrb[0].mxu0
    %v3523 = vadd.f32 0.0, %v3522
    %v3524 = vpop.f32.mrb[0].mxu0
    %3525 = vdwg.mxu0
    %3526 = vmatprep.subr.bf16.mxu0 0
    %3527 = vmatpush1.bf16.msra.mxu0 %v2733
    %3528 = vmatprep.subr.bf16.mxu0 0
    %3529 = vmatpush1.bf16.msra.mxu0 %v2734
    %3530 = vmatprep.subr.bf16.mxu0 0
    %3531 = vmatpush1.bf16.msra.mxu0 %v2735
    %3532 = vmatprep.subr.bf16.mxu0 0
    %3533 = vmatpush1.bf16.msra.mxu0 %v2736
    %3534 = vmatprep.subr.bf16.mxu0 0
    %3535 = vmatpush1.bf16.msra.mxu0 %v2737
    %3536 = vmatprep.subr.bf16.mxu0 0
    %3537 = vmatpush1.bf16.msra.mxu0 %v2738
    %3538 = vmatprep.subr.bf16.mxu0 0
    %3539 = vmatpush1.bf16.msra.mxu0 %v2739
    %3540 = vmatprep.subr.bf16.mxu0 0
    %3541 = vmatpush1.bf16.msra.mxu0 %v2740
    %3542 = vmatprep.subr.bf16.mxu0 0
    %3543 = vmatpush1.bf16.msra.mxu0 %v2741
    %3544 = vmatprep.subr.bf16.mxu0 0
    %3545 = vmatpush1.bf16.msra.mxu0 %v2742
    %3546 = vmatprep.subr.bf16.mxu0 0
    %3547 = vmatpush1.bf16.msra.mxu0 %v2743
    %3548 = vmatprep.subr.bf16.mxu0 0
    %3549 = vmatpush1.bf16.msra.mxu0 %v2744
    %3550 = vmatprep.subr.bf16.mxu0 0
    %3551 = vmatpush1.bf16.msra.mxu0 %v2745
    %3552 = vmatprep.subr.bf16.mxu0 0
    %3553 = vmatpush1.bf16.msra.mxu0 %v2746
    %3554 = vmatprep.subr.bf16.mxu0 0
    %3555 = vmatpush1.bf16.msra.mxu0 %v2747
    %3556 = vmatprep.subr.bf16.mxu0 0
    %3557 = vmatpush1.bf16.msra.mxu0 %v2748
    %3558 = vmatprep.mubr.bf16.mxu0 %v1088
    %3559 = vmatmul.mubr.bf16.gmra.mrb[0].mxu0 %v1087
    %v3560 = vpop.f32.mrb[0].mxu0
    %v3561 = vadd.f32 %v3520, %v3560
    %v3562 = vpop.f32.mrb[0].mxu0
    %v3563 = vpop.f32.mrb[0].mxu0
    %v3564 = vadd.f32 %v3523, %v3563
    %v3565 = vpop.f32.mrb[0].mxu0
    %3566 = vdwg.mxu0
    %3567 = vmatprep.subr.bf16.mxu0 0
    %3568 = vmatpush1.bf16.msra.mxu0 %v2749
    %3569 = vmatprep.subr.bf16.mxu0 0
    %3570 = vmatpush1.bf16.msra.mxu0 %v2750
    %3571 = vmatprep.subr.bf16.mxu0 0
    %3572 = vmatpush1.bf16.msra.mxu0 %v2751
    %3573 = vmatprep.subr.bf16.mxu0 0
    %3574 = vmatpush1.bf16.msra.mxu0 %v2752
    %3575 = vmatprep.subr.bf16.mxu0 0
    %3576 = vmatpush1.bf16.msra.mxu0 %v2753
    %3577 = vmatprep.subr.bf16.mxu0 0
    %3578 = vmatpush1.bf16.msra.mxu0 %v2754
    %3579 = vmatprep.subr.bf16.mxu0 0
    %3580 = vmatpush1.bf16.msra.mxu0 %v2755
    %3581 = vmatprep.subr.bf16.mxu0 0
    %3582 = vmatpush1.bf16.msra.mxu0 %v2756
    %3583 = vmatprep.subr.bf16.mxu0 0
    %3584 = vmatpush1.bf16.msra.mxu0 %v2757
    %3585 = vmatprep.subr.bf16.mxu0 0
    %3586 = vmatpush1.bf16.msra.mxu0 %v2758
    %3587 = vmatprep.subr.bf16.mxu0 0
    %3588 = vmatpush1.bf16.msra.mxu0 %v2759
    %3589 = vmatprep.subr.bf16.mxu0 0
    %3590 = vmatpush1.bf16.msra.mxu0 %v2760
    %3591 = vmatprep.subr.bf16.mxu0 0
    %3592 = vmatpush1.bf16.msra.mxu0 %v2761
    %3593 = vmatprep.subr.bf16.mxu0 0
    %3594 = vmatpush1.bf16.msra.mxu0 %v2762
    %3595 = vmatprep.subr.bf16.mxu0 0
    %3596 = vmatpush1.bf16.msra.mxu0 %v2763
    %3597 = vmatprep.subr.bf16.mxu0 0
    %3598 = vmatpush1.bf16.msra.mxu0 %v2764
    %3599 = vmatprep.mubr.bf16.mxu0 %v1090
    %3600 = vmatmul.mubr.bf16.gmra.mrb[0].mxu0 %v1089
    %v3601 = vpop.f32.mrb[0].mxu0
    %v3602 = vadd.f32 %v3561, %v3601
    %v3603 = vpop.f32.mrb[0].mxu0
    %v3604 = vpop.f32.mrb[0].mxu0
    %v3605 = vadd.f32 %v3564, %v3604
    %v3606 = vpop.f32.mrb[0].mxu0
    %3607 = vdwg.mxu0
    %3608 = vmatprep.subr.bf16.mxu0 0
    %3609 = vmatpush1.bf16.msra.mxu0 %v2765
    %3610 = vmatprep.subr.bf16.mxu0 0
    %3611 = vmatpush1.bf16.msra.mxu0 %v2766
    %3612 = vmatprep.subr.bf16.mxu0 0
    %3613 = vmatpush1.bf16.msra.mxu0 %v2767
    %3614 = vmatprep.subr.bf16.mxu0 0
    %3615 = vmatpush1.bf16.msra.mxu0 %v2768
    %3616 = vmatprep.subr.bf16.mxu0 0
    %3617 = vmatpush1.bf16.msra.mxu0 %v2769
    %3618 = vmatprep.subr.bf16.mxu0 0
    %3619 = vmatpush1.bf16.msra.mxu0 %v2770
    %3620 = vmatprep.subr.bf16.mxu0 0
    %3621 = vmatpush1.bf16.msra.mxu0 %v2771
    %3622 = vmatprep.subr.bf16.mxu0 0
    %3623 = vmatpush1.bf16.msra.mxu0 %v2772
    %3624 = vmatprep.subr.bf16.mxu0 0
    %3625 = vmatpush1.bf16.msra.mxu0 %v2773
    %3626 = vmatprep.subr.bf16.mxu0 0
    %3627 = vmatpush1.bf16.msra.mxu0 %v2774
    %3628 = vmatprep.subr.bf16.mxu0 0
    %3629 = vmatpush1.bf16.msra.mxu0 %v2775
    %3630 = vmatprep.subr.bf16.mxu0 0
    %3631 = vmatpush1.bf16.msra.mxu0 %v2776
    %3632 = vmatprep.subr.bf16.mxu0 0
    %3633 = vmatpush1.bf16.msra.mxu0 %v2777
    %3634 = vmatprep.subr.bf16.mxu0 0
    %3635 = vmatpush1.bf16.msra.mxu0 %v2778
    %3636 = vmatprep.subr.bf16.mxu0 0
    %3637 = vmatpush1.bf16.msra.mxu0 %v2779
    %3638 = vmatprep.subr.bf16.mxu0 0
    %3639 = vmatpush1.bf16.msra.mxu0 %v2780
    %3640 = vmatprep.mubr.bf16.mxu0 %v1092
    %3641 = vmatmul.mubr.bf16.gmra.mrb[0].mxu0 %v1091
    %v3642 = vpop.f32.mrb[0].mxu0
    %v3643 = vadd.f32 %v3602, %v3642
    %v3644 = vpop.f32.mrb[0].mxu0
    %v3645 = vpop.f32.mrb[0].mxu0
    %v3646 = vadd.f32 %v3605, %v3645
    %v3647 = vpop.f32.mrb[0].mxu0
    %3648 = vdwg.mxu0
    %3649 = vmatprep.subr.bf16.mxu0 0
    %3650 = vmatpush1.bf16.msra.mxu0 %v2781
    %3651 = vmatprep.subr.bf16.mxu0 0
    %3652 = vmatpush1.bf16.msra.mxu0 %v2782
    %3653 = vmatprep.subr.bf16.mxu0 0
    %3654 = vmatpush1.bf16.msra.mxu0 %v2783
    %3655 = vmatprep.subr.bf16.mxu0 0
    %3656 = vmatpush1.bf16.msra.mxu0 %v2784
    %3657 = vmatprep.subr.bf16.mxu0 0
    %3658 = vmatpush1.bf16.msra.mxu0 %v2785
    %3659 = vmatprep.subr.bf16.mxu0 0
    %3660 = vmatpush1.bf16.msra.mxu0 %v2786
    %3661 = vmatprep.subr.bf16.mxu0 0
    %3662 = vmatpush1.bf16.msra.mxu0 %v2787
    %3663 = vmatprep.subr.bf16.mxu0 0
    %3664 = vmatpush1.bf16.msra.mxu0 %v2788
    %3665 = vmatprep.subr.bf16.mxu0 0
    %3666 = vmatpush1.bf16.msra.mxu0 %v2789
    %3667 = vmatprep.subr.bf16.mxu0 0
    %3668 = vmatpush1.bf16.msra.mxu0 %v2790
    %3669 = vmatprep.subr.bf16.mxu0 0
    %3670 = vmatpush1.bf16.msra.mxu0 %v2791
    %3671 = vmatprep.subr.bf16.mxu0 0
    %3672 = vmatpush1.bf16.msra.mxu0 %v2792
    %3673 = vmatprep.subr.bf16.mxu0 0
    %3674 = vmatpush1.bf16.msra.mxu0 %v2793
    %3675 = vmatprep.subr.bf16.mxu0 0
    %3676 = vmatpush1.bf16.msra.mxu0 %v2794
    %3677 = vmatprep.subr.bf16.mxu0 0
    %3678 = vmatpush1.bf16.msra.mxu0 %v2795
    %3679 = vmatprep.subr.bf16.mxu0 0
    %3680 = vmatpush1.bf16.msra.mxu0 %v2796
    %3681 = vmatprep.mubr.bf16.mxu0 %v1094
    %3682 = vmatmul.mubr.bf16.gmra.mrb[0].mxu0 %v1093
    %v3683 = vpop.f32.mrb[0].mxu0
    %v3684 = vadd.f32 %v3643, %v3683
    %v3685 = vpop.f32.mrb[0].mxu0
    %v3686 = vpop.f32.mrb[0].mxu0
    %v3687 = vadd.f32 %v3646, %v3686
    %v3688 = vpop.f32.mrb[0].mxu0
    %3689 = vdwg.mxu0
    %3690 = vmatprep.subr.bf16.mxu0 0
    %3691 = vmatpush1.bf16.msra.mxu0 %v2797
    %3692 = vmatprep.subr.bf16.mxu0 0
    %3693 = vmatpush1.bf16.msra.mxu0 %v2798
    %3694 = vmatprep.subr.bf16.mxu0 0
    %3695 = vmatpush1.bf16.msra.mxu0 %v2799
    %3696 = vmatprep.subr.bf16.mxu0 0
    %3697 = vmatpush1.bf16.msra.mxu0 %v2800
    %3698 = vmatprep.subr.bf16.mxu0 0
    %3699 = vmatpush1.bf16.msra.mxu0 %v2801
    %3700 = vmatprep.subr.bf16.mxu0 0
    %3701 = vmatpush1.bf16.msra.mxu0 %v2802
    %3702 = vmatprep.subr.bf16.mxu0 0
    %3703 = vmatpush1.bf16.msra.mxu0 %v2803
    %3704 = vmatprep.subr.bf16.mxu0 0
    %3705 = vmatpush1.bf16.msra.mxu0 %v2804
    %3706 = vmatprep.subr.bf16.mxu0 0
    %3707 = vmatpush1.bf16.msra.mxu0 %v2805
    %3708 = vmatprep.subr.bf16.mxu0 0
    %3709 = vmatpush1.bf16.msra.mxu0 %v2806
    %3710 = vmatprep.subr.bf16.mxu0 0
    %3711 = vmatpush1.bf16.msra.mxu0 %v2807
    %3712 = vmatprep.subr.bf16.mxu0 0
    %3713 = vmatpush1.bf16.msra.mxu0 %v2808
    %3714 = vmatprep.subr.bf16.mxu0 0
    %3715 = vmatpush1.bf16.msra.mxu0 %v2809
    %3716 = vmatprep.subr.bf16.mxu0 0
    %3717 = vmatpush1.bf16.msra.mxu0 %v2810
    %3718 = vmatprep.subr.bf16.mxu0 0
    %3719 = vmatpush1.bf16.msra.mxu0 %v2811
    %3720 = vmatprep.subr.bf16.mxu0 0
    %3721 = vmatpush1.bf16.msra.mxu0 %v2812
    %3722 = vmatprep.mubr.bf16.mxu0 %v1096
    %3723 = vmatmul.mubr.bf16.gmra.mrb[0].mxu0 %v1095
    %v3724 = vpop.f32.mrb[0].mxu0
    %v3725 = vadd.f32 %v3684, %v3724
    %v3726 = vpop.f32.mrb[0].mxu0
    %v3727 = vpop.f32.mrb[0].mxu0
    %v3728 = vadd.f32 %v3687, %v3727
    %v3729 = vpop.f32.mrb[0].mxu0
    %3730 = vdwg.mxu0
    %3731 = vmatprep.subr.bf16.mxu0 0
    %3732 = vmatpush1.bf16.msra.mxu0 %v2813
    %3733 = vmatprep.subr.bf16.mxu0 0
    %3734 = vmatpush1.bf16.msra.mxu0 %v2814
    %3735 = vmatprep.subr.bf16.mxu0 0
    %3736 = vmatpush1.bf16.msra.mxu0 %v2815
    %3737 = vmatprep.subr.bf16.mxu0 0
    %3738 = vmatpush1.bf16.msra.mxu0 %v2816
    %3739 = vmatprep.subr.bf16.mxu0 0
    %3740 = vmatpush1.bf16.msra.mxu0 %v2817
    %3741 = vmatprep.subr.bf16.mxu0 0
    %3742 = vmatpush1.bf16.msra.mxu0 %v2818
    %3743 = vmatprep.subr.bf16.mxu0 0
    %3744 = vmatpush1.bf16.msra.mxu0 %v2819
    %3745 = vmatprep.subr.bf16.mxu0 0
    %3746 = vmatpush1.bf16.msra.mxu0 %v2820
    %3747 = vmatprep.subr.bf16.mxu0 0
    %3748 = vmatpush1.bf16.msra.mxu0 %v2821
    %3749 = vmatprep.subr.bf16.mxu0 0
    %3750 = vmatpush1.bf16.msra.mxu0 %v2822
    %3751 = vmatprep.subr.bf16.mxu0 0
    %3752 = vmatpush1.bf16.msra.mxu0 %v2823
    %3753 = vmatprep.subr.bf16.mxu0 0
    %3754 = vmatpush1.bf16.msra.mxu0 %v2824
    %3755 = vmatprep.subr.bf16.mxu0 0
    %3756 = vmatpush1.bf16.msra.mxu0 %v2825
    %3757 = vmatprep.subr.bf16.mxu0 0
    %3758 = vmatpush1.bf16.msra.mxu0 %v2826
    %3759 = vmatprep.subr.bf16.mxu0 0
    %3760 = vmatpush1.bf16.msra.mxu0 %v2827
    %3761 = vmatprep.subr.bf16.mxu0 0
    %3762 = vmatpush1.bf16.msra.mxu0 %v2828
    %3763 = vmatprep.mubr.bf16.mxu0 %v1098
    %3764 = vmatmul.mubr.bf16.gmra.mrb[0].mxu0 %v1097
    %v3765 = vpop.f32.mrb[0].mxu0
    %v3766 = vadd.f32 %v3725, %v3765
    %v3767 = vpop.f32.mrb[0].mxu0
    %v3768 = vpop.f32.mrb[0].mxu0
    %v3769 = vadd.f32 %v3728, %v3768
    %v3770 = vpop.f32.mrb[0].mxu0
    %3771 = vdwg.mxu0
    %3772 = vmatprep.subr.bf16.mxu0 0
    %3773 = vmatpush1.bf16.msra.mxu0 %v2829
    %3774 = vmatprep.subr.bf16.mxu0 0
    %3775 = vmatpush1.bf16.msra.mxu0 %v2830
    %3776 = vmatprep.subr.bf16.mxu0 0
    %3777 = vmatpush1.bf16.msra.mxu0 %v2831
    %3778 = vmatprep.subr.bf16.mxu0 0
    %3779 = vmatpush1.bf16.msra.mxu0 %v2832
    %3780 = vmatprep.subr.bf16.mxu0 0
    %3781 = vmatpush1.bf16.msra.mxu0 %v2833
    %3782 = vmatprep.subr.bf16.mxu0 0
    %3783 = vmatpush1.bf16.msra.mxu0 %v2834
    %3784 = vmatprep.subr.bf16.mxu0 0
    %3785 = vmatpush1.bf16.msra.mxu0 %v2835
    %3786 = vmatprep.subr.bf16.mxu0 0
    %3787 = vmatpush1.bf16.msra.mxu0 %v2836
    %3788 = vmatprep.subr.bf16.mxu0 0
    %3789 = vmatpush1.bf16.msra.mxu0 %v2837
    %3790 = vmatprep.subr.bf16.mxu0 0
    %3791 = vmatpush1.bf16.msra.mxu0 %v2838
    %3792 = vmatprep.subr.bf16.mxu0 0
    %3793 = vmatpush1.bf16.msra.mxu0 %v2839
    %3794 = vmatprep.subr.bf16.mxu0 0
    %3795 = vmatpush1.bf16.msra.mxu0 %v2840
    %3796 = vmatprep.subr.bf16.mxu0 0
    %3797 = vmatpush1.bf16.msra.mxu0 %v2841
    %3798 = vmatprep.subr.bf16.mxu0 0
    %3799 = vmatpush1.bf16.msra.mxu0 %v2842
    %3800 = vmatprep.subr.bf16.mxu0 0
    %3801 = vmatpush1.bf16.msra.mxu0 %v2843
    %3802 = vmatprep.subr.bf16.mxu0 0
    %3803 = vmatpush1.bf16.msra.mxu0 %v2844
    %3804 = vmatprep.mubr.bf16.mxu0 %v1100
    %3805 = vmatmul.mubr.bf16.gmra.mrb[0].mxu0 %v1099
    %v3806 = vpop.f32.mrb[0].mxu0
    %v3807 = vadd.f32 %v3766, %v3806
    %v3808 = vpop.f32.mrb[0].mxu0
    %v3809 = vpop.f32.mrb[0].mxu0
    %v3810 = vadd.f32 %v3769, %v3809
    %v3811 = vpop.f32.mrb[0].mxu0
    %3812 = vdwg.mxu0
    %3813 = vmatprep.subr.bf16.mxu0 0
    %3814 = vmatpush1.bf16.msra.mxu0 %v2845
    %3815 = vmatprep.subr.bf16.mxu0 0
    %3816 = vmatpush1.bf16.msra.mxu0 %v2846
    %3817 = vmatprep.subr.bf16.mxu0 0
    %3818 = vmatpush1.bf16.msra.mxu0 %v2847
    %3819 = vmatprep.subr.bf16.mxu0 0
    %3820 = vmatpush1.bf16.msra.mxu0 %v2848
    %3821 = vmatprep.subr.bf16.mxu0 0
    %3822 = vmatpush1.bf16.msra.mxu0 %v2849
    %3823 = vmatprep.subr.bf16.mxu0 0
    %3824 = vmatpush1.bf16.msra.mxu0 %v2850
    %3825 = vmatprep.subr.bf16.mxu0 0
    %3826 = vmatpush1.bf16.msra.mxu0 %v2851
    %3827 = vmatprep.subr.bf16.mxu0 0
    %3828 = vmatpush1.bf16.msra.mxu0 %v2852
    %3829 = vmatprep.subr.bf16.mxu0 0
    %3830 = vmatpush1.bf16.msra.mxu0 %v2853
    %3831 = vmatprep.subr.bf16.mxu0 0
    %3832 = vmatpush1.bf16.msra.mxu0 %v2854
    %3833 = vmatprep.subr.bf16.mxu0 0
    %3834 = vmatpush1.bf16.msra.mxu0 %v2855
    %3835 = vmatprep.subr.bf16.mxu0 0
    %3836 = vmatpush1.bf16.msra.mxu0 %v2856
    %3837 = vmatprep.subr.bf16.mxu0 0
    %3838 = vmatpush1.bf16.msra.mxu0 %v2857
    %3839 = vmatprep.subr.bf16.mxu0 0
    %3840 = vmatpush1.bf16.msra.mxu0 %v2858
    %3841 = vmatprep.subr.bf16.mxu0 0
    %3842 = vmatpush1.bf16.msra.mxu0 %v2859
    %3843 = vmatprep.subr.bf16.mxu0 0
    %3844 = vmatpush1.bf16.msra.mxu0 %v2860
    %3845 = vmatprep.mubr.bf16.mxu0 %v1102
    %3846 = vmatmul.mubr.bf16.gmra.mrb[0].mxu0 %v1101
    %v3847 = vpop.f32.mrb[0].mxu0
    %v3848 = vadd.f32 %v3807, %v3847
    %v3849 = vpop.f32.mrb[0].mxu0
    %v3850 = vpop.f32.mrb[0].mxu0
    %v3851 = vadd.f32 %v3810, %v3850
    %v3852 = vpop.f32.mrb[0].mxu0
    %3853 = vdwg.mxu0
    %3854 = vmatprep.subr.bf16.mxu0 0
    %3855 = vmatpush1.bf16.msra.mxu0 %v2861
    %3856 = vmatprep.subr.bf16.mxu0 0
    %3857 = vmatpush1.bf16.msra.mxu0 %v2862
    %3858 = vmatprep.subr.bf16.mxu0 0
    %3859 = vmatpush1.bf16.msra.mxu0 %v2863
    %3860 = vmatprep.subr.bf16.mxu0 0
    %3861 = vmatpush1.bf16.msra.mxu0 %v2864
    %3862 = vmatprep.subr.bf16.mxu0 0
    %3863 = vmatpush1.bf16.msra.mxu0 %v2865
    %3864 = vmatprep.subr.bf16.mxu0 0
    %3865 = vmatpush1.bf16.msra.mxu0 %v2866
    %3866 = vmatprep.subr.bf16.mxu0 0
    %3867 = vmatpush1.bf16.msra.mxu0 %v2867
    %3868 = vmatprep.subr.bf16.mxu0 0
    %3869 = vmatpush1.bf16.msra.mxu0 %v2868
    %3870 = vmatprep.subr.bf16.mxu0 0
    %3871 = vmatpush1.bf16.msra.mxu0 %v2869
    %3872 = vmatprep.subr.bf16.mxu0 0
    %3873 = vmatpush1.bf16.msra.mxu0 %v2870
    %3874 = vmatprep.subr.bf16.mxu0 0
    %3875 = vmatpush1.bf16.msra.mxu0 %v2871
    %3876 = vmatprep.subr.bf16.mxu0 0
    %3877 = vmatpush1.bf16.msra.mxu0 %v2872
    %3878 = vmatprep.subr.bf16.mxu0 0
    %3879 = vmatpush1.bf16.msra.mxu0 %v2873
    %3880 = vmatprep.subr.bf16.mxu0 0
    %3881 = vmatpush1.bf16.msra.mxu0 %v2874
    %3882 = vmatprep.subr.bf16.mxu0 0
    %3883 = vmatpush1.bf16.msra.mxu0 %v2875
    %3884 = vmatprep.subr.bf16.mxu0 0
    %3885 = vmatpush1.bf16.msra.mxu0 %v2876
    %3886 = vmatprep.mubr.bf16.mxu0 %v1104
    %3887 = vmatmul.mubr.bf16.gmra.mrb[0].mxu0 %v1103
    %v3888 = vpop.f32.mrb[0].mxu0
    %v3889 = vadd.f32 %v3848, %v3888
    %v3890 = vpop.f32.mrb[0].mxu0
    %v3891 = vpop.f32.mrb[0].mxu0
    %v3892 = vadd.f32 %v3851, %v3891
    %v3893 = vpop.f32.mrb[0].mxu0
    %3894 = vdwg.mxu0
    %3895 = vmatprep.subr.bf16.mxu0 0
    %3896 = vmatpush1.bf16.msra.mxu0 %v2877
    %3897 = vmatprep.subr.bf16.mxu0 0
    %3898 = vmatpush1.bf16.msra.mxu0 %v2878
    %3899 = vmatprep.subr.bf16.mxu0 0
    %3900 = vmatpush1.bf16.msra.mxu0 %v2879
    %3901 = vmatprep.subr.bf16.mxu0 0
    %3902 = vmatpush1.bf16.msra.mxu0 %v2880
    %3903 = vmatprep.subr.bf16.mxu0 0
    %3904 = vmatpush1.bf16.msra.mxu0 %v2881
    %3905 = vmatprep.subr.bf16.mxu0 0
    %3906 = vmatpush1.bf16.msra.mxu0 %v2882
    %3907 = vmatprep.subr.bf16.mxu0 0
    %3908 = vmatpush1.bf16.msra.mxu0 %v2883
    %3909 = vmatprep.subr.bf16.mxu0 0
    %3910 = vmatpush1.bf16.msra.mxu0 %v2884
    %3911 = vmatprep.subr.bf16.mxu0 0
    %3912 = vmatpush1.bf16.msra.mxu0 %v2885
    %3913 = vmatprep.subr.bf16.mxu0 0
    %3914 = vmatpush1.bf16.msra.mxu0 %v2886
    %3915 = vmatprep.subr.bf16.mxu0 0
    %3916 = vmatpush1.bf16.msra.mxu0 %v2887
    %3917 = vmatprep.subr.bf16.mxu0 0
    %3918 = vmatpush1.bf16.msra.mxu0 %v2888
    %3919 = vmatprep.subr.bf16.mxu0 0
    %3920 = vmatpush1.bf16.msra.mxu0 %v2889
    %3921 = vmatprep.subr.bf16.mxu0 0
    %3922 = vmatpush1.bf16.msra.mxu0 %v2890
    %3923 = vmatprep.subr.bf16.mxu0 0
    %3924 = vmatpush1.bf16.msra.mxu0 %v2891
    %3925 = vmatprep.subr.bf16.mxu0 0
    %3926 = vmatpush1.bf16.msra.mxu0 %v2892
    %3927 = vmatprep.mubr.bf16.mxu0 %v1106
    %3928 = vmatmul.mubr.bf16.gmra.mrb[0].mxu0 %v1105
    %v3929 = vpop.f32.mrb[0].mxu0
    %v3930 = vadd.f32 %v3889, %v3929
    %v3931 = vpop.f32.mrb[0].mxu0
    %v3932 = vpop.f32.mrb[0].mxu0
    %v3933 = vadd.f32 %v3892, %v3932
    %v3934 = vpop.f32.mrb[0].mxu0
    %3935 = vdwg.mxu0
    %3936 = vmatprep.subr.bf16.mxu0 0
    %3937 = vmatpush1.bf16.msra.mxu0 %v2893
    %3938 = vmatprep.subr.bf16.mxu0 0
    %3939 = vmatpush1.bf16.msra.mxu0 %v2894
    %3940 = vmatprep.subr.bf16.mxu0 0
    %3941 = vmatpush1.bf16.msra.mxu0 %v2895
    %3942 = vmatprep.subr.bf16.mxu0 0
    %3943 = vmatpush1.bf16.msra.mxu0 %v2896
    %3944 = vmatprep.subr.bf16.mxu0 0
    %3945 = vmatpush1.bf16.msra.mxu0 %v2897
    %3946 = vmatprep.subr.bf16.mxu0 0
    %3947 = vmatpush1.bf16.msra.mxu0 %v2898
    %3948 = vmatprep.subr.bf16.mxu0 0
    %3949 = vmatpush1.bf16.msra.mxu0 %v2899
    %3950 = vmatprep.subr.bf16.mxu0 0
    %3951 = vmatpush1.bf16.msra.mxu0 %v2900
    %3952 = vmatprep.subr.bf16.mxu0 0
    %3953 = vmatpush1.bf16.msra.mxu0 %v2901
    %3954 = vmatprep.subr.bf16.mxu0 0
    %3955 = vmatpush1.bf16.msra.mxu0 %v2902
    %3956 = vmatprep.subr.bf16.mxu0 0
    %3957 = vmatpush1.bf16.msra.mxu0 %v2903
    %3958 = vmatprep.subr.bf16.mxu0 0
    %3959 = vmatpush1.bf16.msra.mxu0 %v2904
    %3960 = vmatprep.subr.bf16.mxu0 0
    %3961 = vmatpush1.bf16.msra.mxu0 %v2905
    %3962 = vmatprep.subr.bf16.mxu0 0
    %3963 = vmatpush1.bf16.msra.mxu0 %v2906
    %3964 = vmatprep.subr.bf16.mxu0 0
    %3965 = vmatpush1.bf16.msra.mxu0 %v2907
    %3966 = vmatprep.subr.bf16.mxu0 0
    %3967 = vmatpush1.bf16.msra.mxu0 %v2908
    %3968 = vmatprep.mubr.bf16.mxu0 %v1108
    %3969 = vmatmul.mubr.bf16.gmra.mrb[0].mxu0 %v1107
    %v3970 = vpop.f32.mrb[0].mxu0
    %v3971 = vadd.f32 %v3930, %v3970
    %v3972 = vpop.f32.mrb[0].mxu0
    %v3973 = vpop.f32.mrb[0].mxu0
    %v3974 = vadd.f32 %v3933, %v3973
    %v3975 = vpop.f32.mrb[0].mxu0
    %3976 = vdwg.mxu0
    %3977 = vmatprep.subr.bf16.mxu0 0
    %3978 = vmatpush1.bf16.msra.mxu0 %v2909
    %3979 = vmatprep.subr.bf16.mxu0 0
    %3980 = vmatpush1.bf16.msra.mxu0 %v2910
    %3981 = vmatprep.subr.bf16.mxu0 0
    %3982 = vmatpush1.bf16.msra.mxu0 %v2911
    %3983 = vmatprep.subr.bf16.mxu0 0
    %3984 = vmatpush1.bf16.msra.mxu0 %v2912
    %3985 = vmatprep.subr.bf16.mxu0 0
    %3986 = vmatpush1.bf16.msra.mxu0 %v2913
    %3987 = vmatprep.subr.bf16.mxu0 0
    %3988 = vmatpush1.bf16.msra.mxu0 %v2914
    %3989 = vmatprep.subr.bf16.mxu0 0
    %3990 = vmatpush1.bf16.msra.mxu0 %v2915
    %3991 = vmatprep.subr.bf16.mxu0 0
    %3992 = vmatpush1.bf16.msra.mxu0 %v2916
    %3993 = vmatprep.subr.bf16.mxu0 0
    %3994 = vmatpush1.bf16.msra.mxu0 %v2917
    %3995 = vmatprep.subr.bf16.mxu0 0
    %3996 = vmatpush1.bf16.msra.mxu0 %v2918
    %3997 = vmatprep.subr.bf16.mxu0 0
    %3998 = vmatpush1.bf16.msra.mxu0 %v2919
    %3999 = vmatprep.subr.bf16.mxu0 0
    %4000 = vmatpush1.bf16.msra.mxu0 %v2920
    %4001 = vmatprep.subr.bf16.mxu0 0
    %4002 = vmatpush1.bf16.msra.mxu0 %v2921
    %4003 = vmatprep.subr.bf16.mxu0 0
    %4004 = vmatpush1.bf16.msra.mxu0 %v2922
    %4005 = vmatprep.subr.bf16.mxu0 0
    %4006 = vmatpush1.bf16.msra.mxu0 %v2923
    %4007 = vmatprep.subr.bf16.mxu0 0
    %4008 = vmatpush1.bf16.msra.mxu0 %v2924
    %4009 = vmatprep.mubr.bf16.mxu0 %v1110
    %4010 = vmatmul.mubr.bf16.gmra.mrb[0].mxu0 %v1109
    %v4011 = vpop.f32.mrb[0].mxu0
    %v4012 = vadd.f32 %v3971, %v4011
    %v4013 = vpop.f32.mrb[0].mxu0
    %v4014 = vpop.f32.mrb[0].mxu0
    %v4015 = vadd.f32 %v3974, %v4014
    %v4016 = vpop.f32.mrb[0].mxu0
    %4017 = vdwg.mxu0
    %4018 = vmatprep.subr.bf16.mxu0 0
    %4019 = vmatpush1.bf16.msra.mxu0 %v2925
    %4020 = vmatprep.subr.bf16.mxu0 0
    %4021 = vmatpush1.bf16.msra.mxu0 %v2926
    %4022 = vmatprep.subr.bf16.mxu0 0
    %4023 = vmatpush1.bf16.msra.mxu0 %v2927
    %4024 = vmatprep.subr.bf16.mxu0 0
    %4025 = vmatpush1.bf16.msra.mxu0 %v2928
    %4026 = vmatprep.subr.bf16.mxu0 0
    %4027 = vmatpush1.bf16.msra.mxu0 %v2929
    %4028 = vmatprep.subr.bf16.mxu0 0
    %4029 = vmatpush1.bf16.msra.mxu0 %v2930
    %4030 = vmatprep.subr.bf16.mxu0 0
    %4031 = vmatpush1.bf16.msra.mxu0 %v2931
    %4032 = vmatprep.subr.bf16.mxu0 0
    %4033 = vmatpush1.bf16.msra.mxu0 %v2932
    %4034 = vmatprep.subr.bf16.mxu0 0
    %4035 = vmatpush1.bf16.msra.mxu0 %v2933
    %4036 = vmatprep.subr.bf16.mxu0 0
    %4037 = vmatpush1.bf16.msra.mxu0 %v2934
    %4038 = vmatprep.subr.bf16.mxu0 0
    %4039 = vmatpush1.bf16.msra.mxu0 %v2935
    %4040 = vmatprep.subr.bf16.mxu0 0
    %4041 = vmatpush1.bf16.msra.mxu0 %v2936
    %4042 = vmatprep.subr.bf16.mxu0 0
    %4043 = vmatpush1.bf16.msra.mxu0 %v2937
    %4044 = vmatprep.subr.bf16.mxu0 0
    %4045 = vmatpush1.bf16.msra.mxu0 %v2938
    %4046 = vmatprep.subr.bf16.mxu0 0
    %4047 = vmatpush1.bf16.msra.mxu0 %v2939
    %4048 = vmatprep.subr.bf16.mxu0 0
    %4049 = vmatpush1.bf16.msra.mxu0 %v2940
    %4050 = vmatprep.mubr.bf16.mxu0 %v1112
    %4051 = vmatmul.mubr.bf16.gmra.mrb[0].mxu0 %v1111
    %v4052 = vpop.f32.mrb[0].mxu0
    %v4053 = vadd.f32 %v4012, %v4052
    %v4054 = vpop.f32.mrb[0].mxu0
    %v4055 = vpop.f32.mrb[0].mxu0
    %v4056 = vadd.f32 %v4015, %v4055
    %v4057 = vpop.f32.mrb[0].mxu0
    %4058 = vdwg.mxu0
    %4059 = vmatprep.subr.bf16.mxu0 0
    %4060 = vmatpush1.bf16.msra.mxu0 %v2941
    %4061 = vmatprep.subr.bf16.mxu0 0
    %4062 = vmatpush1.bf16.msra.mxu0 %v2942
    %4063 = vmatprep.subr.bf16.mxu0 0
    %4064 = vmatpush1.bf16.msra.mxu0 %v2943
    %4065 = vmatprep.subr.bf16.mxu0 0
    %4066 = vmatpush1.bf16.msra.mxu0 %v2944
    %4067 = vmatprep.subr.bf16.mxu0 0
    %4068 = vmatpush1.bf16.msra.mxu0 %v2945
    %4069 = vmatprep.subr.bf16.mxu0 0
    %4070 = vmatpush1.bf16.msra.mxu0 %v2946
    %4071 = vmatprep.subr.bf16.mxu0 0
    %4072 = vmatpush1.bf16.msra.mxu0 %v2947
    %4073 = vmatprep.subr.bf16.mxu0 0
    %4074 = vmatpush1.bf16.msra.mxu0 %v2948
    %4075 = vmatprep.subr.bf16.mxu0 0
    %4076 = vmatpush1.bf16.msra.mxu0 %v2949
    %4077 = vmatprep.subr.bf16.mxu0 0
    %4078 = vmatpush1.bf16.msra.mxu0 %v2950
    %4079 = vmatprep.subr.bf16.mxu0 0
    %4080 = vmatpush1.bf16.msra.mxu0 %v2951
    %4081 = vmatprep.subr.bf16.mxu0 0
    %4082 = vmatpush1.bf16.msra.mxu0 %v2952
    %4083 = vmatprep.subr.bf16.mxu0 0
    %4084 = vmatpush1.bf16.msra.mxu0 %v2953
    %4085 = vmatprep.subr.bf16.mxu0 0
    %4086 = vmatpush1.bf16.msra.mxu0 %v2954
    %4087 = vmatprep.subr.bf16.mxu0 0
    %4088 = vmatpush1.bf16.msra.mxu0 %v2955
    %4089 = vmatprep.subr.bf16.mxu0 0
    %4090 = vmatpush1.bf16.msra.mxu0 %v2956
    %4091 = vmatprep.mubr.bf16.mxu0 %v1114
    %4092 = vmatmul.mubr.bf16.gmra.mrb[0].mxu0 %v1113
    %v4093 = vpop.f32.mrb[0].mxu0
    %v4094 = vadd.f32 %v4053, %v4093
    %v4095 = vpop.f32.mrb[0].mxu0
    %v4096 = vpop.f32.mrb[0].mxu0
    %v4097 = vadd.f32 %v4056, %v4096
    %v4098 = vpop.f32.mrb[0].mxu0
    %4099 = vdwg.mxu0
    %4100 = vmatprep.subr.bf16.mxu0 0
    %4101 = vmatpush1.bf16.msra.mxu0 %v2957
    %4102 = vmatprep.subr.bf16.mxu0 0
    %4103 = vmatpush1.bf16.msra.mxu0 %v2958
    %4104 = vmatprep.subr.bf16.mxu0 0
    %4105 = vmatpush1.bf16.msra.mxu0 %v2959
    %4106 = vmatprep.subr.bf16.mxu0 0
    %4107 = vmatpush1.bf16.msra.mxu0 %v2960
    %4108 = vmatprep.subr.bf16.mxu0 0
    %4109 = vmatpush1.bf16.msra.mxu0 %v2961
    %4110 = vmatprep.subr.bf16.mxu0 0
    %4111 = vmatpush1.bf16.msra.mxu0 %v2962
    %4112 = vmatprep.subr.bf16.mxu0 0
    %4113 = vmatpush1.bf16.msra.mxu0 %v2963
    %4114 = vmatprep.subr.bf16.mxu0 0
    %4115 = vmatpush1.bf16.msra.mxu0 %v2964
    %4116 = vmatprep.subr.bf16.mxu0 0
    %4117 = vmatpush1.bf16.msra.mxu0 %v2965
    %4118 = vmatprep.subr.bf16.mxu0 0
    %4119 = vmatpush1.bf16.msra.mxu0 %v2966
    %4120 = vmatprep.subr.bf16.mxu0 0
    %4121 = vmatpush1.bf16.msra.mxu0 %v2967
    %4122 = vmatprep.subr.bf16.mxu0 0
    %4123 = vmatpush1.bf16.msra.mxu0 %v2968
    %4124 = vmatprep.subr.bf16.mxu0 0
    %4125 = vmatpush1.bf16.msra.mxu0 %v2969
    %4126 = vmatprep.subr.bf16.mxu0 0
    %4127 = vmatpush1.bf16.msra.mxu0 %v2970
    %4128 = vmatprep.subr.bf16.mxu0 0
    %4129 = vmatpush1.bf16.msra.mxu0 %v2971
    %4130 = vmatprep.subr.bf16.mxu0 0
    %4131 = vmatpush1.bf16.msra.mxu0 %v2972
    %4132 = vmatprep.mubr.bf16.mxu0 %v1116
    %4133 = vmatmul.mubr.bf16.gmra.mrb[0].mxu0 %v1115
    %v4134 = vpop.f32.mrb[0].mxu0
    %v4135 = vadd.f32 %v4094, %v4134
    %v4136 = vpop.f32.mrb[0].mxu0
    %v4137 = vpop.f32.mrb[0].mxu0
    %v4138 = vadd.f32 %v4097, %v4137
    %v4139 = vpop.f32.mrb[0].mxu0
    %4140 = vdwg.mxu0
    %4141 = vmatprep.subr.bf16.mxu0 0
    %4142 = vmatpush1.bf16.msra.mxu0 %v2973
    %4143 = vmatprep.subr.bf16.mxu0 0
    %4144 = vmatpush1.bf16.msra.mxu0 %v2974
    %4145 = vmatprep.subr.bf16.mxu0 0
    %4146 = vmatpush1.bf16.msra.mxu0 %v2975
    %4147 = vmatprep.subr.bf16.mxu0 0
    %4148 = vmatpush1.bf16.msra.mxu0 %v2976
    %4149 = vmatprep.subr.bf16.mxu0 0
    %4150 = vmatpush1.bf16.msra.mxu0 %v2977
    %4151 = vmatprep.subr.bf16.mxu0 0
    %4152 = vmatpush1.bf16.msra.mxu0 %v2978
    %4153 = vmatprep.subr.bf16.mxu0 0
    %4154 = vmatpush1.bf16.msra.mxu0 %v2979
    %4155 = vmatprep.subr.bf16.mxu0 0
    %4156 = vmatpush1.bf16.msra.mxu0 %v2980
    %4157 = vmatprep.subr.bf16.mxu0 0
    %4158 = vmatpush1.bf16.msra.mxu0 %v2981
    %4159 = vmatprep.subr.bf16.mxu0 0
    %4160 = vmatpush1.bf16.msra.mxu0 %v2982
    %4161 = vmatprep.subr.bf16.mxu0 0
    %4162 = vmatpush1.bf16.msra.mxu0 %v2983
    %4163 = vmatprep.subr.bf16.mxu0 0
    %4164 = vmatpush1.bf16.msra.mxu0 %v2984
    %4165 = vmatprep.subr.bf16.mxu0 0
    %4166 = vmatpush1.bf16.msra.mxu0 %v2985
    %4167 = vmatprep.subr.bf16.mxu0 0
    %4168 = vmatpush1.bf16.msra.mxu0 %v2986
    %4169 = vmatprep.subr.bf16.mxu0 0
    %4170 = vmatpush1.bf16.msra.mxu0 %v2987
    %4171 = vmatprep.subr.bf16.mxu0 0
    %4172 = vmatpush1.bf16.msra.mxu0 %v2988
    %4173 = vmatprep.mubr.bf16.mxu0 %v1118
    %4174 = vmatmul.mubr.bf16.gmra.mrb[0].mxu0 %v1117
    %v4175 = vpop.f32.mrb[0].mxu0
    %v4176 = vadd.f32 %v4135, %v4175
    %v4177 = vpop.f32.mrb[0].mxu0
    %v4178 = vpop.f32.mrb[0].mxu0
    %v4179 = vadd.f32 %v4138, %v4178
    %v4180 = vpop.f32.mrb[0].mxu0
    %4181 = vdwg.mxu0
    %4182 = vmatprep.subr.bf16.mxu0 0
    %4183 = vmatpush1.bf16.msra.mxu0 %v2989
    %4184 = vmatprep.subr.bf16.mxu0 0
    %4185 = vmatpush1.bf16.msra.mxu0 %v2990
    %4186 = vmatprep.subr.bf16.mxu0 0
    %4187 = vmatpush1.bf16.msra.mxu0 %v2991
    %4188 = vmatprep.subr.bf16.mxu0 0
    %4189 = vmatpush1.bf16.msra.mxu0 %v2992
    %4190 = vmatprep.subr.bf16.mxu0 0
    %4191 = vmatpush1.bf16.msra.mxu0 %v2993
    %4192 = vmatprep.subr.bf16.mxu0 0
    %4193 = vmatpush1.bf16.msra.mxu0 %v2994
    %4194 = vmatprep.subr.bf16.mxu0 0
    %4195 = vmatpush1.bf16.msra.mxu0 %v2995
    %4196 = vmatprep.subr.bf16.mxu0 0
    %4197 = vmatpush1.bf16.msra.mxu0 %v2996
    %4198 = vmatprep.subr.bf16.mxu0 0
    %4199 = vmatpush1.bf16.msra.mxu0 %v2997
    %4200 = vmatprep.subr.bf16.mxu0 0
    %4201 = vmatpush1.bf16.msra.mxu0 %v2998
    %4202 = vmatprep.subr.bf16.mxu0 0
    %4203 = vmatpush1.bf16.msra.mxu0 %v2999
    %4204 = vmatprep.subr.bf16.mxu0 0
    %4205 = vmatpush1.bf16.msra.mxu0 %v3000
    %4206 = vmatprep.subr.bf16.mxu0 0
    %4207 = vmatpush1.bf16.msra.mxu0 %v3001
    %4208 = vmatprep.subr.bf16.mxu0 0
    %4209 = vmatpush1.bf16.msra.mxu0 %v3002
    %4210 = vmatprep.subr.bf16.mxu0 0
    %4211 = vmatpush1.bf16.msra.mxu0 %v3003
    %4212 = vmatprep.subr.bf16.mxu0 0
    %4213 = vmatpush1.bf16.msra.mxu0 %v3004
    %4214 = vmatprep.mubr.bf16.mxu0 %v1120
    %4215 = vmatmul.mubr.bf16.gmra.mrb[0].mxu0 %v1119
    %v4216 = vpop.f32.mrb[0].mxu0
    %v4217 = vadd.f32 %v4176, %v4216
    %v4218 = vpop.f32.mrb[0].mxu0
    %v4219 = vpop.f32.mrb[0].mxu0
    %v4220 = vadd.f32 %v4179, %v4219
    %v4221 = vpop.f32.mrb[0].mxu0
    %4222 = vdwg.mxu0
    %4223 = vmatprep.subr.bf16.mxu0 0
    %4224 = vmatpush1.bf16.msra.mxu0 %v3005
    %4225 = vmatprep.subr.bf16.mxu0 0
    %4226 = vmatpush1.bf16.msra.mxu0 %v3006
    %4227 = vmatprep.subr.bf16.mxu0 0
    %4228 = vmatpush1.bf16.msra.mxu0 %v3007
    %4229 = vmatprep.subr.bf16.mxu0 0
    %4230 = vmatpush1.bf16.msra.mxu0 %v3008
    %4231 = vmatprep.subr.bf16.mxu0 0
    %4232 = vmatpush1.bf16.msra.mxu0 %v3009
    %4233 = vmatprep.subr.bf16.mxu0 0
    %4234 = vmatpush1.bf16.msra.mxu0 %v3010
    %4235 = vmatprep.subr.bf16.mxu0 0
    %4236 = vmatpush1.bf16.msra.mxu0 %v3011
    %4237 = vmatprep.subr.bf16.mxu0 0
    %4238 = vmatpush1.bf16.msra.mxu0 %v3012
    %4239 = vmatprep.subr.bf16.mxu0 0
    %4240 = vmatpush1.bf16.msra.mxu0 %v3013
    %4241 = vmatprep.subr.bf16.mxu0 0
    %4242 = vmatpush1.bf16.msra.mxu0 %v3014
    %4243 = vmatprep.subr.bf16.mxu0 0
    %4244 = vmatpush1.bf16.msra.mxu0 %v3015
    %4245 = vmatprep.subr.bf16.mxu0 0
    %4246 = vmatpush1.bf16.msra.mxu0 %v3016
    %4247 = vmatprep.subr.bf16.mxu0 0
    %4248 = vmatpush1.bf16.msra.mxu0 %v3017
    %4249 = vmatprep.subr.bf16.mxu0 0
    %4250 = vmatpush1.bf16.msra.mxu0 %v3018
    %4251 = vmatprep.subr.bf16.mxu0 0
    %4252 = vmatpush1.bf16.msra.mxu0 %v3019
    %4253 = vmatprep.subr.bf16.mxu0 0
    %4254 = vmatpush1.bf16.msra.mxu0 %v3020
    %4255 = vmatprep.mubr.bf16.mxu0 %v1122
    %4256 = vmatmul.mubr.bf16.gmra.mrb[0].mxu0 %v1121
    %v4257 = vpop.f32.mrb[0].mxu0
    %v4258 = vadd.f32 %v4217, %v4257
    %v4259 = vpop.f32.mrb[0].mxu0
    %v4260 = vpop.f32.mrb[0].mxu0
    %v4261 = vadd.f32 %v4220, %v4260
    %v4262 = vpop.f32.mrb[0].mxu0
    %4263 = vdwg.mxu0
    %4264 = vmatprep.subr.bf16.mxu0 0
    %4265 = vmatpush1.bf16.msra.mxu0 %v3021
    %4266 = vmatprep.subr.bf16.mxu0 0
    %4267 = vmatpush1.bf16.msra.mxu0 %v3022
    %4268 = vmatprep.subr.bf16.mxu0 0
    %4269 = vmatpush1.bf16.msra.mxu0 %v3023
    %4270 = vmatprep.subr.bf16.mxu0 0
    %4271 = vmatpush1.bf16.msra.mxu0 %v3024
    %4272 = vmatprep.subr.bf16.mxu0 0
    %4273 = vmatpush1.bf16.msra.mxu0 %v3025
    %4274 = vmatprep.subr.bf16.mxu0 0
    %4275 = vmatpush1.bf16.msra.mxu0 %v3026
    %4276 = vmatprep.subr.bf16.mxu0 0
    %4277 = vmatpush1.bf16.msra.mxu0 %v3027
    %4278 = vmatprep.subr.bf16.mxu0 0
    %4279 = vmatpush1.bf16.msra.mxu0 %v3028
    %4280 = vmatprep.subr.bf16.mxu0 0
    %4281 = vmatpush1.bf16.msra.mxu0 %v3029
    %4282 = vmatprep.subr.bf16.mxu0 0
    %4283 = vmatpush1.bf16.msra.mxu0 %v3030
    %4284 = vmatprep.subr.bf16.mxu0 0
    %4285 = vmatpush1.bf16.msra.mxu0 %v3031
    %4286 = vmatprep.subr.bf16.mxu0 0
    %4287 = vmatpush1.bf16.msra.mxu0 %v3032
    %4288 = vmatprep.subr.bf16.mxu0 0
    %4289 = vmatpush1.bf16.msra.mxu0 %v3033
    %4290 = vmatprep.subr.bf16.mxu0 0
    %4291 = vmatpush1.bf16.msra.mxu0 %v3034
    %4292 = vmatprep.subr.bf16.mxu0 0
    %4293 = vmatpush1.bf16.msra.mxu0 %v3035
    %4294 = vmatprep.subr.bf16.mxu0 0
    %4295 = vmatpush1.bf16.msra.mxu0 %v3036
    %4296 = vmatprep.mubr.bf16.mxu0 %v1124
    %4297 = vmatmul.mubr.bf16.gmra.mrb[0].mxu0 %v1123
    %v4298 = vpop.f32.mrb[0].mxu0
    %v4299 = vadd.f32 %v4258, %v4298
    %v4300 = vpop.f32.mrb[0].mxu0
    %v4301 = vpop.f32.mrb[0].mxu0
    %v4302 = vadd.f32 %v4261, %v4301
    %v4303 = vpop.f32.mrb[0].mxu0
    %4304 = vdwg.mxu0
    %4305 = vmatprep.subr.bf16.mxu0 0
    %4306 = vmatpush1.bf16.msra.mxu0 %v3037
    %4307 = vmatprep.subr.bf16.mxu0 0
    %4308 = vmatpush1.bf16.msra.mxu0 %v3038
    %4309 = vmatprep.subr.bf16.mxu0 0
    %4310 = vmatpush1.bf16.msra.mxu0 %v3039
    %4311 = vmatprep.subr.bf16.mxu0 0
    %4312 = vmatpush1.bf16.msra.mxu0 %v3040
    %4313 = vmatprep.subr.bf16.mxu0 0
    %4314 = vmatpush1.bf16.msra.mxu0 %v3041
    %4315 = vmatprep.subr.bf16.mxu0 0
    %4316 = vmatpush1.bf16.msra.mxu0 %v3042
    %4317 = vmatprep.subr.bf16.mxu0 0
    %4318 = vmatpush1.bf16.msra.mxu0 %v3043
    %4319 = vmatprep.subr.bf16.mxu0 0
    %4320 = vmatpush1.bf16.msra.mxu0 %v3044
    %4321 = vmatprep.subr.bf16.mxu0 0
    %4322 = vmatpush1.bf16.msra.mxu0 %v3045
    %4323 = vmatprep.subr.bf16.mxu0 0
    %4324 = vmatpush1.bf16.msra.mxu0 %v3046
    %4325 = vmatprep.subr.bf16.mxu0 0
    %4326 = vmatpush1.bf16.msra.mxu0 %v3047
    %4327 = vmatprep.subr.bf16.mxu0 0
    %4328 = vmatpush1.bf16.msra.mxu0 %v3048
    %4329 = vmatprep.subr.bf16.mxu0 0
    %4330 = vmatpush1.bf16.msra.mxu0 %v3049
    %4331 = vmatprep.subr.bf16.mxu0 0
    %4332 = vmatpush1.bf16.msra.mxu0 %v3050
    %4333 = vmatprep.subr.bf16.mxu0 0
    %4334 = vmatpush1.bf16.msra.mxu0 %v3051
    %4335 = vmatprep.subr.bf16.mxu0 0
    %4336 = vmatpush1.bf16.msra.mxu0 %v3052
    %4337 = vmatprep.mubr.bf16.mxu0 %v1126
    %4338 = vmatmul.mubr.bf16.gmra.mrb[0].mxu0 %v1125
    %v4339 = vpop.f32.mrb[0].mxu0
    %v4340 = vadd.f32 %v4299, %v4339
    %v4341 = vpop.f32.mrb[0].mxu0
    %v4342 = vpop.f32.mrb[0].mxu0
    %v4343 = vadd.f32 %v4302, %v4342
    %v4344 = vpop.f32.mrb[0].mxu0
    %4345 = vdwg.mxu0
    %4346 = vmatprep.subr.bf16.mxu0 0
    %4347 = vmatpush1.bf16.msra.mxu0 %v3053
    %4348 = vmatprep.subr.bf16.mxu0 0
    %4349 = vmatpush1.bf16.msra.mxu0 %v3054
    %4350 = vmatprep.subr.bf16.mxu0 0
    %4351 = vmatpush1.bf16.msra.mxu0 %v3055
    %4352 = vmatprep.subr.bf16.mxu0 0
    %4353 = vmatpush1.bf16.msra.mxu0 %v3056
    %4354 = vmatprep.subr.bf16.mxu0 0
    %4355 = vmatpush1.bf16.msra.mxu0 %v3057
    %4356 = vmatprep.subr.bf16.mxu0 0
    %4357 = vmatpush1.bf16.msra.mxu0 %v3058
    %4358 = vmatprep.subr.bf16.mxu0 0
    %4359 = vmatpush1.bf16.msra.mxu0 %v3059
    %4360 = vmatprep.subr.bf16.mxu0 0
    %4361 = vmatpush1.bf16.msra.mxu0 %v3060
    %4362 = vmatprep.subr.bf16.mxu0 0
    %4363 = vmatpush1.bf16.msra.mxu0 %v3061
    %4364 = vmatprep.subr.bf16.mxu0 0
    %4365 = vmatpush1.bf16.msra.mxu0 %v3062
    %4366 = vmatprep.subr.bf16.mxu0 0
    %4367 = vmatpush1.bf16.msra.mxu0 %v3063
    %4368 = vmatprep.subr.bf16.mxu0 0
    %4369 = vmatpush1.bf16.msra.mxu0 %v3064
    %4370 = vmatprep.subr.bf16.mxu0 0
    %4371 = vmatpush1.bf16.msra.mxu0 %v3065
    %4372 = vmatprep.subr.bf16.mxu0 0
    %4373 = vmatpush1.bf16.msra.mxu0 %v3066
    %4374 = vmatprep.subr.bf16.mxu0 0
    %4375 = vmatpush1.bf16.msra.mxu0 %v3067
    %4376 = vmatprep.subr.bf16.mxu0 0
    %4377 = vmatpush1.bf16.msra.mxu0 %v3068
    %4378 = vmatprep.mubr.bf16.mxu0 %v1128
    %4379 = vmatmul.mubr.bf16.gmra.mrb[0].mxu0 %v1127
    %v4380 = vpop.f32.mrb[0].mxu0
    %v4381 = vadd.f32 %v4340, %v4380
    %v4382 = vpop.f32.mrb[0].mxu0
    %v4383 = vpop.f32.mrb[0].mxu0
    %v4384 = vadd.f32 %v4343, %v4383
    %v4385 = vpop.f32.mrb[0].mxu0
    %4386 = vdwg.mxu0
    %4387 = vmatprep.subr.bf16.mxu0 0
    %4388 = vmatpush1.bf16.msra.mxu0 %v3069
    %4389 = vmatprep.subr.bf16.mxu0 0
    %4390 = vmatpush1.bf16.msra.mxu0 %v3070
    %4391 = vmatprep.subr.bf16.mxu0 0
    %4392 = vmatpush1.bf16.msra.mxu0 %v3071
    %4393 = vmatprep.subr.bf16.mxu0 0
    %4394 = vmatpush1.bf16.msra.mxu0 %v3072
    %4395 = vmatprep.subr.bf16.mxu0 0
    %4396 = vmatpush1.bf16.msra.mxu0 %v3073
    %4397 = vmatprep.subr.bf16.mxu0 0
    %4398 = vmatpush1.bf16.msra.mxu0 %v3074
    %4399 = vmatprep.subr.bf16.mxu0 0
    %4400 = vmatpush1.bf16.msra.mxu0 %v3075
    %4401 = vmatprep.subr.bf16.mxu0 0
    %4402 = vmatpush1.bf16.msra.mxu0 %v3076
    %4403 = vmatprep.subr.bf16.mxu0 0
    %4404 = vmatpush1.bf16.msra.mxu0 %v3077
    %4405 = vmatprep.subr.bf16.mxu0 0
    %4406 = vmatpush1.bf16.msra.mxu0 %v3078
    %4407 = vmatprep.subr.bf16.mxu0 0
    %4408 = vmatpush1.bf16.msra.mxu0 %v3079
    %4409 = vmatprep.subr.bf16.mxu0 0
    %4410 = vmatpush1.bf16.msra.mxu0 %v3080
    %4411 = vmatprep.subr.bf16.mxu0 0
    %4412 = vmatpush1.bf16.msra.mxu0 %v3081
    %4413 = vmatprep.subr.bf16.mxu0 0
    %4414 = vmatpush1.bf16.msra.mxu0 %v3082
    %4415 = vmatprep.subr.bf16.mxu0 0
    %4416 = vmatpush1.bf16.msra.mxu0 %v3083
    %4417 = vmatprep.subr.bf16.mxu0 0
    %4418 = vmatpush1.bf16.msra.mxu0 %v3084
    %4419 = vmatprep.mubr.bf16.mxu0 %v1130
    %4420 = vmatmul.mubr.bf16.gmra.mrb[0].mxu0 %v1129
    %v4421 = vpop.f32.mrb[0].mxu0
    %v4422 = vadd.f32 %v4381, %v4421
    %v4423 = vpop.f32.mrb[0].mxu0
    %v4424 = vpop.f32.mrb[0].mxu0
    %v4425 = vadd.f32 %v4384, %v4424
    %v4426 = vpop.f32.mrb[0].mxu0
    %4427 = vdwg.mxu0
    %4428 = vmatprep.subr.bf16.mxu0 0
    %4429 = vmatpush1.bf16.msra.mxu0 %v3085
    %4430 = vmatprep.subr.bf16.mxu0 0
    %4431 = vmatpush1.bf16.msra.mxu0 %v3086
    %4432 = vmatprep.subr.bf16.mxu0 0
    %4433 = vmatpush1.bf16.msra.mxu0 %v3087
    %4434 = vmatprep.subr.bf16.mxu0 0
    %4435 = vmatpush1.bf16.msra.mxu0 %v3088
    %4436 = vmatprep.subr.bf16.mxu0 0
    %4437 = vmatpush1.bf16.msra.mxu0 %v3089
    %4438 = vmatprep.subr.bf16.mxu0 0
    %4439 = vmatpush1.bf16.msra.mxu0 %v3090
    %4440 = vmatprep.subr.bf16.mxu0 0
    %4441 = vmatpush1.bf16.msra.mxu0 %v3091
    %4442 = vmatprep.subr.bf16.mxu0 0
    %4443 = vmatpush1.bf16.msra.mxu0 %v3092
    %4444 = vmatprep.subr.bf16.mxu0 0
    %4445 = vmatpush1.bf16.msra.mxu0 %v3093
    %4446 = vmatprep.subr.bf16.mxu0 0
    %4447 = vmatpush1.bf16.msra.mxu0 %v3094
    %4448 = vmatprep.subr.bf16.mxu0 0
    %4449 = vmatpush1.bf16.msra.mxu0 %v3095
    %4450 = vmatprep.subr.bf16.mxu0 0
    %4451 = vmatpush1.bf16.msra.mxu0 %v3096
    %4452 = vmatprep.subr.bf16.mxu0 0
    %4453 = vmatpush1.bf16.msra.mxu0 %v3097
    %4454 = vmatprep.subr.bf16.mxu0 0
    %4455 = vmatpush1.bf16.msra.mxu0 %v3098
    %4456 = vmatprep.subr.bf16.mxu0 0
    %4457 = vmatpush1.bf16.msra.mxu0 %v3099
    %4458 = vmatprep.subr.bf16.mxu0 0
    %4459 = vmatpush1.bf16.msra.mxu0 %v3100
    %4460 = vmatprep.mubr.bf16.mxu0 %v1132
    %4461 = vmatmul.mubr.bf16.gmra.mrb[0].mxu0 %v1131
    %v4462 = vpop.f32.mrb[0].mxu0
    %v4463 = vadd.f32 %v4422, %v4462
    %v4464 = vpop.f32.mrb[0].mxu0
    %v4465 = vpop.f32.mrb[0].mxu0
    %v4466 = vadd.f32 %v4425, %v4465
    %v4467 = vpop.f32.mrb[0].mxu0
    %4468 = vdwg.mxu0
    %v4469 = vadd.f32 %v123, %v4463
    %v4470 = vadd.f32 %v124, %v4466
    %4471 = vst [vmem:[#allocation2] sm:$0xff] %v4469
    %4472 = vst [vmem:[#allocation2 + $0x8] sm:$0xff] %v4470
    // Predicated region
    $region62: #{tpu_custom_call.1} parent=1 // pred_check
      %p4473 = pneg %p117
    $region63: #{tpu_custom_call.1} parent=1 // pred_check_branch
      %4475 = sbr.rel (%p4473) target = $region65
    $region64: #{tpu_custom_call.1} parent=1 // pred_region
      %v4476 = vld [vmem:[#allocation2] sm:$0xff]
      %v4477 = vld [vmem:[#allocation2 + $0x8] sm:$0xff]
      %v4478 = vld [vmem:[#allocation8] sm:$0x1]
      %v4480 = vlaneseq
      %v4481 = vshrl.u32 %v4480, 7
      %v4482 = vsub.s32 0, %v4481
      %v4483 = vrot.slane %v4478, %v4482
      %v4485 = vadd.f32 %v4476, %v4483
      %v4486 = vadd.f32 %v4477, %v4483
      %v4487 = vlaneseq
      %v4488 = vshrl.u32 %v4487, 7
      %v4489 = vadd.s32 %v4488, 8
      %vm4490 = vcmp.lt.s32.totalorder %v4488, 2
      %vm4491 = vcmp.lt.s32.totalorder %v4489, 2
      %v4492 = vsel %vm4490, %v4485, 0.0
      %v4493 = vsel %vm4491, %v4486, 0.0
      %v4494 = vpack.c.bf16 %v4493, %v4492
      %v4496 = vshrl.u32 %v4494, 16
      %v4498 = vrot.slane %v4496, 7
      %v4499 = vshll.u32 %v4494, 16
      %v4501 = vor.u32 %v4498, %v4499
      %vm4503 = vcmask 1040384
      %vm4504 = vsmask.f32 256
      %vm4505 = vmand %vm4503, %vm4504
      %v4506 = vsel %vm4505, 0, %v4501
      %v4507 = vrot.slane %v4499, 1
      %v4508 = vor.u32 %v4496, %v4507
      %vm4510 = vcmask 1047552
      %vm4511 = vsmask.f32 7424
      %vm4512 = vmand %vm4510, %vm4511
      %v4513 = vsel %vm4512, %v4508, 0
      %v4514 = vld [vmem:[#allocation9] sm:$0xf]
      %v4515 = vld [vmem:[#allocation9 + $0x4] sm:$0xf]
      %v4516 = vld [vmem:[#allocation9 + $0x8] sm:$0xf]
      %v4517 = vld [vmem:[#allocation9 + $0xc] sm:$0xf]
      %v4518 = vld [vmem:[#allocation9 + $0x10] sm:$0xf]
      %v4519 = vld [vmem:[#allocation9 + $0x14] sm:$0xf]
      %v4520 = vld [vmem:[#allocation9 + $0x18] sm:$0xf]
      %v4521 = vld [vmem:[#allocation9 + $0x1c] sm:$0xf]
      %v4522 = vld [vmem:[#allocation9 + $0x20] sm:$0xf]
      %v4523 = vld [vmem:[#allocation9 + $0x24] sm:$0xf]
      %v4524 = vld [vmem:[#allocation9 + $0x28] sm:$0xf]
      %v4525 = vld [vmem:[#allocation9 + $0x2c] sm:$0xf]
      %v4526 = vld [vmem:[#allocation9 + $0x30] sm:$0xf]
      %v4527 = vld [vmem:[#allocation9 + $0x34] sm:$0xf]
      %v4528 = vld [vmem:[#allocation9 + $0x38] sm:$0xf]
      %v4529 = vld [vmem:[#allocation9 + $0x3c] sm:$0xf]
      %s4530 = scalar_lea.vmem [#allocation9], 64
      %v4531 = vld [vmem:[%s4530] sm:$0xf]
      %v4532 = vld [vmem:[%s4530 + $0x4] sm:$0xf]
      %v4533 = vld [vmem:[%s4530 + $0x8] sm:$0xf]
      %v4534 = vld [vmem:[%s4530 + $0xc] sm:$0xf]
      %v4535 = vld [vmem:[%s4530 + $0x10] sm:$0xf]
      %v4536 = vld [vmem:[%s4530 + $0x14] sm:$0xf]
      %v4537 = vld [vmem:[%s4530 + $0x18] sm:$0xf]
      %v4538 = vld [vmem:[%s4530 + $0x1c] sm:$0xf]
      %v4539 = vld [vmem:[%s4530 + $0x20] sm:$0xf]
      %v4540 = vld [vmem:[%s4530 + $0x24] sm:$0xf]
      %v4541 = vld [vmem:[%s4530 + $0x28] sm:$0xf]
      %v4542 = vld [vmem:[%s4530 + $0x2c] sm:$0xf]
      %v4543 = vld [vmem:[%s4530 + $0x30] sm:$0xf]
      %v4544 = vld [vmem:[%s4530 + $0x34] sm:$0xf]
      %v4545 = vld [vmem:[%s4530 + $0x38] sm:$0xf]
      %v4546 = vld [vmem:[%s4530 + $0x3c] sm:$0xf]
      %v4563 = vunpack.c.l.b16 %v4531
      %v4564 = vunpack.c.l.b16 %v4532
      %v4565 = vunpack.c.l.b16 %v4533
      %v4566 = vunpack.c.l.b16 %v4534
      %v4567 = vunpack.c.l.b16 %v4535
      %v4568 = vunpack.c.l.b16 %v4536
      %v4569 = vunpack.c.l.b16 %v4537
      %v4570 = vunpack.c.l.b16 %v4538
      %v4571 = vunpack.c.l.b16 %v4539
      %v4572 = vunpack.c.l.b16 %v4540
      %v4573 = vunpack.c.l.b16 %v4541
      %v4574 = vunpack.c.l.b16 %v4542
      %v4575 = vunpack.c.l.b16 %v4543
      %v4576 = vunpack.c.l.b16 %v4544
      %v4577 = vunpack.c.l.b16 %v4545
      %v4578 = vunpack.c.l.b16 %v4546
      %v4579 = vpack.c.b16 %v4564, %v4563
      %v4580 = vpack.c.b16 %v4566, %v4565
      %v4581 = vpack.c.b16 %v4568, %v4567
      %v4582 = vpack.c.b16 %v4570, %v4569
      %v4583 = vpack.c.b16 %v4572, %v4571
      %v4584 = vpack.c.b16 %v4574, %v4573
      %v4585 = vpack.c.b16 %v4576, %v4575
      %v4586 = vpack.c.b16 %v4578, %v4577
      %4595 = vmatprep.subr.bf16.mxu0 0
      %4596 = vmatpush1.bf16.msra.mxu0 %v4579
      %4597 = vmatprep.subr.bf16.mxu0 0
      %4598 = vmatpush1.bf16.msra.mxu0 %v4580
      %4599 = vmatprep.subr.bf16.mxu0 0
      %4600 = vmatpush1.bf16.msra.mxu0 %v4581
      %4601 = vmatprep.subr.bf16.mxu0 0
      %4602 = vmatpush1.bf16.msra.mxu0 %v4582
      %4603 = vmatprep.subr.bf16.mxu0 0
      %4604 = vmatpush1.bf16.msra.mxu0 %v4583
      %4605 = vmatprep.subr.bf16.mxu0 0
      %4606 = vmatpush1.bf16.msra.mxu0 %v4584
      %4607 = vmatprep.subr.bf16.mxu0 0
      %4608 = vmatpush1.bf16.msra.mxu0 %v4585
      %4609 = vmatprep.subr.bf16.mxu0 0
      %4610 = vmatpush1.bf16.msra.mxu0 %v4586
      %4611 = vmatprep.subr.bf16.mxu0 0
      %4612 = vmatpush1.bf16.msra.mxu0 0
      %4613 = vmatprep.subr.bf16.mxu0 0
      %4614 = vmatpush1.bf16.msra.mxu0 0
      %4615 = vmatprep.subr.bf16.mxu0 0
      %4616 = vmatpush1.bf16.msra.mxu0 0
      %4617 = vmatprep.subr.bf16.mxu0 0
      %4618 = vmatpush1.bf16.msra.mxu0 0
      %4619 = vmatprep.subr.bf16.mxu0 0
      %4620 = vmatpush1.bf16.msra.mxu0 0
      %4621 = vmatprep.subr.bf16.mxu0 0
      %4622 = vmatpush1.bf16.msra.mxu0 0
      %4623 = vmatprep.subr.bf16.mxu0 0
      %4624 = vmatpush1.bf16.msra.mxu0 0
      %4625 = vmatprep.subr.bf16.mxu0 0
      %4626 = vmatpush1.bf16.msra.mxu0 0
      %4627 = vmatprep.mubr.bf16.mxu0 0
      %4628 = vmatmul.mubr.bf16.gmra.mrb[0].mxu0 %v4494
      %v4629 = vpop.f32.mrb[0].mxu0
      %v4630 = vadd.f32 0.0, %v4629
      %v4631 = vpop.f32.mrb[0].mxu0
      %v4632 = vpop.f32.mrb[0].mxu0
      %v4633 = vadd.f32 0.0, %v4632
      %v4634 = vpop.f32.mrb[0].mxu0
      %4635 = vdwg.mxu0
      %v4652 = vunpack.c.l.b16 %v4514
      %v4653 = vunpack.c.l.b16 %v4515
      %v4654 = vunpack.c.l.b16 %v4516
      %v4655 = vunpack.c.l.b16 %v4517
      %v4656 = vunpack.c.l.b16 %v4518
      %v4657 = vunpack.c.l.b16 %v4519
      %v4658 = vunpack.c.l.b16 %v4520
      %v4659 = vunpack.c.l.b16 %v4521
      %v4660 = vunpack.c.l.b16 %v4522
      %v4661 = vunpack.c.l.b16 %v4523
      %v4662 = vunpack.c.l.b16 %v4524
      %v4663 = vunpack.c.l.b16 %v4525
      %v4664 = vunpack.c.l.b16 %v4526
      %v4665 = vunpack.c.l.b16 %v4527
      %v4666 = vunpack.c.l.b16 %v4528
      %v4667 = vunpack.c.l.b16 %v4529
      %v4668 = vpack.c.b16 %v4653, %v4652
      %v4669 = vpack.c.b16 %v4655, %v4654
      %v4670 = vpack.c.b16 %v4657, %v4656
      %v4671 = vpack.c.b16 %v4659, %v4658
      %v4672 = vpack.c.b16 %v4661, %v4660
      %v4673 = vpack.c.b16 %v4663, %v4662
      %v4674 = vpack.c.b16 %v4665, %v4664
      %v4675 = vpack.c.b16 %v4667, %v4666
      %4684 = vmatprep.subr.bf16.mxu0 0
      %4685 = vmatpush1.bf16.msra.mxu0 %v4668
      %4686 = vmatprep.subr.bf16.mxu0 0
      %4687 = vmatpush1.bf16.msra.mxu0 %v4669
      %4688 = vmatprep.subr.bf16.mxu0 0
      %4689 = vmatpush1.bf16.msra.mxu0 %v4670
      %4690 = vmatprep.subr.bf16.mxu0 0
      %4691 = vmatpush1.bf16.msra.mxu0 %v4671
      %4692 = vmatprep.subr.bf16.mxu0 0
      %4693 = vmatpush1.bf16.msra.mxu0 %v4672
      %4694 = vmatprep.subr.bf16.mxu0 0
      %4695 = vmatpush1.bf16.msra.mxu0 %v4673
      %4696 = vmatprep.subr.bf16.mxu0 0
      %4697 = vmatpush1.bf16.msra.mxu0 %v4674
      %4698 = vmatprep.subr.bf16.mxu0 0
      %4699 = vmatpush1.bf16.msra.mxu0 %v4675
      %4700 = vmatprep.subr.bf16.mxu0 0
      %4701 = vmatpush1.bf16.msra.mxu0 0
      %4702 = vmatprep.subr.bf16.mxu0 0
      %4703 = vmatpush1.bf16.msra.mxu0 0
      %4704 = vmatprep.subr.bf16.mxu0 0
      %4705 = vmatpush1.bf16.msra.mxu0 0
      %4706 = vmatprep.subr.bf16.mxu0 0
      %4707 = vmatpush1.bf16.msra.mxu0 0
      %4708 = vmatprep.subr.bf16.mxu0 0
      %4709 = vmatpush1.bf16.msra.mxu0 0
      %4710 = vmatprep.subr.bf16.mxu0 0
      %4711 = vmatpush1.bf16.msra.mxu0 0
      %4712 = vmatprep.subr.bf16.mxu0 0
      %4713 = vmatpush1.bf16.msra.mxu0 0
      %4714 = vmatprep.subr.bf16.mxu0 0
      %4715 = vmatpush1.bf16.msra.mxu0 0
      %4716 = vmatprep.mubr.bf16.mxu0 0
      %4717 = vmatmul.mubr.bf16.gmra.mrb[0].mxu0 %v4506
      %v4718 = vpop.f32.mrb[0].mxu0
      %v4719 = vadd.f32 %v4630, %v4718
      %v4720 = vpop.f32.mrb[0].mxu0
      %v4721 = vpop.f32.mrb[0].mxu0
      %v4722 = vadd.f32 %v4633, %v4721
      %v4723 = vpop.f32.mrb[0].mxu0
      %4724 = vdwg.mxu0
      %s4725 = scalar_lea.vmem [#allocation9], 128
      %v4726 = vld [vmem:[%s4725] sm:$0xf]
      %v4727 = vld [vmem:[%s4725 + $0x4] sm:$0xf]
      %v4728 = vld [vmem:[%s4725 + $0x8] sm:$0xf]
      %v4729 = vld [vmem:[%s4725 + $0xc] sm:$0xf]
      %v4730 = vld [vmem:[%s4725 + $0x10] sm:$0xf]
      %v4731 = vld [vmem:[%s4725 + $0x14] sm:$0xf]
      %v4732 = vld [vmem:[%s4725 + $0x18] sm:$0xf]
      %v4733 = vld [vmem:[%s4725 + $0x1c] sm:$0xf]
      %v4734 = vld [vmem:[%s4725 + $0x20] sm:$0xf]
      %v4735 = vld [vmem:[%s4725 + $0x24] sm:$0xf]
      %v4736 = vld [vmem:[%s4725 + $0x28] sm:$0xf]
      %v4737 = vld [vmem:[%s4725 + $0x2c] sm:$0xf]
      %v4738 = vld [vmem:[%s4725 + $0x30] sm:$0xf]
      %v4739 = vld [vmem:[%s4725 + $0x34] sm:$0xf]
      %v4740 = vld [vmem:[%s4725 + $0x38] sm:$0xf]
      %v4741 = vld [vmem:[%s4725 + $0x3c] sm:$0xf]
      %v4758 = vunpack.c.l.b16 %v4726
      %v4759 = vunpack.c.l.b16 %v4727
      %v4760 = vunpack.c.l.b16 %v4728
      %v4761 = vunpack.c.l.b16 %v4729
      %v4762 = vunpack.c.l.b16 %v4730
      %v4763 = vunpack.c.l.b16 %v4731
      %v4764 = vunpack.c.l.b16 %v4732
      %v4765 = vunpack.c.l.b16 %v4733
      %v4766 = vunpack.c.l.b16 %v4734
      %v4767 = vunpack.c.l.b16 %v4735
      %v4768 = vunpack.c.l.b16 %v4736
      %v4769 = vunpack.c.l.b16 %v4737
      %v4770 = vunpack.c.l.b16 %v4738
      %v4771 = vunpack.c.l.b16 %v4739
      %v4772 = vunpack.c.l.b16 %v4740
      %v4773 = vunpack.c.l.b16 %v4741
      %v4774 = vpack.c.b16 %v4759, %v4758
      %v4775 = vpack.c.b16 %v4761, %v4760
      %v4776 = vpack.c.b16 %v4763, %v4762
      %v4777 = vpack.c.b16 %v4765, %v4764
      %v4778 = vpack.c.b16 %v4767, %v4766
      %v4779 = vpack.c.b16 %v4769, %v4768
      %v4780 = vpack.c.b16 %v4771, %v4770
      %v4781 = vpack.c.b16 %v4773, %v4772
      %4790 = vmatprep.subr.bf16.mxu0 0
      %4791 = vmatpush1.bf16.msra.mxu0 %v4774
      %4792 = vmatprep.subr.bf16.mxu0 0
      %4793 = vmatpush1.bf16.msra.mxu0 %v4775
      %4794 = vmatprep.subr.bf16.mxu0 0
      %4795 = vmatpush1.bf16.msra.mxu0 %v4776
      %4796 = vmatprep.subr.bf16.mxu0 0
      %4797 = vmatpush1.bf16.msra.mxu0 %v4777
      %4798 = vmatprep.subr.bf16.mxu0 0
      %4799 = vmatpush1.bf16.msra.mxu0 %v4778
      %4800 = vmatprep.subr.bf16.mxu0 0
      %4801 = vmatpush1.bf16.msra.mxu0 %v4779
      %4802 = vmatprep.subr.bf16.mxu0 0
      %4803 = vmatpush1.bf16.msra.mxu0 %v4780
      %4804 = vmatprep.subr.bf16.mxu0 0
      %4805 = vmatpush1.bf16.msra.mxu0 %v4781
      %4806 = vmatprep.subr.bf16.mxu0 0
      %4807 = vmatpush1.bf16.msra.mxu0 0
      %4808 = vmatprep.subr.bf16.mxu0 0
      %4809 = vmatpush1.bf16.msra.mxu0 0
      %4810 = vmatprep.subr.bf16.mxu0 0
      %4811 = vmatpush1.bf16.msra.mxu0 0
      %4812 = vmatprep.subr.bf16.mxu0 0
      %4813 = vmatpush1.bf16.msra.mxu0 0
      %4814 = vmatprep.subr.bf16.mxu0 0
      %4815 = vmatpush1.bf16.msra.mxu0 0
      %4816 = vmatprep.subr.bf16.mxu0 0
      %4817 = vmatpush1.bf16.msra.mxu0 0
      %4818 = vmatprep.subr.bf16.mxu0 0
      %4819 = vmatpush1.bf16.msra.mxu0 0
      %4820 = vmatprep.subr.bf16.mxu0 0
      %4821 = vmatpush1.bf16.msra.mxu0 0
      %4822 = vmatprep.mubr.bf16.mxu0 0
      %4823 = vmatmul.mubr.bf16.gmra.mrb[0].mxu0 %v4513
      %v4824 = vpop.f32.mrb[0].mxu0
      %v4825 = vadd.f32 0.0, %v4824
      %v4826 = vpop.f32.mrb[0].mxu0
      %v4827 = vpop.f32.mrb[0].mxu0
      %v4828 = vadd.f32 0.0, %v4827
      %v4829 = vpop.f32.mrb[0].mxu0
      %4830 = vdwg.mxu0
      %v4831 = vadd.f32 %v4719, %v4825
      %v4832 = vadd.f32 %v4722, %v4828
      %v4833 = vld [vmem:[#allocation11] sm:$0x1]
      %v4835 = vlaneseq
      %v4836 = vshrl.u32 %v4835, 7
      %v4837 = vsub.s32 0, %v4836
      %v4838 = vrot.slane %v4833, %v4837
      %v4840 = vadd.f32 %v4831, %v4838
      %v4841 = vadd.f32 %v4832, %v4838
      %v4842 = vmax.f32 %v4840, 0.0
      %v4843 = vmax.f32 %v4841, 0.0
      %v4844 = vpack.c.bf16 %v4843, %v4842
      %v4845 = vld [vmem:[#allocation12] sm:$0xf]
      %v4846 = vld [vmem:[#allocation12 + $0x4] sm:$0xf]
      %v4847 = vld [vmem:[#allocation12 + $0x8] sm:$0xf]
      %v4848 = vld [vmem:[#allocation12 + $0xc] sm:$0xf]
      %v4849 = vld [vmem:[#allocation12 + $0x10] sm:$0xf]
      %v4850 = vld [vmem:[#allocation12 + $0x14] sm:$0xf]
      %v4851 = vld [vmem:[#allocation12 + $0x18] sm:$0xf]
      %v4852 = vld [vmem:[#allocation12 + $0x1c] sm:$0xf]
      %v4853 = vld [vmem:[#allocation12 + $0x20] sm:$0xf]
      %v4854 = vld [vmem:[#allocation12 + $0x24] sm:$0xf]
      %v4855 = vld [vmem:[#allocation12 + $0x28] sm:$0xf]
      %v4856 = vld [vmem:[#allocation12 + $0x2c] sm:$0xf]
      %v4857 = vld [vmem:[#allocation12 + $0x30] sm:$0xf]
      %v4858 = vld [vmem:[#allocation12 + $0x34] sm:$0xf]
      %v4859 = vld [vmem:[#allocation12 + $0x38] sm:$0xf]
      %v4860 = vld [vmem:[#allocation12 + $0x3c] sm:$0xf]
      %v4861 = vld [vmem:[#allocation14] sm:$0x1]
      %v4863 = vlaneseq
      %v4864 = vshrl.u32 %v4863, 7
      %v4865 = vsub.s32 0, %v4864
      %v4866 = vrot.slane %v4861, %v4865
      %v4884 = vunpack.c.l.b16 %v4845
      %v4885 = vunpack.c.l.b16 %v4846
      %v4886 = vunpack.c.l.b16 %v4847
      %v4887 = vunpack.c.l.b16 %v4848
      %v4888 = vunpack.c.l.b16 %v4849
      %v4889 = vunpack.c.l.b16 %v4850
      %v4890 = vunpack.c.l.b16 %v4851
      %v4891 = vunpack.c.l.b16 %v4852
      %v4892 = vunpack.c.l.b16 %v4853
      %v4893 = vunpack.c.l.b16 %v4854
      %v4894 = vunpack.c.l.b16 %v4855
      %v4895 = vunpack.c.l.b16 %v4856
      %v4896 = vunpack.c.l.b16 %v4857
      %v4897 = vunpack.c.l.b16 %v4858
      %v4898 = vunpack.c.l.b16 %v4859
      %v4899 = vunpack.c.l.b16 %v4860
      %v4900 = vpack.c.b16 %v4885, %v4884
      %v4901 = vpack.c.b16 %v4887, %v4886
      %v4902 = vpack.c.b16 %v4889, %v4888
      %v4903 = vpack.c.b16 %v4891, %v4890
      %v4904 = vpack.c.b16 %v4893, %v4892
      %v4905 = vpack.c.b16 %v4895, %v4894
      %v4906 = vpack.c.b16 %v4897, %v4896
      %v4907 = vpack.c.b16 %v4899, %v4898
      %4916 = vmatprep.subr.bf16.mxu0 0
      %4917 = vmatpush1.bf16.msra.mxu0 %v4900
      %4918 = vmatprep.subr.bf16.mxu0 0
      %4919 = vmatpush1.bf16.msra.mxu0 %v4901
      %4920 = vmatprep.subr.bf16.mxu0 0
      %4921 = vmatpush1.bf16.msra.mxu0 %v4902
      %4922 = vmatprep.subr.bf16.mxu0 0
      %4923 = vmatpush1.bf16.msra.mxu0 %v4903
      %4924 = vmatprep.subr.bf16.mxu0 0
      %4925 = vmatpush1.bf16.msra.mxu0 %v4904
      %4926 = vmatprep.subr.bf16.mxu0 0
      %4927 = vmatpush1.bf16.msra.mxu0 %v4905
      %4928 = vmatprep.subr.bf16.mxu0 0
      %4929 = vmatpush1.bf16.msra.mxu0 %v4906
      %4930 = vmatprep.subr.bf16.mxu0 0
      %4931 = vmatpush1.bf16.msra.mxu0 %v4907
      %4932 = vmatprep.subr.bf16.mxu0 0
      %4933 = vmatpush1.bf16.msra.mxu0 0
      %4934 = vmatprep.subr.bf16.mxu0 0
      %4935 = vmatpush1.bf16.msra.mxu0 0
      %4936 = vmatprep.subr.bf16.mxu0 0
      %4937 = vmatpush1.bf16.msra.mxu0 0
      %4938 = vmatprep.subr.bf16.mxu0 0
      %4939 = vmatpush1.bf16.msra.mxu0 0
      %4940 = vmatprep.subr.bf16.mxu0 0
      %4941 = vmatpush1.bf16.msra.mxu0 0
      %4942 = vmatprep.subr.bf16.mxu0 0
      %4943 = vmatpush1.bf16.msra.mxu0 0
      %4944 = vmatprep.subr.bf16.mxu0 0
      %4945 = vmatpush1.bf16.msra.mxu0 0
      %4946 = vmatprep.subr.bf16.mxu0 0
      %4947 = vmatpush1.bf16.msra.mxu0 0
      %4948 = vmatprep.mubr.bf16.mxu0 0
      %4949 = vmatmul.mubr.bf16.gmra.mrb[0].mxu0 %v4844
      %v4950 = vpop.f32.mrb[0].mxu0
      %v4951 = vadd.f32 %v4866, %v4950
      %v4952 = vpop.f32.mrb[0].mxu0
      %v4953 = vpop.f32.mrb[0].mxu0
      %v4954 = vadd.f32 %v4866, %v4953
      %v4955 = vpop.f32.mrb[0].mxu0
      %4956 = vdwg.mxu0
      %4957 = vst [vmem:[#allocation15] sm:$0xff] %v4951
      %4958 = vst [vmem:[#allocation15 + $0x8] sm:$0xff] %v4954
    $region65: #{tpu_custom_call.1} parent=1 // pred_fallthru
      _
    // Predicated region
    $region66: #{tpu_custom_call.1} parent=1 // pred_check
      _
    $region67: #{tpu_custom_call.1} parent=1 // pred_check_branch
      %4960 = sbr.rel (0) target = $region69
    $region68: #{tpu_custom_call.1} parent=1 // pred_region
      %s4962 = ssub.s32 256, 256
      %4963 = vsyncadd [#allocation5], %s4962
      %s4964 = sshll.u32 [#allocation15], 4
      %s4965 = int_to_ptr.vmem [resolvable:$true] %s4964
      %4970 = dma.vmem_to_hbm [thread:$0]  %s4965, 256, %s7, [#allocation5], 128, 128, 8
    $region69: #{tpu_custom_call.1} parent=1 // pred_fallthru
      _
    // Predicated region
    $region70: #{tpu_custom_call.1} parent=1 // pred_check
      _
    $region71: #{tpu_custom_call.1} parent=1 // pred_check_branch
      %4972 = sbr.rel (0) target = $region73
    $region72: #{tpu_custom_call.1} parent=1 // pred_region
      %4973 = dma.done [#allocation5], 256
    $region73: #{tpu_custom_call.1} parent=1 // pred_fallthru
      _
    %4974 = vsyncpa [#allocation4], 1
    %4975 = vsyncpa [#allocation7], 1
    %4976 = vsyncpa [#allocation10], 1
    %4977 = vsyncpa [#allocation13], 1
    %4978 = vsyncpa [#allocation5], 1

</llo_original>
